<compile_context>
chip_gen: v6e
topology: v6e:2x2x1
jax: 0.10.0
libtpu: 0.0.40
codegen_flags: <defaults>
</compile_context>

<pallas_src>
import functools

import jax
import jax.numpy as jnp
from jax import lax
from jax.experimental import pallas as pl
from jax.experimental.pallas import tpu as pltpu


def _round_up(x: int, m: int) -> int:
    return (x + m - 1) // m * m


# ---------------------------------------------------------------------------
# Kernel
# ---------------------------------------------------------------------------
def _make_kernel(nlayers: int, nhid_pad: int, seq_len: int, batch_pad: int):
    def kernel(emb_ref, *args):
        # args layout:
        #   [w_ih_0, w_hh_0, b_0, ..., w_ih_{L-1}, w_hh_{L-1}, b_{L-1},
        #    dec_w, dec_b, out_ref, ig_scratch, xbuf_scratch]
        w_refs = args[: 3 * nlayers]
        dec_w_ref, dec_b_ref, out_ref, ig_ref, xbuf_ref = args[3 * nlayers:]

        unroll = seq_len <= 32
        h_last = None

        for l in range(nlayers):
            w_ih_ref = w_refs[3 * l]
            w_hh_ref = w_refs[3 * l + 1]
            b_ref = w_refs[3 * l + 2]

            # Layer input: embeddings for layer 0, previous layer's hidden
            # sequence (bf16, written below) otherwise.  Both are flat
            # (S*B_pad, K) slabs -> one big input-projection matmul with the
            # bias folded in.  This removes x@W_ih from the serial recurrence.
            x_flat = emb_ref[...] if l == 0 else xbuf_ref[...]
            ig_ref[...] = (
                jnp.dot(x_flat, w_ih_ref[...], preferred_element_type=jnp.float32)
                + b_ref[...]
            )  # (S*B_pad, 4*nhid_pad), PyTorch gate order i, f, g, o

            last_layer = l == nlayers - 1

            def step(t, carry, _last=last_layer, _w_hh_ref=w_hh_ref):
                h, c = carry
                row = pl.multiple_of(t * batch_pad, batch_pad)
                # Only the recurrent matmul is on the serial path.
                gates = ig_ref[pl.ds(row, batch_pad), :] + jnp.dot(
                    h.astype(jnp.bfloat16), _w_hh_ref[...],
                    preferred_element_type=jnp.float32)
                # Gate slices are 128-lane aligned (nhid_pad multiple of 128).
                i_g = jax.nn.sigmoid(gates[:, 0 * nhid_pad:1 * nhid_pad])
                f_g = jax.nn.sigmoid(gates[:, 1 * nhid_pad:2 * nhid_pad])
                g_g = jnp.tanh(gates[:, 2 * nhid_pad:3 * nhid_pad])
                o_g = jax.nn.sigmoid(gates[:, 3 * nhid_pad:4 * nhid_pad])
                c_new = f_g * c + i_g * g_g
                h_new = o_g * jnp.tanh(c_new)
                if not _last:
                    # Feed the next layer: store this layer's hidden sequence.
                    xbuf_ref[pl.ds(row, batch_pad), :] = h_new.astype(jnp.bfloat16)
                return (h_new, c_new)

            zeros = jnp.zeros((batch_pad, nhid_pad), jnp.float32)
            h_last, _ = lax.fori_loop(0, seq_len, step, (zeros, zeros),
                                      unroll=unroll)

        # Decoder on the top layer's last hidden state, lane-dense (B_pad, 128).
        logits = (
            jnp.dot(h_last.astype(jnp.bfloat16), dec_w_ref[...],
                    preferred_element_type=jnp.float32)
            + dec_b_ref[...]
        )
        out_ref[...] = jax.nn.sigmoid(logits)

    return kernel


# ---------------------------------------------------------------------------
# Wrapper-side padding / weight prep (would be hoisted to init in production)
# ---------------------------------------------------------------------------
def _pad_gate_cols(w, nhid, nhid_pad):
    """(K, 4*nhid) -> (K, 4*nhid_pad); gate k at columns [k*nhid_pad, k*nhid_pad+nhid)."""
    k_dim = w.shape[0]
    out = jnp.zeros((k_dim, 4 * nhid_pad), w.dtype)
    for k in range(4):
        out = out.at[:, k * nhid_pad:k * nhid_pad + nhid].set(
            w[:, k * nhid:(k + 1) * nhid])
    return out


def _prepare_inputs(tokens, params, nlayers, nhid):
    seq_len, batch = tokens.shape
    enc_w = params["encoder"]
    ninp = enc_w.shape[1]

    nhid_pad = _round_up(nhid, 128)
    ninp_pad = _round_up(ninp, 128)
    batch_pad = _round_up(max(batch, 8), 8)

    # Embedding lookup (plain-JAX glue) + pad batch/feature for (8,128) alignment,
    # flatten to a 2D (S*B_pad, ninp_pad) bf16 slab.
    emb = enc_w[tokens]  # (S, B, ninp) f32
    emb_pad = jnp.zeros((seq_len, batch_pad, ninp_pad), jnp.float32)
    emb_pad = emb_pad.at[:, :batch, :ninp].set(emb)
    emb_flat = emb_pad.reshape(seq_len * batch_pad, ninp_pad).astype(jnp.bfloat16)

    layer_args = []
    for l in range(nlayers):
        in_dim = ninp if l == 0 else nhid
        in_pad = ninp_pad if l == 0 else nhid_pad
        w_ih_t = params[f"w_ih_{l}"]  # (in_dim, 4*nhid)
        w_hh_t = params[f"w_hh_{l}"]  # (nhid,   4*nhid)
        b = params[f"b_{l}"]          # (1,      4*nhid)  (b_ih + b_hh)

        w_ih_p = (jnp.zeros((in_pad, 4 * nhid_pad), jnp.float32)
                  .at[:in_dim].set(_pad_gate_cols(w_ih_t, nhid, nhid_pad))
                  .astype(jnp.bfloat16))
        w_hh_p = (jnp.zeros((nhid_pad, 4 * nhid_pad), jnp.float32)
                  .at[:nhid].set(_pad_gate_cols(w_hh_t, nhid, nhid_pad))
                  .astype(jnp.bfloat16))
        b_p = _pad_gate_cols(b, nhid, nhid_pad)  # (1, 4*nhid_pad) f32
        layer_args.append((w_ih_p, w_hh_p, b_p))

    dec_w_pad = (jnp.zeros((nhid_pad, 128), jnp.float32)
                 .at[:nhid, :2].set(params["dec_w"]).astype(jnp.bfloat16))
    dec_b_pad = jnp.zeros((1, 128), jnp.float32).at[:, :2].set(params["dec_b"])

    dims = (seq_len, batch, batch_pad, ninp_pad, nhid_pad)
    return emb_flat, layer_args, dec_w_pad, dec_b_pad, dims


def mynet_forward(tokens, params, *, nlayers, nhid):
    """tokens: (seq_len, batch) int32.  Returns (batch, 2) float32."""
    emb_flat, layer_args, dec_w_pad, dec_b_pad, dims = _prepare_inputs(
        tokens, params, nlayers, nhid)
    seq_len, batch, batch_pad, _, nhid_pad = dims

    flat_weights = [a for triple in layer_args for a in triple]
    n_inputs = 1 + len(flat_weights) + 2

    kernel = _make_kernel(nlayers, nhid_pad, seq_len, batch_pad)

    out_pad = pl.pallas_call(
        kernel,
        out_shape=jax.ShapeDtypeStruct((batch_pad, 128), jnp.float32),
        # No grid: every input lives fully (and singly-buffered) in VMEM.
        in_specs=[pl.BlockSpec(memory_space=pltpu.MemorySpace.VMEM)] * n_inputs,
        out_specs=pl.BlockSpec(memory_space=pltpu.MemorySpace.VMEM),
        scratch_shapes=[
            # Precomputed input projections for all timesteps of one layer.
            pltpu.VMEM((seq_len * batch_pad, 4 * nhid_pad), jnp.float32),
            # Current layer's hidden sequence (feeds the next layer), bf16.
            pltpu.VMEM((seq_len * batch_pad, nhid_pad), jnp.bfloat16),
        ],
    )(emb_flat, *flat_weights, dec_w_pad, dec_b_pad)

    return out_pad[:batch, :2]


# ---------------------------------------------------------------------------
# Parameter init (PyTorch-equivalent) and references
# ---------------------------------------------------------------------------
def init_params(key, ntoken, ninp, nhid, nlayers):
    initrange = 0.1
    stdv = 1.0 / jnp.sqrt(nhid)
    params = {}
    keys = jax.random.split(key, 2 + 4 * nlayers + 1)
    k_idx = 0

    params["encoder"] = jax.random.uniform(
        keys[k_idx], (ntoken, ninp), jnp.float32, -initrange, initrange)
    k_idx += 1

    for l in range(nlayers):
        in_dim = ninp if l == 0 else nhid
        w_ih = jax.random.uniform(keys[k_idx], (4 * nhid, in_dim), jnp.float32, -stdv, stdv); k_idx += 1
        w_hh = jax.random.uniform(keys[k_idx], (4 * nhid, nhid), jnp.float32, -stdv, stdv); k_idx += 1
        b_ih = jax.random.uniform(keys[k_idx], (4 * nhid,), jnp.float32, -stdv, stdv); k_idx += 1
        b_hh = jax.random.uniform(keys[k_idx], (4 * nhid,), jnp.float32, -stdv, stdv); k_idx += 1
        params[f"w_ih_{l}"] = w_ih.T               # (in_dim, 4*nhid)
        params[f"w_hh_{l}"] = w_hh.T               # (nhid, 4*nhid)
        params[f"b_{l}"] = (b_ih + b_hh)[None, :]  # (1, 4*nhid)

    dec_w = jax.random.uniform(keys[k_idx], (2, nhid), jnp.float32, -initrange, initrange)
    params["dec_w"] = dec_w.T                      # (nhid, 2)
    params["dec_b"] = jnp.zeros((1, 2), jnp.float32)
    return params


def reference_forward_matched(tokens, params, *, nlayers, nhid):
    """Plain-JAX reference replicating the kernel's padded / bf16 / split-matmul math."""
    emb_flat, layer_args, dec_w_pad, dec_b_pad, dims = _prepare_inputs(
        tokens, params, nlayers, nhid)
    seq_len, batch, batch_pad, ninp_pad, nhid_pad = dims

    x_all = emb_flat.reshape(seq_len, batch_pad, ninp_pad)  # bf16
    h = None
    for l in range(nlayers):
        w_ih, w_hh, b = layer_args[l]
        ig_all = jnp.dot(x_all, w_ih, preferred_element_type=jnp.float32) + b
        h = jnp.zeros((batch_pad, nhid_pad), jnp.float32)
        c = jnp.zeros((batch_pad, nhid_pad), jnp.float32)
        hs = []
        for t in range(seq_len):
            gates = ig_all[t] + jnp.dot(h.astype(jnp.bfloat16), w_hh,
                                        preferred_element_type=jnp.float32)
            i = jax.nn.sigmoid(gates[:, 0 * nhid_pad:1 * nhid_pad])
            f = jax.nn.sigmoid(gates[:, 1 * nhid_pad:2 * nhid_pad])
            g = jnp.tanh(gates[:, 2 * nhid_pad:3 * nhid_pad])
            o = jax.nn.sigmoid(gates[:, 3 * nhid_pad:4 * nhid_pad])
            c = f * c + i * g
            h = o * jnp.tanh(c)
            hs.append(h)
        x_all = jnp.stack(hs).astype(jnp.bfloat16)
    logits = (jnp.dot(h.astype(jnp.bfloat16), dec_w_pad,
                      preferred_element_type=jnp.float32) + dec_b_pad)
    return jax.nn.sigmoid(logits)[:batch, :2]


def reference_forward_f32(tokens, params, *, nlayers, nhid):
    """Pure f32 reference (eval-mode MyNet / PyTorch semantics)."""
    emb = params["encoder"][tokens]  # (S, B, ninp)
    seq_len, batch, _ = emb.shape
    x = emb
    for l in range(nlayers):
        w_ih = params[f"w_ih_{l}"]
        w_hh = params[f"w_hh_{l}"]
        b = params[f"b_{l}"][0]

        def step(carry, xt):
            h, c = carry
            gates = xt @ w_ih + h @ w_hh + b
            i = jax.nn.sigmoid(gates[:, 0 * nhid:1 * nhid])
            f = jax.nn.sigmoid(gates[:, 1 * nhid:2 * nhid])
            g = jnp.tanh(gates[:, 2 * nhid:3 * nhid])
            o = jax.nn.sigmoid(gates[:, 3 * nhid:4 * nhid])
            c_new = f * c + i * g
            h_new = o * jnp.tanh(c_new)
            return (h_new, c_new), h_new

        h0 = jnp.zeros((batch, nhid), jnp.float32)
        c0 = jnp.zeros((batch, nhid), jnp.float32)
        (_, _), ys = jax.lax.scan(step, (h0, c0), x)
        x = ys
    last = x[-1]  # (B, nhid)
    return jax.nn.sigmoid(last @ params["dec_w"] + params["dec_b"][0])


if __name__ == "__main__":
    ntoken, ninp, nhid, nlayers = 50, 32, 32, 2
    seq_len, batch = 8, 2

    key = jax.random.PRNGKey(0)
    k_param, k_tok = jax.random.split(key)
    params = init_params(k_param, ntoken, ninp, nhid, nlayers)
    tokens = jax.random.randint(k_tok, (seq_len, batch), 0, ntoken, dtype=jnp.int32)

    fwd = jax.jit(functools.partial(mynet_forward, nlayers=nlayers, nhid=nhid))
    out = jax.block_until_ready(fwd(tokens, params))
    assert out.shape == (batch, 2), out.shape

    # Tight check against a reference that mirrors the kernel's bf16/padded math.
    ref_m = reference_forward_matched(tokens, params, nlayers=nlayers, nhid=nhid)
    assert jnp.allclose(out, ref_m, atol=1e-4, rtol=1e-4), (out, ref_m)

    # Loose sanity check against pure-f32 PyTorch-equivalent math (bf16 weight quantization).
    ref_f = reference_forward_f32(tokens, params, nlayers=nlayers, nhid=nhid)
    assert jnp.allclose(out, ref_f, atol=5e-2, rtol=5e-2), (out, ref_f)

    print("KERNEL_OK")
</pallas_src>

<mosaic_0001>
module attributes {stable_mosaic.version = 11 : i64} {
  func.func @kernel(%arg0: memref<64x128xbf16, #tpu.memory_space<vmem>>, %arg1: memref<128x512xbf16, #tpu.memory_space<vmem>>, %arg2: memref<128x512xbf16, #tpu.memory_space<vmem>>, %arg3: memref<1x512xf32, #tpu.memory_space<vmem>>, %arg4: memref<128x512xbf16, #tpu.memory_space<vmem>>, %arg5: memref<128x512xbf16, #tpu.memory_space<vmem>>, %arg6: memref<1x512xf32, #tpu.memory_space<vmem>>, %arg7: memref<128x128xbf16, #tpu.memory_space<vmem>>, %arg8: memref<1x128xf32, #tpu.memory_space<vmem>>, %arg9: memref<8x128xf32, #tpu.memory_space<vmem>>, %arg10: memref<64x512xf32, #tpu.memory_space<vmem>>, %arg11: memref<64x128xbf16, #tpu.memory_space<vmem>>) attributes {dimension_semantics = [], scalar_prefetch = 0 : i64, scratch_operands = 2 : i64, tpu.core_type = #tpu.core_type<tc>} {
    %c0 = arith.constant 0 : index
    %c0_0 = arith.constant 0 : index
    %0 = vector.load %arg0[%c0, %c0_0] : memref<64x128xbf16, #tpu.memory_space<vmem>>, vector<64x128xbf16>
    %c0_1 = arith.constant 0 : index
    %c0_2 = arith.constant 0 : index
    %1 = vector.load %arg1[%c0_1, %c0_2] : memref<128x512xbf16, #tpu.memory_space<vmem>>, vector<128x512xbf16>
    %cst = arith.constant dense<0.000000e+00> : vector<64x512xf32>
    %2 = tpu.matmul %0, %1, %cst {dimension_numbers = #tpu.dot_dimension_numbers<[1], [0], [0], [1], [0, 0, 1, 1], [], []>} : vector<64x128xbf16>, vector<128x512xbf16>, vector<64x512xf32> -> vector<64x512xf32>
    %c0_3 = arith.constant 0 : index
    %c0_4 = arith.constant 0 : index
    %3 = vector.load %arg3[%c0_3, %c0_4] : memref<1x512xf32, #tpu.memory_space<vmem>>, vector<1x512xf32>
    %4 = vector.broadcast %3 : vector<1x512xf32> to vector<64x512xf32>
    %5 = arith.addf %2, %4 : vector<64x512xf32>
    %c0_5 = arith.constant 0 : index
    %c0_6 = arith.constant 0 : index
    %6 = vector.load %arg10[%c0_5, %c0_6] : memref<64x512xf32, #tpu.memory_space<vmem>>, vector<64x512xf32>
    tpu.vector_store %arg10[%c0_5, %c0_6], %5 {strides = array<i32>} : memref<64x512xf32, #tpu.memory_space<vmem>>, vector<64x512xf32>,
    %cst_7 = arith.constant 0.000000e+00 : f32
    %7 = vector.broadcast %cst_7 : f32 to vector<8x128xf32>
    %c0_i32 = arith.constant 0 : i32
    %c8_i32 = arith.constant 8 : i32
    %8 = arith.muli %c0_i32, %c8_i32 : i32
    %9 = tpu.assume_multiple %8, 8 : i32
    %10 = arith.index_cast %9 : i32 to index
    %c0_8 = arith.constant 0 : index
    %11 = vector.load %arg10[%10, %c0_8] : memref<64x512xf32, #tpu.memory_space<vmem>>, vector<8x512xf32>
    %12 = arith.truncf %7 : vector<8x128xf32> to vector<8x128xbf16>
    %c0_9 = arith.constant 0 : index
    %c0_10 = arith.constant 0 : index
    %13 = vector.load %arg2[%c0_9, %c0_10] : memref<128x512xbf16, #tpu.memory_space<vmem>>, vector<128x512xbf16>
    %cst_11 = arith.constant dense<0.000000e+00> : vector<8x512xf32>
    %14 = tpu.matmul %12, %13, %cst_11 {dimension_numbers = #tpu.dot_dimension_numbers<[1], [0], [0], [1], [0, 0, 1, 1], [], []>} : vector<8x128xbf16>, vector<128x512xbf16>, vector<8x512xf32> -> vector<8x512xf32>
    %15 = arith.addf %11, %14 : vector<8x512xf32>
    %16 = vector.extract_strided_slice %15 {offsets = [0, 0], sizes = [8, 128], strides = [1, 1]} : vector<8x512xf32> to vector<8x128xf32>
    %17 = arith.negf %16 : vector<8x128xf32>
    %18 = math.exp %17 : vector<8x128xf32>
    %cst_12 = arith.constant 1.000000e+00 : f32
    %19 = vector.broadcast %cst_12 : f32 to vector<8x128xf32>
    %20 = arith.addf %19, %18 : vector<8x128xf32>
    %21 = arith.divf %19, %20 : vector<8x128xf32>
    %22 = vector.extract_strided_slice %15 {offsets = [0, 128], sizes = [8, 128], strides = [1, 1]} : vector<8x512xf32> to vector<8x128xf32>
    %23 = arith.negf %22 : vector<8x128xf32>
    %24 = math.exp %23 : vector<8x128xf32>
    %cst_13 = arith.constant 1.000000e+00 : f32
    %25 = vector.broadcast %cst_13 : f32 to vector<8x128xf32>
    %26 = arith.addf %25, %24 : vector<8x128xf32>
    %27 = arith.divf %25, %26 : vector<8x128xf32>
    %28 = vector.extract_strided_slice %15 {offsets = [0, 256], sizes = [8, 128], strides = [1, 1]} : vector<8x512xf32> to vector<8x128xf32>
    %29 = math.tanh %28 : vector<8x128xf32>
    %30 = vector.extract_strided_slice %15 {offsets = [0, 384], sizes = [8, 128], strides = [1, 1]} : vector<8x512xf32> to vector<8x128xf32>
    %31 = arith.negf %30 : vector<8x128xf32>
    %32 = math.exp %31 : vector<8x128xf32>
    %cst_14 = arith.constant 1.000000e+00 : f32
    %33 = vector.broadcast %cst_14 : f32 to vector<8x128xf32>
    %34 = arith.addf %33, %32 : vector<8x128xf32>
    %35 = arith.divf %33, %34 : vector<8x128xf32>
    %36 = arith.mulf %27, %7 : vector<8x128xf32>
    %37 = arith.mulf %21, %29 : vector<8x128xf32>
    %38 = arith.addf %36, %37 : vector<8x128xf32>
    %39 = math.tanh %38 : vector<8x128xf32>
    %40 = arith.mulf %35, %39 : vector<8x128xf32>
    %41 = arith.truncf %40 : vector<8x128xf32> to vector<8x128xbf16>
    %42 = arith.index_cast %9 : i32 to index
    %c0_15 = arith.constant 0 : index
    %43 = vector.load %arg11[%42, %c0_15] : memref<64x128xbf16, #tpu.memory_space<vmem>>, vector<8x128xbf16>
    tpu.vector_store %arg11[%42, %c0_15], %41 {strides = array<i32>} : memref<64x128xbf16, #tpu.memory_space<vmem>>, vector<8x128xbf16>,
    %c1_i32 = arith.constant 1 : i32
    %c8_i32_16 = arith.constant 8 : i32
    %44 = arith.muli %c1_i32, %c8_i32_16 : i32
    %45 = tpu.assume_multiple %44, 8 : i32
    %46 = arith.index_cast %45 : i32 to index
    %c0_17 = arith.constant 0 : index
    %47 = vector.load %arg10[%46, %c0_17] : memref<64x512xf32, #tpu.memory_space<vmem>>, vector<8x512xf32>
    %48 = arith.truncf %40 : vector<8x128xf32> to vector<8x128xbf16>
    %c0_18 = arith.constant 0 : index
    %c0_19 = arith.constant 0 : index
    %49 = vector.load %arg2[%c0_18, %c0_19] : memref<128x512xbf16, #tpu.memory_space<vmem>>, vector<128x512xbf16>
    %cst_20 = arith.constant dense<0.000000e+00> : vector<8x512xf32>
    %50 = tpu.matmul %48, %49, %cst_20 {dimension_numbers = #tpu.dot_dimension_numbers<[1], [0], [0], [1], [0, 0, 1, 1], [], []>} : vector<8x128xbf16>, vector<128x512xbf16>, vector<8x512xf32> -> vector<8x512xf32>
    %51 = arith.addf %47, %50 : vector<8x512xf32>
    %52 = vector.extract_strided_slice %51 {offsets = [0, 0], sizes = [8, 128], strides = [1, 1]} : vector<8x512xf32> to vector<8x128xf32>
    %53 = arith.negf %52 : vector<8x128xf32>
    %54 = math.exp %53 : vector<8x128xf32>
    %cst_21 = arith.constant 1.000000e+00 : f32
    %55 = vector.broadcast %cst_21 : f32 to vector<8x128xf32>
    %56 = arith.addf %55, %54 : vector<8x128xf32>
    %57 = arith.divf %55, %56 : vector<8x128xf32>
    %58 = vector.extract_strided_slice %51 {offsets = [0, 128], sizes = [8, 128], strides = [1, 1]} : vector<8x512xf32> to vector<8x128xf32>
    %59 = arith.negf %58 : vector<8x128xf32>
    %60 = math.exp %59 : vector<8x128xf32>
    %cst_22 = arith.constant 1.000000e+00 : f32
    %61 = vector.broadcast %cst_22 : f32 to vector<8x128xf32>
    %62 = arith.addf %61, %60 : vector<8x128xf32>
    %63 = arith.divf %61, %62 : vector<8x128xf32>
    %64 = vector.extract_strided_slice %51 {offsets = [0, 256], sizes = [8, 128], strides = [1, 1]} : vector<8x512xf32> to vector<8x128xf32>
    %65 = math.tanh %64 : vector<8x128xf32>
    %66 = vector.extract_strided_slice %51 {offsets = [0, 384], sizes = [8, 128], strides = [1, 1]} : vector<8x512xf32> to vector<8x128xf32>
    %67 = arith.negf %66 : vector<8x128xf32>
    %68 = math.exp %67 : vector<8x128xf32>
    %cst_23 = arith.constant 1.000000e+00 : f32
    %69 = vector.broadcast %cst_23 : f32 to vector<8x128xf32>
    %70 = arith.addf %69, %68 : vector<8x128xf32>
    %71 = arith.divf %69, %70 : vector<8x128xf32>
    %72 = arith.mulf %63, %38 : vector<8x128xf32>
    %73 = arith.mulf %57, %65 : vector<8x128xf32>
    %74 = arith.addf %72, %73 : vector<8x128xf32>
    %75 = math.tanh %74 : vector<8x128xf32>
    %76 = arith.mulf %71, %75 : vector<8x128xf32>
    %77 = arith.truncf %76 : vector<8x128xf32> to vector<8x128xbf16>
    %78 = arith.index_cast %45 : i32 to index
    %c0_24 = arith.constant 0 : index
    %79 = vector.load %arg11[%78, %c0_24] : memref<64x128xbf16, #tpu.memory_space<vmem>>, vector<8x128xbf16>
    tpu.vector_store %arg11[%78, %c0_24], %77 {strides = array<i32>} : memref<64x128xbf16, #tpu.memory_space<vmem>>, vector<8x128xbf16>,
    %c2_i32 = arith.constant 2 : i32
    %c8_i32_25 = arith.constant 8 : i32
    %80 = arith.muli %c2_i32, %c8_i32_25 : i32
    %81 = tpu.assume_multiple %80, 8 : i32
    %82 = arith.index_cast %81 : i32 to index
    %c0_26 = arith.constant 0 : index
    %83 = vector.load %arg10[%82, %c0_26] : memref<64x512xf32, #tpu.memory_space<vmem>>, vector<8x512xf32>
    %84 = arith.truncf %76 : vector<8x128xf32> to vector<8x128xbf16>
    %c0_27 = arith.constant 0 : index
    %c0_28 = arith.constant 0 : index
    %85 = vector.load %arg2[%c0_27, %c0_28] : memref<128x512xbf16, #tpu.memory_space<vmem>>, vector<128x512xbf16>
    %cst_29 = arith.constant dense<0.000000e+00> : vector<8x512xf32>
    %86 = tpu.matmul %84, %85, %cst_29 {dimension_numbers = #tpu.dot_dimension_numbers<[1], [0], [0], [1], [0, 0, 1, 1], [], []>} : vector<8x128xbf16>, vector<128x512xbf16>, vector<8x512xf32> -> vector<8x512xf32>
    %87 = arith.addf %83, %86 : vector<8x512xf32>
    %88 = vector.extract_strided_slice %87 {offsets = [0, 0], sizes = [8, 128], strides = [1, 1]} : vector<8x512xf32> to vector<8x128xf32>
    %89 = arith.negf %88 : vector<8x128xf32>
    %90 = math.exp %89 : vector<8x128xf32>
    %cst_30 = arith.constant 1.000000e+00 : f32
    %91 = vector.broadcast %cst_30 : f32 to vector<8x128xf32>
    %92 = arith.addf %91, %90 : vector<8x128xf32>
    %93 = arith.divf %91, %92 : vector<8x128xf32>
    %94 = vector.extract_strided_slice %87 {offsets = [0, 128], sizes = [8, 128], strides = [1, 1]} : vector<8x512xf32> to vector<8x128xf32>
    %95 = arith.negf %94 : vector<8x128xf32>
    %96 = math.exp %95 : vector<8x128xf32>
    %cst_31 = arith.constant 1.000000e+00 : f32
    %97 = vector.broadcast %cst_31 : f32 to vector<8x128xf32>
    %98 = arith.addf %97, %96 : vector<8x128xf32>
    %99 = arith.divf %97, %98 : vector<8x128xf32>
    %100 = vector.extract_strided_slice %87 {offsets = [0, 256], sizes = [8, 128], strides = [1, 1]} : vector<8x512xf32> to vector<8x128xf32>
    %101 = math.tanh %100 : vector<8x128xf32>
    %102 = vector.extract_strided_slice %87 {offsets = [0, 384], sizes = [8, 128], strides = [1, 1]} : vector<8x512xf32> to vector<8x128xf32>
    %103 = arith.negf %102 : vector<8x128xf32>
    %104 = math.exp %103 : vector<8x128xf32>
    %cst_32 = arith.constant 1.000000e+00 : f32
    %105 = vector.broadcast %cst_32 : f32 to vector<8x128xf32>
    %106 = arith.addf %105, %104 : vector<8x128xf32>
    %107 = arith.divf %105, %106 : vector<8x128xf32>
    %108 = arith.mulf %99, %74 : vector<8x128xf32>
    %109 = arith.mulf %93, %101 : vector<8x128xf32>
    %110 = arith.addf %108, %109 : vector<8x128xf32>
    %111 = math.tanh %110 : vector<8x128xf32>
    %112 = arith.mulf %107, %111 : vector<8x128xf32>
    %113 = arith.truncf %112 : vector<8x128xf32> to vector<8x128xbf16>
    %114 = arith.index_cast %81 : i32 to index
    %c0_33 = arith.constant 0 : index
    %115 = vector.load %arg11[%114, %c0_33] : memref<64x128xbf16, #tpu.memory_space<vmem>>, vector<8x128xbf16>
    tpu.vector_store %arg11[%114, %c0_33], %113 {strides = array<i32>} : memref<64x128xbf16, #tpu.memory_space<vmem>>, vector<8x128xbf16>,
    %c3_i32 = arith.constant 3 : i32
    %c8_i32_34 = arith.constant 8 : i32
    %116 = arith.muli %c3_i32, %c8_i32_34 : i32
    %117 = tpu.assume_multiple %116, 8 : i32
    %118 = arith.index_cast %117 : i32 to index
    %c0_35 = arith.constant 0 : index
    %119 = vector.load %arg10[%118, %c0_35] : memref<64x512xf32, #tpu.memory_space<vmem>>, vector<8x512xf32>
    %120 = arith.truncf %112 : vector<8x128xf32> to vector<8x128xbf16>
    %c0_36 = arith.constant 0 : index
    %c0_37 = arith.constant 0 : index
    %121 = vector.load %arg2[%c0_36, %c0_37] : memref<128x512xbf16, #tpu.memory_space<vmem>>, vector<128x512xbf16>
    %cst_38 = arith.constant dense<0.000000e+00> : vector<8x512xf32>
    %122 = tpu.matmul %120, %121, %cst_38 {dimension_numbers = #tpu.dot_dimension_numbers<[1], [0], [0], [1], [0, 0, 1, 1], [], []>} : vector<8x128xbf16>, vector<128x512xbf16>, vector<8x512xf32> -> vector<8x512xf32>
    %123 = arith.addf %119, %122 : vector<8x512xf32>
    %124 = vector.extract_strided_slice %123 {offsets = [0, 0], sizes = [8, 128], strides = [1, 1]} : vector<8x512xf32> to vector<8x128xf32>
    %125 = arith.negf %124 : vector<8x128xf32>
    %126 = math.exp %125 : vector<8x128xf32>
    %cst_39 = arith.constant 1.000000e+00 : f32
    %127 = vector.broadcast %cst_39 : f32 to vector<8x128xf32>
    %128 = arith.addf %127, %126 : vector<8x128xf32>
    %129 = arith.divf %127, %128 : vector<8x128xf32>
    %130 = vector.extract_strided_slice %123 {offsets = [0, 128], sizes = [8, 128], strides = [1, 1]} : vector<8x512xf32> to vector<8x128xf32>
    %131 = arith.negf %130 : vector<8x128xf32>
    %132 = math.exp %131 : vector<8x128xf32>
    %cst_40 = arith.constant 1.000000e+00 : f32
    %133 = vector.broadcast %cst_40 : f32 to vector<8x128xf32>
    %134 = arith.addf %133, %132 : vector<8x128xf32>
    %135 = arith.divf %133, %134 : vector<8x128xf32>
    %136 = vector.extract_strided_slice %123 {offsets = [0, 256], sizes = [8, 128], strides = [1, 1]} : vector<8x512xf32> to vector<8x128xf32>
    %137 = math.tanh %136 : vector<8x128xf32>
    %138 = vector.extract_strided_slice %123 {offsets = [0, 384], sizes = [8, 128], strides = [1, 1]} : vector<8x512xf32> to vector<8x128xf32>
    %139 = arith.negf %138 : vector<8x128xf32>
    %140 = math.exp %139 : vector<8x128xf32>
    %cst_41 = arith.constant 1.000000e+00 : f32
    %141 = vector.broadcast %cst_41 : f32 to vector<8x128xf32>
    %142 = arith.addf %141, %140 : vector<8x128xf32>
    %143 = arith.divf %141, %142 : vector<8x128xf32>
    %144 = arith.mulf %135, %110 : vector<8x128xf32>
    %145 = arith.mulf %129, %137 : vector<8x128xf32>
    %146 = arith.addf %144, %145 : vector<8x128xf32>
    %147 = math.tanh %146 : vector<8x128xf32>
    %148 = arith.mulf %143, %147 : vector<8x128xf32>
    %149 = arith.truncf %148 : vector<8x128xf32> to vector<8x128xbf16>
    %150 = arith.index_cast %117 : i32 to index
    %c0_42 = arith.constant 0 : index
    %151 = vector.load %arg11[%150, %c0_42] : memref<64x128xbf16, #tpu.memory_space<vmem>>, vector<8x128xbf16>
    tpu.vector_store %arg11[%150, %c0_42], %149 {strides = array<i32>} : memref<64x128xbf16, #tpu.memory_space<vmem>>, vector<8x128xbf16>,
    %c4_i32 = arith.constant 4 : i32
    %c8_i32_43 = arith.constant 8 : i32
    %152 = arith.muli %c4_i32, %c8_i32_43 : i32
    %153 = tpu.assume_multiple %152, 8 : i32
    %154 = arith.index_cast %153 : i32 to index
    %c0_44 = arith.constant 0 : index
    %155 = vector.load %arg10[%154, %c0_44] : memref<64x512xf32, #tpu.memory_space<vmem>>, vector<8x512xf32>
    %156 = arith.truncf %148 : vector<8x128xf32> to vector<8x128xbf16>
    %c0_45 = arith.constant 0 : index
    %c0_46 = arith.constant 0 : index
    %157 = vector.load %arg2[%c0_45, %c0_46] : memref<128x512xbf16, #tpu.memory_space<vmem>>, vector<128x512xbf16>
    %cst_47 = arith.constant dense<0.000000e+00> : vector<8x512xf32>
    %158 = tpu.matmul %156, %157, %cst_47 {dimension_numbers = #tpu.dot_dimension_numbers<[1], [0], [0], [1], [0, 0, 1, 1], [], []>} : vector<8x128xbf16>, vector<128x512xbf16>, vector<8x512xf32> -> vector<8x512xf32>
    %159 = arith.addf %155, %158 : vector<8x512xf32>
    %160 = vector.extract_strided_slice %159 {offsets = [0, 0], sizes = [8, 128], strides = [1, 1]} : vector<8x512xf32> to vector<8x128xf32>
    %161 = arith.negf %160 : vector<8x128xf32>
    %162 = math.exp %161 : vector<8x128xf32>
    %cst_48 = arith.constant 1.000000e+00 : f32
    %163 = vector.broadcast %cst_48 : f32 to vector<8x128xf32>
    %164 = arith.addf %163, %162 : vector<8x128xf32>
    %165 = arith.divf %163, %164 : vector<8x128xf32>
    %166 = vector.extract_strided_slice %159 {offsets = [0, 128], sizes = [8, 128], strides = [1, 1]} : vector<8x512xf32> to vector<8x128xf32>
    %167 = arith.negf %166 : vector<8x128xf32>
    %168 = math.exp %167 : vector<8x128xf32>
    %cst_49 = arith.constant 1.000000e+00 : f32
    %169 = vector.broadcast %cst_49 : f32 to vector<8x128xf32>
    %170 = arith.addf %169, %168 : vector<8x128xf32>
    %171 = arith.divf %169, %170 : vector<8x128xf32>
    %172 = vector.extract_strided_slice %159 {offsets = [0, 256], sizes = [8, 128], strides = [1, 1]} : vector<8x512xf32> to vector<8x128xf32>
    %173 = math.tanh %172 : vector<8x128xf32>
    %174 = vector.extract_strided_slice %159 {offsets = [0, 384], sizes = [8, 128], strides = [1, 1]} : vector<8x512xf32> to vector<8x128xf32>
    %175 = arith.negf %174 : vector<8x128xf32>
    %176 = math.exp %175 : vector<8x128xf32>
    %cst_50 = arith.constant 1.000000e+00 : f32
    %177 = vector.broadcast %cst_50 : f32 to vector<8x128xf32>
    %178 = arith.addf %177, %176 : vector<8x128xf32>
    %179 = arith.divf %177, %178 : vector<8x128xf32>
    %180 = arith.mulf %171, %146 : vector<8x128xf32>
    %181 = arith.mulf %165, %173 : vector<8x128xf32>
    %182 = arith.addf %180, %181 : vector<8x128xf32>
    %183 = math.tanh %182 : vector<8x128xf32>
    %184 = arith.mulf %179, %183 : vector<8x128xf32>
    %185 = arith.truncf %184 : vector<8x128xf32> to vector<8x128xbf16>
    %186 = arith.index_cast %153 : i32 to index
    %c0_51 = arith.constant 0 : index
    %187 = vector.load %arg11[%186, %c0_51] : memref<64x128xbf16, #tpu.memory_space<vmem>>, vector<8x128xbf16>
    tpu.vector_store %arg11[%186, %c0_51], %185 {strides = array<i32>} : memref<64x128xbf16, #tpu.memory_space<vmem>>, vector<8x128xbf16>,
    %c5_i32 = arith.constant 5 : i32
    %c8_i32_52 = arith.constant 8 : i32
    %188 = arith.muli %c5_i32, %c8_i32_52 : i32
    %189 = tpu.assume_multiple %188, 8 : i32
    %190 = arith.index_cast %189 : i32 to index
    %c0_53 = arith.constant 0 : index
    %191 = vector.load %arg10[%190, %c0_53] : memref<64x512xf32, #tpu.memory_space<vmem>>, vector<8x512xf32>
    %192 = arith.truncf %184 : vector<8x128xf32> to vector<8x128xbf16>
    %c0_54 = arith.constant 0 : index
    %c0_55 = arith.constant 0 : index
    %193 = vector.load %arg2[%c0_54, %c0_55] : memref<128x512xbf16, #tpu.memory_space<vmem>>, vector<128x512xbf16>
    %cst_56 = arith.constant dense<0.000000e+00> : vector<8x512xf32>
    %194 = tpu.matmul %192, %193, %cst_56 {dimension_numbers = #tpu.dot_dimension_numbers<[1], [0], [0], [1], [0, 0, 1, 1], [], []>} : vector<8x128xbf16>, vector<128x512xbf16>, vector<8x512xf32> -> vector<8x512xf32>
    %195 = arith.addf %191, %194 : vector<8x512xf32>
    %196 = vector.extract_strided_slice %195 {offsets = [0, 0], sizes = [8, 128], strides = [1, 1]} : vector<8x512xf32> to vector<8x128xf32>
    %197 = arith.negf %196 : vector<8x128xf32>
    %198 = math.exp %197 : vector<8x128xf32>
    %cst_57 = arith.constant 1.000000e+00 : f32
    %199 = vector.broadcast %cst_57 : f32 to vector<8x128xf32>
    %200 = arith.addf %199, %198 : vector<8x128xf32>
    %201 = arith.divf %199, %200 : vector<8x128xf32>
    %202 = vector.extract_strided_slice %195 {offsets = [0, 128], sizes = [8, 128], strides = [1, 1]} : vector<8x512xf32> to vector<8x128xf32>
    %203 = arith.negf %202 : vector<8x128xf32>
    %204 = math.exp %203 : vector<8x128xf32>
    %cst_58 = arith.constant 1.000000e+00 : f32
    %205 = vector.broadcast %cst_58 : f32 to vector<8x128xf32>
    %206 = arith.addf %205, %204 : vector<8x128xf32>
    %207 = arith.divf %205, %206 : vector<8x128xf32>
    %208 = vector.extract_strided_slice %195 {offsets = [0, 256], sizes = [8, 128], strides = [1, 1]} : vector<8x512xf32> to vector<8x128xf32>
    %209 = math.tanh %208 : vector<8x128xf32>
    %210 = vector.extract_strided_slice %195 {offsets = [0, 384], sizes = [8, 128], strides = [1, 1]} : vector<8x512xf32> to vector<8x128xf32>
    %211 = arith.negf %210 : vector<8x128xf32>
    %212 = math.exp %211 : vector<8x128xf32>
    %cst_59 = arith.constant 1.000000e+00 : f32
    %213 = vector.broadcast %cst_59 : f32 to vector<8x128xf32>
    %214 = arith.addf %213, %212 : vector<8x128xf32>
    %215 = arith.divf %213, %214 : vector<8x128xf32>
    %216 = arith.mulf %207, %182 : vector<8x128xf32>
    %217 = arith.mulf %201, %209 : vector<8x128xf32>
    %218 = arith.addf %216, %217 : vector<8x128xf32>
    %219 = math.tanh %218 : vector<8x128xf32>
    %220 = arith.mulf %215, %219 : vector<8x128xf32>
    %221 = arith.truncf %220 : vector<8x128xf32> to vector<8x128xbf16>
    %222 = arith.index_cast %189 : i32 to index
    %c0_60 = arith.constant 0 : index
    %223 = vector.load %arg11[%222, %c0_60] : memref<64x128xbf16, #tpu.memory_space<vmem>>, vector<8x128xbf16>
    tpu.vector_store %arg11[%222, %c0_60], %221 {strides = array<i32>} : memref<64x128xbf16, #tpu.memory_space<vmem>>, vector<8x128xbf16>,
    %c6_i32 = arith.constant 6 : i32
    %c8_i32_61 = arith.constant 8 : i32
    %224 = arith.muli %c6_i32, %c8_i32_61 : i32
    %225 = tpu.assume_multiple %224, 8 : i32
    %226 = arith.index_cast %225 : i32 to index
    %c0_62 = arith.constant 0 : index
    %227 = vector.load %arg10[%226, %c0_62] : memref<64x512xf32, #tpu.memory_space<vmem>>, vector<8x512xf32>
    %228 = arith.truncf %220 : vector<8x128xf32> to vector<8x128xbf16>
    %c0_63 = arith.constant 0 : index
    %c0_64 = arith.constant 0 : index
    %229 = vector.load %arg2[%c0_63, %c0_64] : memref<128x512xbf16, #tpu.memory_space<vmem>>, vector<128x512xbf16>
    %cst_65 = arith.constant dense<0.000000e+00> : vector<8x512xf32>
    %230 = tpu.matmul %228, %229, %cst_65 {dimension_numbers = #tpu.dot_dimension_numbers<[1], [0], [0], [1], [0, 0, 1, 1], [], []>} : vector<8x128xbf16>, vector<128x512xbf16>, vector<8x512xf32> -> vector<8x512xf32>
    %231 = arith.addf %227, %230 : vector<8x512xf32>
    %232 = vector.extract_strided_slice %231 {offsets = [0, 0], sizes = [8, 128], strides = [1, 1]} : vector<8x512xf32> to vector<8x128xf32>
    %233 = arith.negf %232 : vector<8x128xf32>
    %234 = math.exp %233 : vector<8x128xf32>
    %cst_66 = arith.constant 1.000000e+00 : f32
    %235 = vector.broadcast %cst_66 : f32 to vector<8x128xf32>
    %236 = arith.addf %235, %234 : vector<8x128xf32>
    %237 = arith.divf %235, %236 : vector<8x128xf32>
    %238 = vector.extract_strided_slice %231 {offsets = [0, 128], sizes = [8, 128], strides = [1, 1]} : vector<8x512xf32> to vector<8x128xf32>
    %239 = arith.negf %238 : vector<8x128xf32>
    %240 = math.exp %239 : vector<8x128xf32>
    %cst_67 = arith.constant 1.000000e+00 : f32
    %241 = vector.broadcast %cst_67 : f32 to vector<8x128xf32>
    %242 = arith.addf %241, %240 : vector<8x128xf32>
    %243 = arith.divf %241, %242 : vector<8x128xf32>
    %244 = vector.extract_strided_slice %231 {offsets = [0, 256], sizes = [8, 128], strides = [1, 1]} : vector<8x512xf32> to vector<8x128xf32>
    %245 = math.tanh %244 : vector<8x128xf32>
    %246 = vector.extract_strided_slice %231 {offsets = [0, 384], sizes = [8, 128], strides = [1, 1]} : vector<8x512xf32> to vector<8x128xf32>
    %247 = arith.negf %246 : vector<8x128xf32>
    %248 = math.exp %247 : vector<8x128xf32>
    %cst_68 = arith.constant 1.000000e+00 : f32
    %249 = vector.broadcast %cst_68 : f32 to vector<8x128xf32>
    %250 = arith.addf %249, %248 : vector<8x128xf32>
    %251 = arith.divf %249, %250 : vector<8x128xf32>
    %252 = arith.mulf %243, %218 : vector<8x128xf32>
    %253 = arith.mulf %237, %245 : vector<8x128xf32>
    %254 = arith.addf %252, %253 : vector<8x128xf32>
    %255 = math.tanh %254 : vector<8x128xf32>
    %256 = arith.mulf %251, %255 : vector<8x128xf32>
    %257 = arith.truncf %256 : vector<8x128xf32> to vector<8x128xbf16>
    %258 = arith.index_cast %225 : i32 to index
    %c0_69 = arith.constant 0 : index
    %259 = vector.load %arg11[%258, %c0_69] : memref<64x128xbf16, #tpu.memory_space<vmem>>, vector<8x128xbf16>
    tpu.vector_store %arg11[%258, %c0_69], %257 {strides = array<i32>} : memref<64x128xbf16, #tpu.memory_space<vmem>>, vector<8x128xbf16>,
    %c7_i32 = arith.constant 7 : i32
    %c8_i32_70 = arith.constant 8 : i32
    %260 = arith.muli %c7_i32, %c8_i32_70 : i32
    %261 = tpu.assume_multiple %260, 8 : i32
    %262 = arith.index_cast %261 : i32 to index
    %c0_71 = arith.constant 0 : index
    %263 = vector.load %arg10[%262, %c0_71] : memref<64x512xf32, #tpu.memory_space<vmem>>, vector<8x512xf32>
    %264 = arith.truncf %256 : vector<8x128xf32> to vector<8x128xbf16>
    %c0_72 = arith.constant 0 : index
    %c0_73 = arith.constant 0 : index
    %265 = vector.load %arg2[%c0_72, %c0_73] : memref<128x512xbf16, #tpu.memory_space<vmem>>, vector<128x512xbf16>
    %cst_74 = arith.constant dense<0.000000e+00> : vector<8x512xf32>
    %266 = tpu.matmul %264, %265, %cst_74 {dimension_numbers = #tpu.dot_dimension_numbers<[1], [0], [0], [1], [0, 0, 1, 1], [], []>} : vector<8x128xbf16>, vector<128x512xbf16>, vector<8x512xf32> -> vector<8x512xf32>
    %267 = arith.addf %263, %266 : vector<8x512xf32>
    %268 = vector.extract_strided_slice %267 {offsets = [0, 0], sizes = [8, 128], strides = [1, 1]} : vector<8x512xf32> to vector<8x128xf32>
    %269 = arith.negf %268 : vector<8x128xf32>
    %270 = math.exp %269 : vector<8x128xf32>
    %cst_75 = arith.constant 1.000000e+00 : f32
    %271 = vector.broadcast %cst_75 : f32 to vector<8x128xf32>
    %272 = arith.addf %271, %270 : vector<8x128xf32>
    %273 = arith.divf %271, %272 : vector<8x128xf32>
    %274 = vector.extract_strided_slice %267 {offsets = [0, 128], sizes = [8, 128], strides = [1, 1]} : vector<8x512xf32> to vector<8x128xf32>
    %275 = arith.negf %274 : vector<8x128xf32>
    %276 = math.exp %275 : vector<8x128xf32>
    %cst_76 = arith.constant 1.000000e+00 : f32
    %277 = vector.broadcast %cst_76 : f32 to vector<8x128xf32>
    %278 = arith.addf %277, %276 : vector<8x128xf32>
    %279 = arith.divf %277, %278 : vector<8x128xf32>
    %280 = vector.extract_strided_slice %267 {offsets = [0, 256], sizes = [8, 128], strides = [1, 1]} : vector<8x512xf32> to vector<8x128xf32>
    %281 = math.tanh %280 : vector<8x128xf32>
    %282 = vector.extract_strided_slice %267 {offsets = [0, 384], sizes = [8, 128], strides = [1, 1]} : vector<8x512xf32> to vector<8x128xf32>
    %283 = arith.negf %282 : vector<8x128xf32>
    %284 = math.exp %283 : vector<8x128xf32>
    %cst_77 = arith.constant 1.000000e+00 : f32
    %285 = vector.broadcast %cst_77 : f32 to vector<8x128xf32>
    %286 = arith.addf %285, %284 : vector<8x128xf32>
    %287 = arith.divf %285, %286 : vector<8x128xf32>
    %288 = arith.mulf %279, %254 : vector<8x128xf32>
    %289 = arith.mulf %273, %281 : vector<8x128xf32>
    %290 = arith.addf %288, %289 : vector<8x128xf32>
    %291 = math.tanh %290 : vector<8x128xf32>
    %292 = arith.mulf %287, %291 : vector<8x128xf32>
    %293 = arith.truncf %292 : vector<8x128xf32> to vector<8x128xbf16>
    %294 = arith.index_cast %261 : i32 to index
    %c0_78 = arith.constant 0 : index
    %295 = vector.load %arg11[%294, %c0_78] : memref<64x128xbf16, #tpu.memory_space<vmem>>, vector<8x128xbf16>
    tpu.vector_store %arg11[%294, %c0_78], %293 {strides = array<i32>} : memref<64x128xbf16, #tpu.memory_space<vmem>>, vector<8x128xbf16>,
    %c8_i32_79 = arith.constant 8 : i32
    %c0_80 = arith.constant 0 : index
    %c0_81 = arith.constant 0 : index
    %296 = vector.load %arg11[%c0_80, %c0_81] : memref<64x128xbf16, #tpu.memory_space<vmem>>, vector<64x128xbf16>
    %c0_82 = arith.constant 0 : index
    %c0_83 = arith.constant 0 : index
    %297 = vector.load %arg4[%c0_82, %c0_83] : memref<128x512xbf16, #tpu.memory_space<vmem>>, vector<128x512xbf16>
    %cst_84 = arith.constant dense<0.000000e+00> : vector<64x512xf32>
    %298 = tpu.matmul %296, %297, %cst_84 {dimension_numbers = #tpu.dot_dimension_numbers<[1], [0], [0], [1], [0, 0, 1, 1], [], []>} : vector<64x128xbf16>, vector<128x512xbf16>, vector<64x512xf32> -> vector<64x512xf32>
    %c0_85 = arith.constant 0 : index
    %c0_86 = arith.constant 0 : index
    %299 = vector.load %arg6[%c0_85, %c0_86] : memref<1x512xf32, #tpu.memory_space<vmem>>, vector<1x512xf32>
    %300 = vector.broadcast %299 : vector<1x512xf32> to vector<64x512xf32>
    %301 = arith.addf %298, %300 : vector<64x512xf32>
    %c0_87 = arith.constant 0 : index
    %c0_88 = arith.constant 0 : index
    %302 = vector.load %arg10[%c0_87, %c0_88] : memref<64x512xf32, #tpu.memory_space<vmem>>, vector<64x512xf32>
    tpu.vector_store %arg10[%c0_87, %c0_88], %301 {strides = array<i32>} : memref<64x512xf32, #tpu.memory_space<vmem>>, vector<64x512xf32>,
    %cst_89 = arith.constant 0.000000e+00 : f32
    %303 = vector.broadcast %cst_89 : f32 to vector<8x128xf32>
    %c0_i32_90 = arith.constant 0 : i32
    %c8_i32_91 = arith.constant 8 : i32
    %304 = arith.muli %c0_i32_90, %c8_i32_91 : i32
    %305 = tpu.assume_multiple %304, 8 : i32
    %306 = arith.index_cast %305 : i32 to index
    %c0_92 = arith.constant 0 : index
    %307 = vector.load %arg10[%306, %c0_92] : memref<64x512xf32, #tpu.memory_space<vmem>>, vector<8x512xf32>
    %308 = arith.truncf %303 : vector<8x128xf32> to vector<8x128xbf16>
    %c0_93 = arith.constant 0 : index
    %c0_94 = arith.constant 0 : index
    %309 = vector.load %arg5[%c0_93, %c0_94] : memref<128x512xbf16, #tpu.memory_space<vmem>>, vector<128x512xbf16>
    %cst_95 = arith.constant dense<0.000000e+00> : vector<8x512xf32>
    %310 = tpu.matmul %308, %309, %cst_95 {dimension_numbers = #tpu.dot_dimension_numbers<[1], [0], [0], [1], [0, 0, 1, 1], [], []>} : vector<8x128xbf16>, vector<128x512xbf16>, vector<8x512xf32> -> vector<8x512xf32>
    %311 = arith.addf %307, %310 : vector<8x512xf32>
    %312 = vector.extract_strided_slice %311 {offsets = [0, 0], sizes = [8, 128], strides = [1, 1]} : vector<8x512xf32> to vector<8x128xf32>
    %313 = arith.negf %312 : vector<8x128xf32>
    %314 = math.exp %313 : vector<8x128xf32>
    %cst_96 = arith.constant 1.000000e+00 : f32
    %315 = vector.broadcast %cst_96 : f32 to vector<8x128xf32>
    %316 = arith.addf %315, %314 : vector<8x128xf32>
    %317 = arith.divf %315, %316 : vector<8x128xf32>
    %318 = vector.extract_strided_slice %311 {offsets = [0, 128], sizes = [8, 128], strides = [1, 1]} : vector<8x512xf32> to vector<8x128xf32>
    %319 = arith.negf %318 : vector<8x128xf32>
    %320 = math.exp %319 : vector<8x128xf32>
    %cst_97 = arith.constant 1.000000e+00 : f32
    %321 = vector.broadcast %cst_97 : f32 to vector<8x128xf32>
    %322 = arith.addf %321, %320 : vector<8x128xf32>
    %323 = arith.divf %321, %322 : vector<8x128xf32>
    %324 = vector.extract_strided_slice %311 {offsets = [0, 256], sizes = [8, 128], strides = [1, 1]} : vector<8x512xf32> to vector<8x128xf32>
    %325 = math.tanh %324 : vector<8x128xf32>
    %326 = vector.extract_strided_slice %311 {offsets = [0, 384], sizes = [8, 128], strides = [1, 1]} : vector<8x512xf32> to vector<8x128xf32>
    %327 = arith.negf %326 : vector<8x128xf32>
    %328 = math.exp %327 : vector<8x128xf32>
    %cst_98 = arith.constant 1.000000e+00 : f32
    %329 = vector.broadcast %cst_98 : f32 to vector<8x128xf32>
    %330 = arith.addf %329, %328 : vector<8x128xf32>
    %331 = arith.divf %329, %330 : vector<8x128xf32>
    %332 = arith.mulf %323, %303 : vector<8x128xf32>
    %333 = arith.mulf %317, %325 : vector<8x128xf32>
    %334 = arith.addf %332, %333 : vector<8x128xf32>
    %335 = math.tanh %334 : vector<8x128xf32>
    %336 = arith.mulf %331, %335 : vector<8x128xf32>
    %c1_i32_99 = arith.constant 1 : i32
    %c8_i32_100 = arith.constant 8 : i32
    %337 = arith.muli %c1_i32_99, %c8_i32_100 : i32
    %338 = tpu.assume_multiple %337, 8 : i32
    %339 = arith.index_cast %338 : i32 to index
    %c0_101 = arith.constant 0 : index
    %340 = vector.load %arg10[%339, %c0_101] : memref<64x512xf32, #tpu.memory_space<vmem>>, vector<8x512xf32>
    %341 = arith.truncf %336 : vector<8x128xf32> to vector<8x128xbf16>
    %c0_102 = arith.constant 0 : index
    %c0_103 = arith.constant 0 : index
    %342 = vector.load %arg5[%c0_102, %c0_103] : memref<128x512xbf16, #tpu.memory_space<vmem>>, vector<128x512xbf16>
    %cst_104 = arith.constant dense<0.000000e+00> : vector<8x512xf32>
    %343 = tpu.matmul %341, %342, %cst_104 {dimension_numbers = #tpu.dot_dimension_numbers<[1], [0], [0], [1], [0, 0, 1, 1], [], []>} : vector<8x128xbf16>, vector<128x512xbf16>, vector<8x512xf32> -> vector<8x512xf32>
    %344 = arith.addf %340, %343 : vector<8x512xf32>
    %345 = vector.extract_strided_slice %344 {offsets = [0, 0], sizes = [8, 128], strides = [1, 1]} : vector<8x512xf32> to vector<8x128xf32>
    %346 = arith.negf %345 : vector<8x128xf32>
    %347 = math.exp %346 : vector<8x128xf32>
    %cst_105 = arith.constant 1.000000e+00 : f32
    %348 = vector.broadcast %cst_105 : f32 to vector<8x128xf32>
    %349 = arith.addf %348, %347 : vector<8x128xf32>
    %350 = arith.divf %348, %349 : vector<8x128xf32>
    %351 = vector.extract_strided_slice %344 {offsets = [0, 128], sizes = [8, 128], strides = [1, 1]} : vector<8x512xf32> to vector<8x128xf32>
    %352 = arith.negf %351 : vector<8x128xf32>
    %353 = math.exp %352 : vector<8x128xf32>
    %cst_106 = arith.constant 1.000000e+00 : f32
    %354 = vector.broadcast %cst_106 : f32 to vector<8x128xf32>
    %355 = arith.addf %354, %353 : vector<8x128xf32>
    %356 = arith.divf %354, %355 : vector<8x128xf32>
    %357 = vector.extract_strided_slice %344 {offsets = [0, 256], sizes = [8, 128], strides = [1, 1]} : vector<8x512xf32> to vector<8x128xf32>
    %358 = math.tanh %357 : vector<8x128xf32>
    %359 = vector.extract_strided_slice %344 {offsets = [0, 384], sizes = [8, 128], strides = [1, 1]} : vector<8x512xf32> to vector<8x128xf32>
    %360 = arith.negf %359 : vector<8x128xf32>
    %361 = math.exp %360 : vector<8x128xf32>
    %cst_107 = arith.constant 1.000000e+00 : f32
    %362 = vector.broadcast %cst_107 : f32 to vector<8x128xf32>
    %363 = arith.addf %362, %361 : vector<8x128xf32>
    %364 = arith.divf %362, %363 : vector<8x128xf32>
    %365 = arith.mulf %356, %334 : vector<8x128xf32>
    %366 = arith.mulf %350, %358 : vector<8x128xf32>
    %367 = arith.addf %365, %366 : vector<8x128xf32>
    %368 = math.tanh %367 : vector<8x128xf32>
    %369 = arith.mulf %364, %368 : vector<8x128xf32>
    %c2_i32_108 = arith.constant 2 : i32
    %c8_i32_109 = arith.constant 8 : i32
    %370 = arith.muli %c2_i32_108, %c8_i32_109 : i32
    %371 = tpu.assume_multiple %370, 8 : i32
    %372 = arith.index_cast %371 : i32 to index
    %c0_110 = arith.constant 0 : index
    %373 = vector.load %arg10[%372, %c0_110] : memref<64x512xf32, #tpu.memory_space<vmem>>, vector<8x512xf32>
    %374 = arith.truncf %369 : vector<8x128xf32> to vector<8x128xbf16>
    %c0_111 = arith.constant 0 : index
    %c0_112 = arith.constant 0 : index
    %375 = vector.load %arg5[%c0_111, %c0_112] : memref<128x512xbf16, #tpu.memory_space<vmem>>, vector<128x512xbf16>
    %cst_113 = arith.constant dense<0.000000e+00> : vector<8x512xf32>
    %376 = tpu.matmul %374, %375, %cst_113 {dimension_numbers = #tpu.dot_dimension_numbers<[1], [0], [0], [1], [0, 0, 1, 1], [], []>} : vector<8x128xbf16>, vector<128x512xbf16>, vector<8x512xf32> -> vector<8x512xf32>
    %377 = arith.addf %373, %376 : vector<8x512xf32>
    %378 = vector.extract_strided_slice %377 {offsets = [0, 0], sizes = [8, 128], strides = [1, 1]} : vector<8x512xf32> to vector<8x128xf32>
    %379 = arith.negf %378 : vector<8x128xf32>
    %380 = math.exp %379 : vector<8x128xf32>
    %cst_114 = arith.constant 1.000000e+00 : f32
    %381 = vector.broadcast %cst_114 : f32 to vector<8x128xf32>
    %382 = arith.addf %381, %380 : vector<8x128xf32>
    %383 = arith.divf %381, %382 : vector<8x128xf32>
    %384 = vector.extract_strided_slice %377 {offsets = [0, 128], sizes = [8, 128], strides = [1, 1]} : vector<8x512xf32> to vector<8x128xf32>
    %385 = arith.negf %384 : vector<8x128xf32>
    %386 = math.exp %385 : vector<8x128xf32>
    %cst_115 = arith.constant 1.000000e+00 : f32
    %387 = vector.broadcast %cst_115 : f32 to vector<8x128xf32>
    %388 = arith.addf %387, %386 : vector<8x128xf32>
    %389 = arith.divf %387, %388 : vector<8x128xf32>
    %390 = vector.extract_strided_slice %377 {offsets = [0, 256], sizes = [8, 128], strides = [1, 1]} : vector<8x512xf32> to vector<8x128xf32>
    %391 = math.tanh %390 : vector<8x128xf32>
    %392 = vector.extract_strided_slice %377 {offsets = [0, 384], sizes = [8, 128], strides = [1, 1]} : vector<8x512xf32> to vector<8x128xf32>
    %393 = arith.negf %392 : vector<8x128xf32>
    %394 = math.exp %393 : vector<8x128xf32>
    %cst_116 = arith.constant 1.000000e+00 : f32
    %395 = vector.broadcast %cst_116 : f32 to vector<8x128xf32>
    %396 = arith.addf %395, %394 : vector<8x128xf32>
    %397 = arith.divf %395, %396 : vector<8x128xf32>
    %398 = arith.mulf %389, %367 : vector<8x128xf32>
    %399 = arith.mulf %383, %391 : vector<8x128xf32>
    %400 = arith.addf %398, %399 : vector<8x128xf32>
    %401 = math.tanh %400 : vector<8x128xf32>
    %402 = arith.mulf %397, %401 : vector<8x128xf32>
    %c3_i32_117 = arith.constant 3 : i32
    %c8_i32_118 = arith.constant 8 : i32
    %403 = arith.muli %c3_i32_117, %c8_i32_118 : i32
    %404 = tpu.assume_multiple %403, 8 : i32
    %405 = arith.index_cast %404 : i32 to index
    %c0_119 = arith.constant 0 : index
    %406 = vector.load %arg10[%405, %c0_119] : memref<64x512xf32, #tpu.memory_space<vmem>>, vector<8x512xf32>
    %407 = arith.truncf %402 : vector<8x128xf32> to vector<8x128xbf16>
    %c0_120 = arith.constant 0 : index
    %c0_121 = arith.constant 0 : index
    %408 = vector.load %arg5[%c0_120, %c0_121] : memref<128x512xbf16, #tpu.memory_space<vmem>>, vector<128x512xbf16>
    %cst_122 = arith.constant dense<0.000000e+00> : vector<8x512xf32>
    %409 = tpu.matmul %407, %408, %cst_122 {dimension_numbers = #tpu.dot_dimension_numbers<[1], [0], [0], [1], [0, 0, 1, 1], [], []>} : vector<8x128xbf16>, vector<128x512xbf16>, vector<8x512xf32> -> vector<8x512xf32>
    %410 = arith.addf %406, %409 : vector<8x512xf32>
    %411 = vector.extract_strided_slice %410 {offsets = [0, 0], sizes = [8, 128], strides = [1, 1]} : vector<8x512xf32> to vector<8x128xf32>
    %412 = arith.negf %411 : vector<8x128xf32>
    %413 = math.exp %412 : vector<8x128xf32>
    %cst_123 = arith.constant 1.000000e+00 : f32
    %414 = vector.broadcast %cst_123 : f32 to vector<8x128xf32>
    %415 = arith.addf %414, %413 : vector<8x128xf32>
    %416 = arith.divf %414, %415 : vector<8x128xf32>
    %417 = vector.extract_strided_slice %410 {offsets = [0, 128], sizes = [8, 128], strides = [1, 1]} : vector<8x512xf32> to vector<8x128xf32>
    %418 = arith.negf %417 : vector<8x128xf32>
    %419 = math.exp %418 : vector<8x128xf32>
    %cst_124 = arith.constant 1.000000e+00 : f32
    %420 = vector.broadcast %cst_124 : f32 to vector<8x128xf32>
    %421 = arith.addf %420, %419 : vector<8x128xf32>
    %422 = arith.divf %420, %421 : vector<8x128xf32>
    %423 = vector.extract_strided_slice %410 {offsets = [0, 256], sizes = [8, 128], strides = [1, 1]} : vector<8x512xf32> to vector<8x128xf32>
    %424 = math.tanh %423 : vector<8x128xf32>
    %425 = vector.extract_strided_slice %410 {offsets = [0, 384], sizes = [8, 128], strides = [1, 1]} : vector<8x512xf32> to vector<8x128xf32>
    %426 = arith.negf %425 : vector<8x128xf32>
    %427 = math.exp %426 : vector<8x128xf32>
    %cst_125 = arith.constant 1.000000e+00 : f32
    %428 = vector.broadcast %cst_125 : f32 to vector<8x128xf32>
    %429 = arith.addf %428, %427 : vector<8x128xf32>
    %430 = arith.divf %428, %429 : vector<8x128xf32>
    %431 = arith.mulf %422, %400 : vector<8x128xf32>
    %432 = arith.mulf %416, %424 : vector<8x128xf32>
    %433 = arith.addf %431, %432 : vector<8x128xf32>
    %434 = math.tanh %433 : vector<8x128xf32>
    %435 = arith.mulf %430, %434 : vector<8x128xf32>
    %c4_i32_126 = arith.constant 4 : i32
    %c8_i32_127 = arith.constant 8 : i32
    %436 = arith.muli %c4_i32_126, %c8_i32_127 : i32
    %437 = tpu.assume_multiple %436, 8 : i32
    %438 = arith.index_cast %437 : i32 to index
    %c0_128 = arith.constant 0 : index
    %439 = vector.load %arg10[%438, %c0_128] : memref<64x512xf32, #tpu.memory_space<vmem>>, vector<8x512xf32>
    %440 = arith.truncf %435 : vector<8x128xf32> to vector<8x128xbf16>
    %c0_129 = arith.constant 0 : index
    %c0_130 = arith.constant 0 : index
    %441 = vector.load %arg5[%c0_129, %c0_130] : memref<128x512xbf16, #tpu.memory_space<vmem>>, vector<128x512xbf16>
    %cst_131 = arith.constant dense<0.000000e+00> : vector<8x512xf32>
    %442 = tpu.matmul %440, %441, %cst_131 {dimension_numbers = #tpu.dot_dimension_numbers<[1], [0], [0], [1], [0, 0, 1, 1], [], []>} : vector<8x128xbf16>, vector<128x512xbf16>, vector<8x512xf32> -> vector<8x512xf32>
    %443 = arith.addf %439, %442 : vector<8x512xf32>
    %444 = vector.extract_strided_slice %443 {offsets = [0, 0], sizes = [8, 128], strides = [1, 1]} : vector<8x512xf32> to vector<8x128xf32>
    %445 = arith.negf %444 : vector<8x128xf32>
    %446 = math.exp %445 : vector<8x128xf32>
    %cst_132 = arith.constant 1.000000e+00 : f32
    %447 = vector.broadcast %cst_132 : f32 to vector<8x128xf32>
    %448 = arith.addf %447, %446 : vector<8x128xf32>
    %449 = arith.divf %447, %448 : vector<8x128xf32>
    %450 = vector.extract_strided_slice %443 {offsets = [0, 128], sizes = [8, 128], strides = [1, 1]} : vector<8x512xf32> to vector<8x128xf32>
    %451 = arith.negf %450 : vector<8x128xf32>
    %452 = math.exp %451 : vector<8x128xf32>
    %cst_133 = arith.constant 1.000000e+00 : f32
    %453 = vector.broadcast %cst_133 : f32 to vector<8x128xf32>
    %454 = arith.addf %453, %452 : vector<8x128xf32>
    %455 = arith.divf %453, %454 : vector<8x128xf32>
    %456 = vector.extract_strided_slice %443 {offsets = [0, 256], sizes = [8, 128], strides = [1, 1]} : vector<8x512xf32> to vector<8x128xf32>
    %457 = math.tanh %456 : vector<8x128xf32>
    %458 = vector.extract_strided_slice %443 {offsets = [0, 384], sizes = [8, 128], strides = [1, 1]} : vector<8x512xf32> to vector<8x128xf32>
    %459 = arith.negf %458 : vector<8x128xf32>
    %460 = math.exp %459 : vector<8x128xf32>
    %cst_134 = arith.constant 1.000000e+00 : f32
    %461 = vector.broadcast %cst_134 : f32 to vector<8x128xf32>
    %462 = arith.addf %461, %460 : vector<8x128xf32>
    %463 = arith.divf %461, %462 : vector<8x128xf32>
    %464 = arith.mulf %455, %433 : vector<8x128xf32>
    %465 = arith.mulf %449, %457 : vector<8x128xf32>
    %466 = arith.addf %464, %465 : vector<8x128xf32>
    %467 = math.tanh %466 : vector<8x128xf32>
    %468 = arith.mulf %463, %467 : vector<8x128xf32>
    %c5_i32_135 = arith.constant 5 : i32
    %c8_i32_136 = arith.constant 8 : i32
    %469 = arith.muli %c5_i32_135, %c8_i32_136 : i32
    %470 = tpu.assume_multiple %469, 8 : i32
    %471 = arith.index_cast %470 : i32 to index
    %c0_137 = arith.constant 0 : index
    %472 = vector.load %arg10[%471, %c0_137] : memref<64x512xf32, #tpu.memory_space<vmem>>, vector<8x512xf32>
    %473 = arith.truncf %468 : vector<8x128xf32> to vector<8x128xbf16>
    %c0_138 = arith.constant 0 : index
    %c0_139 = arith.constant 0 : index
    %474 = vector.load %arg5[%c0_138, %c0_139] : memref<128x512xbf16, #tpu.memory_space<vmem>>, vector<128x512xbf16>
    %cst_140 = arith.constant dense<0.000000e+00> : vector<8x512xf32>
    %475 = tpu.matmul %473, %474, %cst_140 {dimension_numbers = #tpu.dot_dimension_numbers<[1], [0], [0], [1], [0, 0, 1, 1], [], []>} : vector<8x128xbf16>, vector<128x512xbf16>, vector<8x512xf32> -> vector<8x512xf32>
    %476 = arith.addf %472, %475 : vector<8x512xf32>
    %477 = vector.extract_strided_slice %476 {offsets = [0, 0], sizes = [8, 128], strides = [1, 1]} : vector<8x512xf32> to vector<8x128xf32>
    %478 = arith.negf %477 : vector<8x128xf32>
    %479 = math.exp %478 : vector<8x128xf32>
    %cst_141 = arith.constant 1.000000e+00 : f32
    %480 = vector.broadcast %cst_141 : f32 to vector<8x128xf32>
    %481 = arith.addf %480, %479 : vector<8x128xf32>
    %482 = arith.divf %480, %481 : vector<8x128xf32>
    %483 = vector.extract_strided_slice %476 {offsets = [0, 128], sizes = [8, 128], strides = [1, 1]} : vector<8x512xf32> to vector<8x128xf32>
    %484 = arith.negf %483 : vector<8x128xf32>
    %485 = math.exp %484 : vector<8x128xf32>
    %cst_142 = arith.constant 1.000000e+00 : f32
    %486 = vector.broadcast %cst_142 : f32 to vector<8x128xf32>
    %487 = arith.addf %486, %485 : vector<8x128xf32>
    %488 = arith.divf %486, %487 : vector<8x128xf32>
    %489 = vector.extract_strided_slice %476 {offsets = [0, 256], sizes = [8, 128], strides = [1, 1]} : vector<8x512xf32> to vector<8x128xf32>
    %490 = math.tanh %489 : vector<8x128xf32>
    %491 = vector.extract_strided_slice %476 {offsets = [0, 384], sizes = [8, 128], strides = [1, 1]} : vector<8x512xf32> to vector<8x128xf32>
    %492 = arith.negf %491 : vector<8x128xf32>
    %493 = math.exp %492 : vector<8x128xf32>
    %cst_143 = arith.constant 1.000000e+00 : f32
    %494 = vector.broadcast %cst_143 : f32 to vector<8x128xf32>
    %495 = arith.addf %494, %493 : vector<8x128xf32>
    %496 = arith.divf %494, %495 : vector<8x128xf32>
    %497 = arith.mulf %488, %466 : vector<8x128xf32>
    %498 = arith.mulf %482, %490 : vector<8x128xf32>
    %499 = arith.addf %497, %498 : vector<8x128xf32>
    %500 = math.tanh %499 : vector<8x128xf32>
    %501 = arith.mulf %496, %500 : vector<8x128xf32>
    %c6_i32_144 = arith.constant 6 : i32
    %c8_i32_145 = arith.constant 8 : i32
    %502 = arith.muli %c6_i32_144, %c8_i32_145 : i32
    %503 = tpu.assume_multiple %502, 8 : i32
    %504 = arith.index_cast %503 : i32 to index
    %c0_146 = arith.constant 0 : index
    %505 = vector.load %arg10[%504, %c0_146] : memref<64x512xf32, #tpu.memory_space<vmem>>, vector<8x512xf32>
    %506 = arith.truncf %501 : vector<8x128xf32> to vector<8x128xbf16>
    %c0_147 = arith.constant 0 : index
    %c0_148 = arith.constant 0 : index
    %507 = vector.load %arg5[%c0_147, %c0_148] : memref<128x512xbf16, #tpu.memory_space<vmem>>, vector<128x512xbf16>
    %cst_149 = arith.constant dense<0.000000e+00> : vector<8x512xf32>
    %508 = tpu.matmul %506, %507, %cst_149 {dimension_numbers = #tpu.dot_dimension_numbers<[1], [0], [0], [1], [0, 0, 1, 1], [], []>} : vector<8x128xbf16>, vector<128x512xbf16>, vector<8x512xf32> -> vector<8x512xf32>
    %509 = arith.addf %505, %508 : vector<8x512xf32>
    %510 = vector.extract_strided_slice %509 {offsets = [0, 0], sizes = [8, 128], strides = [1, 1]} : vector<8x512xf32> to vector<8x128xf32>
    %511 = arith.negf %510 : vector<8x128xf32>
    %512 = math.exp %511 : vector<8x128xf32>
    %cst_150 = arith.constant 1.000000e+00 : f32
    %513 = vector.broadcast %cst_150 : f32 to vector<8x128xf32>
    %514 = arith.addf %513, %512 : vector<8x128xf32>
    %515 = arith.divf %513, %514 : vector<8x128xf32>
    %516 = vector.extract_strided_slice %509 {offsets = [0, 128], sizes = [8, 128], strides = [1, 1]} : vector<8x512xf32> to vector<8x128xf32>
    %517 = arith.negf %516 : vector<8x128xf32>
    %518 = math.exp %517 : vector<8x128xf32>
    %cst_151 = arith.constant 1.000000e+00 : f32
    %519 = vector.broadcast %cst_151 : f32 to vector<8x128xf32>
    %520 = arith.addf %519, %518 : vector<8x128xf32>
    %521 = arith.divf %519, %520 : vector<8x128xf32>
    %522 = vector.extract_strided_slice %509 {offsets = [0, 256], sizes = [8, 128], strides = [1, 1]} : vector<8x512xf32> to vector<8x128xf32>
    %523 = math.tanh %522 : vector<8x128xf32>
    %524 = vector.extract_strided_slice %509 {offsets = [0, 384], sizes = [8, 128], strides = [1, 1]} : vector<8x512xf32> to vector<8x128xf32>
    %525 = arith.negf %524 : vector<8x128xf32>
    %526 = math.exp %525 : vector<8x128xf32>
    %cst_152 = arith.constant 1.000000e+00 : f32
    %527 = vector.broadcast %cst_152 : f32 to vector<8x128xf32>
    %528 = arith.addf %527, %526 : vector<8x128xf32>
    %529 = arith.divf %527, %528 : vector<8x128xf32>
    %530 = arith.mulf %521, %499 : vector<8x128xf32>
    %531 = arith.mulf %515, %523 : vector<8x128xf32>
    %532 = arith.addf %530, %531 : vector<8x128xf32>
    %533 = math.tanh %532 : vector<8x128xf32>
    %534 = arith.mulf %529, %533 : vector<8x128xf32>
    %c7_i32_153 = arith.constant 7 : i32
    %c8_i32_154 = arith.constant 8 : i32
    %535 = arith.muli %c7_i32_153, %c8_i32_154 : i32
    %536 = tpu.assume_multiple %535, 8 : i32
    %537 = arith.index_cast %536 : i32 to index
    %c0_155 = arith.constant 0 : index
    %538 = vector.load %arg10[%537, %c0_155] : memref<64x512xf32, #tpu.memory_space<vmem>>, vector<8x512xf32>
    %539 = arith.truncf %534 : vector<8x128xf32> to vector<8x128xbf16>
    %c0_156 = arith.constant 0 : index
    %c0_157 = arith.constant 0 : index
    %540 = vector.load %arg5[%c0_156, %c0_157] : memref<128x512xbf16, #tpu.memory_space<vmem>>, vector<128x512xbf16>
    %cst_158 = arith.constant dense<0.000000e+00> : vector<8x512xf32>
    %541 = tpu.matmul %539, %540, %cst_158 {dimension_numbers = #tpu.dot_dimension_numbers<[1], [0], [0], [1], [0, 0, 1, 1], [], []>} : vector<8x128xbf16>, vector<128x512xbf16>, vector<8x512xf32> -> vector<8x512xf32>
    %542 = arith.addf %538, %541 : vector<8x512xf32>
    %543 = vector.extract_strided_slice %542 {offsets = [0, 0], sizes = [8, 128], strides = [1, 1]} : vector<8x512xf32> to vector<8x128xf32>
    %544 = arith.negf %543 : vector<8x128xf32>
    %545 = math.exp %544 : vector<8x128xf32>
    %cst_159 = arith.constant 1.000000e+00 : f32
    %546 = vector.broadcast %cst_159 : f32 to vector<8x128xf32>
    %547 = arith.addf %546, %545 : vector<8x128xf32>
    %548 = arith.divf %546, %547 : vector<8x128xf32>
    %549 = vector.extract_strided_slice %542 {offsets = [0, 128], sizes = [8, 128], strides = [1, 1]} : vector<8x512xf32> to vector<8x128xf32>
    %550 = arith.negf %549 : vector<8x128xf32>
    %551 = math.exp %550 : vector<8x128xf32>
    %cst_160 = arith.constant 1.000000e+00 : f32
    %552 = vector.broadcast %cst_160 : f32 to vector<8x128xf32>
    %553 = arith.addf %552, %551 : vector<8x128xf32>
    %554 = arith.divf %552, %553 : vector<8x128xf32>
    %555 = vector.extract_strided_slice %542 {offsets = [0, 256], sizes = [8, 128], strides = [1, 1]} : vector<8x512xf32> to vector<8x128xf32>
    %556 = math.tanh %555 : vector<8x128xf32>
    %557 = vector.extract_strided_slice %542 {offsets = [0, 384], sizes = [8, 128], strides = [1, 1]} : vector<8x512xf32> to vector<8x128xf32>
    %558 = arith.negf %557 : vector<8x128xf32>
    %559 = math.exp %558 : vector<8x128xf32>
    %cst_161 = arith.constant 1.000000e+00 : f32
    %560 = vector.broadcast %cst_161 : f32 to vector<8x128xf32>
    %561 = arith.addf %560, %559 : vector<8x128xf32>
    %562 = arith.divf %560, %561 : vector<8x128xf32>
    %563 = arith.mulf %554, %532 : vector<8x128xf32>
    %564 = arith.mulf %548, %556 : vector<8x128xf32>
    %565 = arith.addf %563, %564 : vector<8x128xf32>
    %566 = math.tanh %565 : vector<8x128xf32>
    %567 = arith.mulf %562, %566 : vector<8x128xf32>
    %c8_i32_162 = arith.constant 8 : i32
    %568 = arith.truncf %567 : vector<8x128xf32> to vector<8x128xbf16>
    %c0_163 = arith.constant 0 : index
    %c0_164 = arith.constant 0 : index
    %569 = vector.load %arg7[%c0_163, %c0_164] : memref<128x128xbf16, #tpu.memory_space<vmem>>, vector<128x128xbf16>
    %cst_165 = arith.constant dense<0.000000e+00> : vector<8x128xf32>
    %570 = tpu.matmul %568, %569, %cst_165 {dimension_numbers = #tpu.dot_dimension_numbers<[1], [0], [0], [1], [0, 0, 1, 1], [], []>} : vector<8x128xbf16>, vector<128x128xbf16>, vector<8x128xf32> -> vector<8x128xf32>
    %c0_166 = arith.constant 0 : index
    %c0_167 = arith.constant 0 : index
    %571 = vector.load %arg8[%c0_166, %c0_167] : memref<1x128xf32, #tpu.memory_space<vmem>>, vector<1x128xf32>
    %572 = vector.broadcast %571 : vector<1x128xf32> to vector<8x128xf32>
    %573 = arith.addf %570, %572 : vector<8x128xf32>
    %574 = arith.negf %573 : vector<8x128xf32>
    %575 = math.exp %574 : vector<8x128xf32>
    %cst_168 = arith.constant 1.000000e+00 : f32
    %576 = vector.broadcast %cst_168 : f32 to vector<8x128xf32>
    %577 = arith.addf %576, %575 : vector<8x128xf32>
    %578 = arith.divf %576, %577 : vector<8x128xf32>
    %c0_169 = arith.constant 0 : index
    %c0_170 = arith.constant 0 : index
    %579 = vector.load %arg9[%c0_169, %c0_170] : memref<8x128xf32, #tpu.memory_space<vmem>>, vector<8x128xf32>
    tpu.vector_store %arg9[%c0_169, %c0_170], %578 {strides = array<i32>} : memref<8x128xf32, #tpu.memory_space<vmem>>, vector<8x128xf32>,
    return
  }
}

</mosaic_0001>

<llo_original>
// kernel: mynet_forward.1
$region0: #{mynet_forward.1}
  #allocation0 [shape = 'u32[]', space=smem, size = 0x4, offset = 0x4, fixed_abs, tag = 'smem constant byte address 0x4 - core index']
  #allocation1 [shape = 'u32[144,128]{1,0:T(1,128)}', space=vmem, size = 0x12000, scoped, tag = 'internal scratch']
  #allocation2 [shape = 'f32[64,512]{1,0:T(8,128)}', space=vmem, size = 0x20000, scoped, tag = 'scratch operand']
  #allocation3 [shape = 'bf16[64,128]{1,0:T(8,128)(2,1)}', space=vmem, size = 0x4000, scoped, tag = 'scratch operand']
  %s0 = inlined_call_operand.vmem [shape: bf16[64,128], index: 0, kind: input, shape index: {}]
  %s1 = inlined_call_operand.vmem [shape: bf16[128,512], index: 1, kind: input, shape index: {}]
  %s2 = inlined_call_operand.vmem [shape: bf16[128,512], index: 2, kind: input, shape index: {}]
  %s3 = inlined_call_operand.vmem [shape: f32[1,512], index: 3, kind: input, shape index: {}]
  %s4 = inlined_call_operand.vmem [shape: bf16[128,512], index: 4, kind: input, shape index: {}]
  %s5 = inlined_call_operand.vmem [shape: bf16[128,512], index: 5, kind: input, shape index: {}]
  %s6 = inlined_call_operand.vmem [shape: f32[1,512], index: 6, kind: input, shape index: {}]
  %s7 = inlined_call_operand.vmem [shape: bf16[128,128], index: 7, kind: input, shape index: {}]
  %s8 = inlined_call_operand.vmem [shape: f32[1,128], index: 8, kind: input, shape index: {}]
  %s9 = inlined_call_operand.vmem [shape: f32[8,128], index: 9, kind: output, shape index: {}]
  %s10 = sld [smem:[#allocation0]]
  $region46: #{mynet_forward.1} parent=0
    _
  %s12 = ssub.s32 1, %s10
  %s13 = scalar_select 0, %s12, %s10
  // Predicated region
  $region2: #{mynet_forward.1} parent=0 // pred_check
    _
  $region3: #{mynet_forward.1} parent=0 // pred_check_branch
    %15 = sbr.rel (0) target = $region5
  $region4: #{mynet_forward.1} parent=0 // pred_region
    _
  $region5: #{mynet_forward.1} parent=0 // pred_fallthru
    _
  // Predicated region
  $region6: #{mynet_forward.1} parent=0 // pred_check
    _
  $region7: #{mynet_forward.1} parent=0 // pred_check_branch
    %17 = sbr.rel (0) target = $region9
  $region8: #{mynet_forward.1} parent=0 // pred_region
    _
  $region9: #{mynet_forward.1} parent=0 // pred_fallthru
    _
  // Predicated region
  $region10: #{mynet_forward.1} parent=0 // pred_check
    _
  $region11: #{mynet_forward.1} parent=0 // pred_check_branch
    %19 = sbr.rel (0) target = $region13
  $region12: #{mynet_forward.1} parent=0 // pred_region
    _
  $region13: #{mynet_forward.1} parent=0 // pred_fallthru
    _
  // Predicated region
  $region14: #{mynet_forward.1} parent=0 // pred_check
    _
  $region15: #{mynet_forward.1} parent=0 // pred_check_branch
    %21 = sbr.rel (0) target = $region17
  $region16: #{mynet_forward.1} parent=0 // pred_region
    _
  $region17: #{mynet_forward.1} parent=0 // pred_fallthru
    _
  // Predicated region
  $region18: #{mynet_forward.1} parent=0 // pred_check
    _
  $region19: #{mynet_forward.1} parent=0 // pred_check_branch
    %23 = sbr.rel (0) target = $region21
  $region20: #{mynet_forward.1} parent=0 // pred_region
    _
  $region21: #{mynet_forward.1} parent=0 // pred_fallthru
    _
  // Predicated region
  $region22: #{mynet_forward.1} parent=0 // pred_check
    _
  $region23: #{mynet_forward.1} parent=0 // pred_check_branch
    %25 = sbr.rel (0) target = $region25
  $region24: #{mynet_forward.1} parent=0 // pred_region
    _
  $region25: #{mynet_forward.1} parent=0 // pred_fallthru
    _
  // Predicated region
  $region26: #{mynet_forward.1} parent=0 // pred_check
    _
  $region27: #{mynet_forward.1} parent=0 // pred_check_branch
    %27 = sbr.rel (0) target = $region29
  $region28: #{mynet_forward.1} parent=0 // pred_region
    _
  $region29: #{mynet_forward.1} parent=0 // pred_fallthru
    _
  // Predicated region
  $region30: #{mynet_forward.1} parent=0 // pred_check
    _
  $region31: #{mynet_forward.1} parent=0 // pred_check_branch
    %29 = sbr.rel (0) target = $region33
  $region32: #{mynet_forward.1} parent=0 // pred_region
    _
  $region33: #{mynet_forward.1} parent=0 // pred_fallthru
    _
  // Predicated region
  $region34: #{mynet_forward.1} parent=0 // pred_check
    _
  $region35: #{mynet_forward.1} parent=0 // pred_check_branch
    %31 = sbr.rel (0) target = $region37
  $region36: #{mynet_forward.1} parent=0 // pred_region
    _
  $region37: #{mynet_forward.1} parent=0 // pred_fallthru
    _
  %v33 = vld [vmem:[%s0] sm:$0xf]
  %v34 = vld [vmem:[%s0 + $0x4] sm:$0xf]
  %v35 = vld [vmem:[%s0 + $0x8] sm:$0xf]
  %v36 = vld [vmem:[%s0 + $0xc] sm:$0xf]
  %v37 = vld [vmem:[%s0 + $0x10] sm:$0xf]
  %v38 = vld [vmem:[%s0 + $0x14] sm:$0xf]
  %v39 = vld [vmem:[%s0 + $0x18] sm:$0xf]
  %v40 = vld [vmem:[%s0 + $0x1c] sm:$0xf]
  %v41 = vld [vmem:[%s1] sm:$0xff]
  %v42 = vld [vmem:[%s1 + $0x8] sm:$0xff]
  %v43 = vld [vmem:[%s1 + $0x10] sm:$0xff]
  %v44 = vld [vmem:[%s1 + $0x18] sm:$0xff]
  %v45 = vld [vmem:[%s1 + $0x20] sm:$0xff]
  %v46 = vld [vmem:[%s1 + $0x28] sm:$0xff]
  %v47 = vld [vmem:[%s1 + $0x30] sm:$0xff]
  %v48 = vld [vmem:[%s1 + $0x38] sm:$0xff]
  %v49 = vld [vmem:[%s1 + $0x40] sm:$0xff]
  %v50 = vld [vmem:[%s1 + $0x48] sm:$0xff]
  %v51 = vld [vmem:[%s1 + $0x50] sm:$0xff]
  %v52 = vld [vmem:[%s1 + $0x58] sm:$0xff]
  %v53 = vld [vmem:[%s1 + $0x60] sm:$0xff]
  %v54 = vld [vmem:[%s1 + $0x68] sm:$0xff]
  %v55 = vld [vmem:[%s1 + $0x70] sm:$0xff]
  %v56 = vld [vmem:[%s1 + $0x78] sm:$0xff]
  %v57 = vld [vmem:[%s1 + $0x80] sm:$0xff]
  %v58 = vld [vmem:[%s1 + $0x88] sm:$0xff]
  %v59 = vld [vmem:[%s1 + $0x90] sm:$0xff]
  %v60 = vld [vmem:[%s1 + $0x98] sm:$0xff]
  %v61 = vld [vmem:[%s1 + $0xa0] sm:$0xff]
  %v62 = vld [vmem:[%s1 + $0xa8] sm:$0xff]
  %v63 = vld [vmem:[%s1 + $0xb0] sm:$0xff]
  %v64 = vld [vmem:[%s1 + $0xb8] sm:$0xff]
  %v65 = vld [vmem:[%s1 + $0xc0] sm:$0xff]
  %v66 = vld [vmem:[%s1 + $0xc8] sm:$0xff]
  %v67 = vld [vmem:[%s1 + $0xd0] sm:$0xff]
  %v68 = vld [vmem:[%s1 + $0xd8] sm:$0xff]
  %v69 = vld [vmem:[%s1 + $0xe0] sm:$0xff]
  %v70 = vld [vmem:[%s1 + $0xe8] sm:$0xff]
  %v71 = vld [vmem:[%s1 + $0xf0] sm:$0xff]
  %v72 = vld [vmem:[%s1 + $0xf8] sm:$0xff]
  %v73 = vld [vmem:[%s3] sm:$0xf]
  %v75 = vlaneseq
  %v76 = vshrl.u32 %v75, 7
  %v77 = vsub.s32 0, %v76
  %v78 = vrot.slane %v73, %v77
  %v79 = vlaneseq
  %v80 = vshrl.u32 %v79, 7
  %v81 = vsub.s32 1, %v80
  %v82 = vrot.slane %v73, %v81
  %v83 = vlaneseq
  %v84 = vshrl.u32 %v83, 7
  %v85 = vsub.s32 2, %v84
  %v86 = vrot.slane %v73, %v85
  %v87 = vlaneseq
  %v88 = vshrl.u32 %v87, 7
  %v89 = vsub.s32 3, %v88
  %v90 = vrot.slane %v73, %v89
  %v103 = vunpack.c.l.b16 %v33
  %v104 = vunpack.c.l.b16 %v34
  %v105 = vunpack.c.l.b16 %v35
  %v106 = vunpack.c.l.b16 %v36
  %v107 = vunpack.c.l.b16 %v37
  %v108 = vunpack.c.l.b16 %v38
  %v109 = vunpack.c.l.b16 %v39
  %v110 = vunpack.c.l.b16 %v40
  %v111 = vpack.c.b16 %v104, %v103
  %v112 = vpack.c.b16 %v106, %v105
  %v113 = vpack.c.b16 %v108, %v107
  %v114 = vpack.c.b16 %v110, %v109
  %v151 = vunpack.c.l.b16 %v41
  %v152 = vunpack.c.h.b16 %v41
  %v153 = vunpack.c.l.b16 %v42
  %v154 = vunpack.c.h.b16 %v42
  %v155 = vunpack.c.l.b16 %v43
  %v156 = vunpack.c.h.b16 %v43
  %v157 = vunpack.c.l.b16 %v44
  %v158 = vunpack.c.h.b16 %v44
  %v159 = vunpack.c.l.b16 %v45
  %v160 = vunpack.c.h.b16 %v45
  %v161 = vunpack.c.l.b16 %v46
  %v162 = vunpack.c.h.b16 %v46
  %v163 = vunpack.c.l.b16 %v47
  %v164 = vunpack.c.h.b16 %v47
  %v165 = vunpack.c.l.b16 %v48
  %v166 = vunpack.c.h.b16 %v48
  %v167 = vunpack.c.l.b16 %v49
  %v168 = vunpack.c.h.b16 %v49
  %v169 = vunpack.c.l.b16 %v50
  %v170 = vunpack.c.h.b16 %v50
  %v171 = vunpack.c.l.b16 %v51
  %v172 = vunpack.c.h.b16 %v51
  %v173 = vunpack.c.l.b16 %v52
  %v174 = vunpack.c.h.b16 %v52
  %v175 = vunpack.c.l.b16 %v53
  %v176 = vunpack.c.h.b16 %v53
  %v177 = vunpack.c.l.b16 %v54
  %v178 = vunpack.c.h.b16 %v54
  %v179 = vunpack.c.l.b16 %v55
  %v180 = vunpack.c.h.b16 %v55
  %v181 = vunpack.c.l.b16 %v56
  %v182 = vunpack.c.h.b16 %v56
  %v183 = vunpack.c.l.b16 %v57
  %v184 = vunpack.c.h.b16 %v57
  %v185 = vunpack.c.l.b16 %v58
  %v186 = vunpack.c.h.b16 %v58
  %v187 = vunpack.c.l.b16 %v59
  %v188 = vunpack.c.h.b16 %v59
  %v189 = vunpack.c.l.b16 %v60
  %v190 = vunpack.c.h.b16 %v60
  %v191 = vunpack.c.l.b16 %v61
  %v192 = vunpack.c.h.b16 %v61
  %v193 = vunpack.c.l.b16 %v62
  %v194 = vunpack.c.h.b16 %v62
  %v195 = vunpack.c.l.b16 %v63
  %v196 = vunpack.c.h.b16 %v63
  %v197 = vunpack.c.l.b16 %v64
  %v198 = vunpack.c.h.b16 %v64
  %v199 = vunpack.c.l.b16 %v65
  %v200 = vunpack.c.h.b16 %v65
  %v201 = vunpack.c.l.b16 %v66
  %v202 = vunpack.c.h.b16 %v66
  %v203 = vunpack.c.l.b16 %v67
  %v204 = vunpack.c.h.b16 %v67
  %v205 = vunpack.c.l.b16 %v68
  %v206 = vunpack.c.h.b16 %v68
  %v207 = vunpack.c.l.b16 %v69
  %v208 = vunpack.c.h.b16 %v69
  %v209 = vunpack.c.l.b16 %v70
  %v210 = vunpack.c.h.b16 %v70
  %v211 = vunpack.c.l.b16 %v71
  %v212 = vunpack.c.h.b16 %v71
  %v213 = vunpack.c.l.b16 %v72
  %v214 = vunpack.c.h.b16 %v72
  %v215 = vpack.c.b16 %v155, %v151
  %v216 = vpack.c.b16 %v156, %v152
  %v217 = vpack.c.b16 %v157, %v153
  %v218 = vpack.c.b16 %v158, %v154
  %v219 = vpack.c.b16 %v163, %v159
  %v220 = vpack.c.b16 %v164, %v160
  %v221 = vpack.c.b16 %v165, %v161
  %v222 = vpack.c.b16 %v166, %v162
  %v223 = vpack.c.b16 %v171, %v167
  %v224 = vpack.c.b16 %v172, %v168
  %v225 = vpack.c.b16 %v173, %v169
  %v226 = vpack.c.b16 %v174, %v170
  %v227 = vpack.c.b16 %v179, %v175
  %v228 = vpack.c.b16 %v180, %v176
  %v229 = vpack.c.b16 %v181, %v177
  %v230 = vpack.c.b16 %v182, %v178
  %v231 = vpack.c.b16 %v187, %v183
  %v232 = vpack.c.b16 %v188, %v184
  %v233 = vpack.c.b16 %v189, %v185
  %v234 = vpack.c.b16 %v190, %v186
  %v235 = vpack.c.b16 %v195, %v191
  %v236 = vpack.c.b16 %v196, %v192
  %v237 = vpack.c.b16 %v197, %v193
  %v238 = vpack.c.b16 %v198, %v194
  %v239 = vpack.c.b16 %v203, %v199
  %v240 = vpack.c.b16 %v204, %v200
  %v241 = vpack.c.b16 %v205, %v201
  %v242 = vpack.c.b16 %v206, %v202
  %v243 = vpack.c.b16 %v211, %v207
  %v244 = vpack.c.b16 %v212, %v208
  %v245 = vpack.c.b16 %v213, %v209
  %v246 = vpack.c.b16 %v214, %v210
  %279 = vmatprep.subr.bf16.mxu0 %v244
  %280 = vmatpush1.bf16.msra.mxu0 %v243
  %281 = vmatprep.subr.bf16.mxu0 %v240
  %282 = vmatpush1.bf16.msra.mxu0 %v239
  %283 = vmatprep.subr.bf16.mxu0 %v236
  %284 = vmatpush1.bf16.msra.mxu0 %v235
  %285 = vmatprep.subr.bf16.mxu0 %v232
  %286 = vmatpush1.bf16.msra.mxu0 %v231
  %287 = vmatprep.subr.bf16.mxu0 %v228
  %288 = vmatpush1.bf16.msra.mxu0 %v227
  %289 = vmatprep.subr.bf16.mxu0 %v224
  %290 = vmatpush1.bf16.msra.mxu0 %v223
  %291 = vmatprep.subr.bf16.mxu0 %v220
  %292 = vmatpush1.bf16.msra.mxu0 %v219
  %293 = vmatprep.subr.bf16.mxu0 %v216
  %294 = vmatpush1.bf16.msra.mxu0 %v215
  %295 = vmatprep.subr.bf16.mxu0 0
  %296 = vmatpush2.bf16.msra.mxu0 0
  %297 = vmatprep.subr.bf16.mxu0 0
  %298 = vmatpush2.bf16.msra.mxu0 0
  %299 = vmatprep.subr.bf16.mxu0 0
  %300 = vmatpush2.bf16.msra.mxu0 0
  %301 = vmatprep.subr.bf16.mxu0 0
  %302 = vmatpush2.bf16.msra.mxu0 0
  %303 = vmatprep.subr.bf16.mxu0 0
  %304 = vmatpush2.bf16.msra.mxu0 0
  %305 = vmatprep.subr.bf16.mxu0 0
  %306 = vmatpush2.bf16.msra.mxu0 0
  %307 = vmatprep.subr.bf16.mxu0 0
  %308 = vmatpush2.bf16.msra.mxu0 0
  %309 = vmatprep.subr.bf16.mxu0 0
  %310 = vmatpush2.bf16.msra.mxu0 0
  %311 = vmatprep.mubr.bf16.mxu0 0
  %312 = vmatmul.mubr.bf16.gmra.mxu0 %v111
  %v313 = vpop.f32.mrf.mxu0
  %v314 = vadd.f32 %v78, %v313
  %v315 = vpop.f32.mrf.mxu0
  %v316 = vadd.f32 %v82, %v315
  %v317 = vpop.f32.mrf.mxu0
  %v318 = vadd.f32 %v78, %v317
  %v319 = vpop.f32.mrf.mxu0
  %v320 = vadd.f32 %v82, %v319
  %321 = vmatprep.mubr.bf16.mxu0 0
  %322 = vmatmul.mubr.bf16.gmra.mxu0 %v112
  %v323 = vpop.f32.mrf.mxu0
  %v324 = vadd.f32 %v78, %v323
  %v325 = vpop.f32.mrf.mxu0
  %v326 = vadd.f32 %v82, %v325
  %v327 = vpop.f32.mrf.mxu0
  %v328 = vadd.f32 %v78, %v327
  %v329 = vpop.f32.mrf.mxu0
  %v330 = vadd.f32 %v82, %v329
  %331 = vmatprep.mubr.bf16.mxu0 0
  %332 = vmatmul.mubr.bf16.gmra.mxu0 %v113
  %v333 = vpop.f32.mrf.mxu0
  %v334 = vadd.f32 %v78, %v333
  %v335 = vpop.f32.mrf.mxu0
  %v336 = vadd.f32 %v82, %v335
  %v337 = vpop.f32.mrf.mxu0
  %v338 = vadd.f32 %v78, %v337
  %v339 = vpop.f32.mrf.mxu0
  %v340 = vadd.f32 %v82, %v339
  %341 = vmatprep.mubr.bf16.mxu0 0
  %342 = vmatmul.mubr.bf16.gmra.mxu0 %v114
  %v343 = vpop.f32.mrf.mxu0
  %v344 = vadd.f32 %v78, %v343
  %v345 = vpop.f32.mrf.mxu0
  %v346 = vadd.f32 %v82, %v345
  %v347 = vpop.f32.mrf.mxu0
  %v348 = vadd.f32 %v78, %v347
  %v349 = vpop.f32.mrf.mxu0
  %v350 = vadd.f32 %v82, %v349
  %351 = vdwg.mxu0
  %352 = vmatprep.subr.bf16.mxu0 %v246
  %353 = vmatpush1.bf16.msra.mxu0 %v245
  %354 = vmatprep.subr.bf16.mxu0 %v242
  %355 = vmatpush1.bf16.msra.mxu0 %v241
  %356 = vmatprep.subr.bf16.mxu0 %v238
  %357 = vmatpush1.bf16.msra.mxu0 %v237
  %358 = vmatprep.subr.bf16.mxu0 %v234
  %359 = vmatpush1.bf16.msra.mxu0 %v233
  %360 = vmatprep.subr.bf16.mxu0 %v230
  %361 = vmatpush1.bf16.msra.mxu0 %v229
  %362 = vmatprep.subr.bf16.mxu0 %v226
  %363 = vmatpush1.bf16.msra.mxu0 %v225
  %364 = vmatprep.subr.bf16.mxu0 %v222
  %365 = vmatpush1.bf16.msra.mxu0 %v221
  %366 = vmatprep.subr.bf16.mxu0 %v218
  %367 = vmatpush1.bf16.msra.mxu0 %v217
  %368 = vmatprep.subr.bf16.mxu0 0
  %369 = vmatpush2.bf16.msra.mxu0 0
  %370 = vmatprep.subr.bf16.mxu0 0
  %371 = vmatpush2.bf16.msra.mxu0 0
  %372 = vmatprep.subr.bf16.mxu0 0
  %373 = vmatpush2.bf16.msra.mxu0 0
  %374 = vmatprep.subr.bf16.mxu0 0
  %375 = vmatpush2.bf16.msra.mxu0 0
  %376 = vmatprep.subr.bf16.mxu0 0
  %377 = vmatpush2.bf16.msra.mxu0 0
  %378 = vmatprep.subr.bf16.mxu0 0
  %379 = vmatpush2.bf16.msra.mxu0 0
  %380 = vmatprep.subr.bf16.mxu0 0
  %381 = vmatpush2.bf16.msra.mxu0 0
  %382 = vmatprep.subr.bf16.mxu0 0
  %383 = vmatpush2.bf16.msra.mxu0 0
  %384 = vmatprep.mubr.bf16.mxu0 0
  %385 = vmatmul.mubr.bf16.gmra.mxu0 %v111
  %v386 = vpop.f32.mrf.mxu0
  %v387 = vadd.f32 %v86, %v386
  %v388 = vpop.f32.mrf.mxu0
  %v389 = vadd.f32 %v90, %v388
  %v390 = vpop.f32.mrf.mxu0
  %v391 = vadd.f32 %v86, %v390
  %v392 = vpop.f32.mrf.mxu0
  %v393 = vadd.f32 %v90, %v392
  %394 = vmatprep.mubr.bf16.mxu0 0
  %395 = vmatmul.mubr.bf16.gmra.mxu0 %v112
  %v396 = vpop.f32.mrf.mxu0
  %v397 = vadd.f32 %v86, %v396
  %v398 = vpop.f32.mrf.mxu0
  %v399 = vadd.f32 %v90, %v398
  %v400 = vpop.f32.mrf.mxu0
  %v401 = vadd.f32 %v86, %v400
  %v402 = vpop.f32.mrf.mxu0
  %v403 = vadd.f32 %v90, %v402
  %404 = vmatprep.mubr.bf16.mxu0 0
  %405 = vmatmul.mubr.bf16.gmra.mxu0 %v113
  %v406 = vpop.f32.mrf.mxu0
  %v407 = vadd.f32 %v86, %v406
  %v408 = vpop.f32.mrf.mxu0
  %v409 = vadd.f32 %v90, %v408
  %v410 = vpop.f32.mrf.mxu0
  %v411 = vadd.f32 %v86, %v410
  %v412 = vpop.f32.mrf.mxu0
  %v413 = vadd.f32 %v90, %v412
  %414 = vmatprep.mubr.bf16.mxu0 0
  %415 = vmatmul.mubr.bf16.gmra.mxu0 %v114
  %v416 = vpop.f32.mrf.mxu0
  %v417 = vadd.f32 %v86, %v416
  %v418 = vpop.f32.mrf.mxu0
  %v419 = vadd.f32 %v90, %v418
  %v420 = vpop.f32.mrf.mxu0
  %v421 = vadd.f32 %v86, %v420
  %v422 = vpop.f32.mrf.mxu0
  %v423 = vadd.f32 %v90, %v422
  %424 = vdwg.mxu0
  %425 = vst [vmem:[#allocation2] sm:$0xff] %v314
  %426 = vst [vmem:[#allocation2 + $0x8] sm:$0xff] %v316
  %427 = vst [vmem:[#allocation2 + $0x10] sm:$0xff] %v387
  %428 = vst [vmem:[#allocation2 + $0x18] sm:$0xff] %v389
  %429 = vst [vmem:[#allocation2 + $0x20] sm:$0xff] %v318
  %430 = vst [vmem:[#allocation2 + $0x28] sm:$0xff] %v320
  %431 = vst [vmem:[#allocation2 + $0x30] sm:$0xff] %v391
  %432 = vst [vmem:[#allocation2 + $0x38] sm:$0xff] %v393
  %433 = vst [vmem:[#allocation2 + $0x40] sm:$0xff] %v324
  %434 = vst [vmem:[#allocation2 + $0x48] sm:$0xff] %v326
  %435 = vst [vmem:[#allocation2 + $0x50] sm:$0xff] %v397
  %436 = vst [vmem:[#allocation2 + $0x58] sm:$0xff] %v399
  %437 = vst [vmem:[#allocation2 + $0x60] sm:$0xff] %v328
  %438 = vst [vmem:[#allocation2 + $0x68] sm:$0xff] %v330
  %439 = vst [vmem:[#allocation2 + $0x70] sm:$0xff] %v401
  %440 = vst [vmem:[#allocation2 + $0x78] sm:$0xff] %v403
  %441 = vst [vmem:[#allocation2 + $0x80] sm:$0xff] %v334
  %442 = vst [vmem:[#allocation2 + $0x88] sm:$0xff] %v336
  %443 = vst [vmem:[#allocation2 + $0x90] sm:$0xff] %v407
  %444 = vst [vmem:[#allocation2 + $0x98] sm:$0xff] %v409
  %445 = vst [vmem:[#allocation2 + $0xa0] sm:$0xff] %v338
  %446 = vst [vmem:[#allocation2 + $0xa8] sm:$0xff] %v340
  %447 = vst [vmem:[#allocation2 + $0xb0] sm:$0xff] %v411
  %448 = vst [vmem:[#allocation2 + $0xb8] sm:$0xff] %v413
  %449 = vst [vmem:[#allocation2 + $0xc0] sm:$0xff] %v344
  %450 = vst [vmem:[#allocation2 + $0xc8] sm:$0xff] %v346
  %451 = vst [vmem:[#allocation2 + $0xd0] sm:$0xff] %v417
  %452 = vst [vmem:[#allocation2 + $0xd8] sm:$0xff] %v419
  %453 = vst [vmem:[#allocation2 + $0xe0] sm:$0xff] %v348
  %454 = vst [vmem:[#allocation2 + $0xe8] sm:$0xff] %v350
  %455 = vst [vmem:[#allocation2 + $0xf0] sm:$0xff] %v421
  %456 = vst [vmem:[#allocation2 + $0xf8] sm:$0xff] %v423
  %s457 = smul.u32 0, 4
  %s458 = smul.addr %s457, 8
  %s459 = scalar_lea.vmem [#allocation2], %s458
  %v460 = vld [vmem:[%s459] sm:$0xff]
  %v461 = vld [vmem:[%s459 + $0x8] sm:$0xff]
  %v462 = vld [vmem:[%s459 + $0x10] sm:$0xff]
  %v463 = vld [vmem:[%s459 + $0x18] sm:$0xff]
  %v464 = vld [vmem:[%s2] sm:$0xff]
  %v465 = vld [vmem:[%s2 + $0x8] sm:$0xff]
  %v466 = vld [vmem:[%s2 + $0x10] sm:$0xff]
  %v467 = vld [vmem:[%s2 + $0x18] sm:$0xff]
  %v468 = vld [vmem:[%s2 + $0x20] sm:$0xff]
  %v469 = vld [vmem:[%s2 + $0x28] sm:$0xff]
  %v470 = vld [vmem:[%s2 + $0x30] sm:$0xff]
  %v471 = vld [vmem:[%s2 + $0x38] sm:$0xff]
  %v472 = vld [vmem:[%s2 + $0x40] sm:$0xff]
  %v473 = vld [vmem:[%s2 + $0x48] sm:$0xff]
  %v474 = vld [vmem:[%s2 + $0x50] sm:$0xff]
  %v475 = vld [vmem:[%s2 + $0x58] sm:$0xff]
  %v476 = vld [vmem:[%s2 + $0x60] sm:$0xff]
  %v477 = vld [vmem:[%s2 + $0x68] sm:$0xff]
  %v478 = vld [vmem:[%s2 + $0x70] sm:$0xff]
  %v479 = vld [vmem:[%s2 + $0x78] sm:$0xff]
  %v480 = vld [vmem:[%s2 + $0x80] sm:$0xff]
  %v481 = vld [vmem:[%s2 + $0x88] sm:$0xff]
  %v482 = vld [vmem:[%s2 + $0x90] sm:$0xff]
  %v483 = vld [vmem:[%s2 + $0x98] sm:$0xff]
  %v484 = vld [vmem:[%s2 + $0xa0] sm:$0xff]
  %v485 = vld [vmem:[%s2 + $0xa8] sm:$0xff]
  %v486 = vld [vmem:[%s2 + $0xb0] sm:$0xff]
  %v487 = vld [vmem:[%s2 + $0xb8] sm:$0xff]
  %v488 = vld [vmem:[%s2 + $0xc0] sm:$0xff]
  %v489 = vld [vmem:[%s2 + $0xc8] sm:$0xff]
  %v490 = vld [vmem:[%s2 + $0xd0] sm:$0xff]
  %v491 = vld [vmem:[%s2 + $0xd8] sm:$0xff]
  %v492 = vld [vmem:[%s2 + $0xe0] sm:$0xff]
  %v493 = vld [vmem:[%s2 + $0xe8] sm:$0xff]
  %v494 = vld [vmem:[%s2 + $0xf0] sm:$0xff]
  %v495 = vld [vmem:[%s2 + $0xf8] sm:$0xff]
  %v528 = vunpack.c.l.b16 %v464
  %v529 = vunpack.c.h.b16 %v464
  %v530 = vunpack.c.l.b16 %v465
  %v531 = vunpack.c.h.b16 %v465
  %v532 = vunpack.c.l.b16 %v466
  %v533 = vunpack.c.h.b16 %v466
  %v534 = vunpack.c.l.b16 %v467
  %v535 = vunpack.c.h.b16 %v467
  %v536 = vunpack.c.l.b16 %v468
  %v537 = vunpack.c.h.b16 %v468
  %v538 = vunpack.c.l.b16 %v469
  %v539 = vunpack.c.h.b16 %v469
  %v540 = vunpack.c.l.b16 %v470
  %v541 = vunpack.c.h.b16 %v470
  %v542 = vunpack.c.l.b16 %v471
  %v543 = vunpack.c.h.b16 %v471
  %v544 = vunpack.c.l.b16 %v472
  %v545 = vunpack.c.h.b16 %v472
  %v546 = vunpack.c.l.b16 %v473
  %v547 = vunpack.c.h.b16 %v473
  %v548 = vunpack.c.l.b16 %v474
  %v549 = vunpack.c.h.b16 %v474
  %v550 = vunpack.c.l.b16 %v475
  %v551 = vunpack.c.h.b16 %v475
  %v552 = vunpack.c.l.b16 %v476
  %v553 = vunpack.c.h.b16 %v476
  %v554 = vunpack.c.l.b16 %v477
  %v555 = vunpack.c.h.b16 %v477
  %v556 = vunpack.c.l.b16 %v478
  %v557 = vunpack.c.h.b16 %v478
  %v558 = vunpack.c.l.b16 %v479
  %v559 = vunpack.c.h.b16 %v479
  %v560 = vunpack.c.l.b16 %v480
  %v561 = vunpack.c.h.b16 %v480
  %v562 = vunpack.c.l.b16 %v481
  %v563 = vunpack.c.h.b16 %v481
  %v564 = vunpack.c.l.b16 %v482
  %v565 = vunpack.c.h.b16 %v482
  %v566 = vunpack.c.l.b16 %v483
  %v567 = vunpack.c.h.b16 %v483
  %v568 = vunpack.c.l.b16 %v484
  %v569 = vunpack.c.h.b16 %v484
  %v570 = vunpack.c.l.b16 %v485
  %v571 = vunpack.c.h.b16 %v485
  %v572 = vunpack.c.l.b16 %v486
  %v573 = vunpack.c.h.b16 %v486
  %v574 = vunpack.c.l.b16 %v487
  %v575 = vunpack.c.h.b16 %v487
  %v576 = vunpack.c.l.b16 %v488
  %v577 = vunpack.c.h.b16 %v488
  %v578 = vunpack.c.l.b16 %v489
  %v579 = vunpack.c.h.b16 %v489
  %v580 = vunpack.c.l.b16 %v490
  %v581 = vunpack.c.h.b16 %v490
  %v582 = vunpack.c.l.b16 %v491
  %v583 = vunpack.c.h.b16 %v491
  %v584 = vunpack.c.l.b16 %v492
  %v585 = vunpack.c.h.b16 %v492
  %v586 = vunpack.c.l.b16 %v493
  %v587 = vunpack.c.h.b16 %v493
  %v588 = vunpack.c.l.b16 %v494
  %v589 = vunpack.c.h.b16 %v494
  %v590 = vunpack.c.l.b16 %v495
  %v591 = vunpack.c.h.b16 %v495
  %v592 = vpack.c.b16 %v532, %v528
  %v593 = vpack.c.b16 %v533, %v529
  %v594 = vpack.c.b16 %v534, %v530
  %v595 = vpack.c.b16 %v535, %v531
  %v596 = vpack.c.b16 %v540, %v536
  %v597 = vpack.c.b16 %v541, %v537
  %v598 = vpack.c.b16 %v542, %v538
  %v599 = vpack.c.b16 %v543, %v539
  %v600 = vpack.c.b16 %v548, %v544
  %v601 = vpack.c.b16 %v549, %v545
  %v602 = vpack.c.b16 %v550, %v546
  %v603 = vpack.c.b16 %v551, %v547
  %v604 = vpack.c.b16 %v556, %v552
  %v605 = vpack.c.b16 %v557, %v553
  %v606 = vpack.c.b16 %v558, %v554
  %v607 = vpack.c.b16 %v559, %v555
  %v608 = vpack.c.b16 %v564, %v560
  %v609 = vpack.c.b16 %v565, %v561
  %v610 = vpack.c.b16 %v566, %v562
  %v611 = vpack.c.b16 %v567, %v563
  %v612 = vpack.c.b16 %v572, %v568
  %v613 = vpack.c.b16 %v573, %v569
  %v614 = vpack.c.b16 %v574, %v570
  %v615 = vpack.c.b16 %v575, %v571
  %v616 = vpack.c.b16 %v580, %v576
  %v617 = vpack.c.b16 %v581, %v577
  %v618 = vpack.c.b16 %v582, %v578
  %v619 = vpack.c.b16 %v583, %v579
  %v620 = vpack.c.b16 %v588, %v584
  %v621 = vpack.c.b16 %v589, %v585
  %v622 = vpack.c.b16 %v590, %v586
  %v623 = vpack.c.b16 %v591, %v587
  %656 = vmatprep.subr.bf16.mxu0 %v621
  %657 = vmatpush1.bf16.msra.mxu0 %v620
  %658 = vmatprep.subr.bf16.mxu0 %v617
  %659 = vmatpush1.bf16.msra.mxu0 %v616
  %660 = vmatprep.subr.bf16.mxu0 %v613
  %661 = vmatpush1.bf16.msra.mxu0 %v612
  %662 = vmatprep.subr.bf16.mxu0 %v609
  %663 = vmatpush1.bf16.msra.mxu0 %v608
  %664 = vmatprep.subr.bf16.mxu0 %v605
  %665 = vmatpush1.bf16.msra.mxu0 %v604
  %666 = vmatprep.subr.bf16.mxu0 %v601
  %667 = vmatpush1.bf16.msra.mxu0 %v600
  %668 = vmatprep.subr.bf16.mxu0 %v597
  %669 = vmatpush1.bf16.msra.mxu0 %v596
  %670 = vmatprep.subr.bf16.mxu0 %v593
  %671 = vmatpush1.bf16.msra.mxu0 %v592
  %672 = vmatprep.subr.bf16.mxu0 0
  %673 = vmatpush2.bf16.msra.mxu0 0
  %674 = vmatprep.subr.bf16.mxu0 0
  %675 = vmatpush2.bf16.msra.mxu0 0
  %676 = vmatprep.subr.bf16.mxu0 0
  %677 = vmatpush2.bf16.msra.mxu0 0
  %678 = vmatprep.subr.bf16.mxu0 0
  %679 = vmatpush2.bf16.msra.mxu0 0
  %680 = vmatprep.subr.bf16.mxu0 0
  %681 = vmatpush2.bf16.msra.mxu0 0
  %682 = vmatprep.subr.bf16.mxu0 0
  %683 = vmatpush2.bf16.msra.mxu0 0
  %684 = vmatprep.subr.bf16.mxu0 0
  %685 = vmatpush2.bf16.msra.mxu0 0
  %686 = vmatprep.subr.bf16.mxu0 0
  %687 = vmatpush2.bf16.msra.mxu0 0
  %688 = vmatprep.mubr.bf16.mxu0 0
  %689 = vmatmul.mubr.bf16.gmra.mxu0 0
  %v690 = vpop.f32.mrf.mxu0
  %v691 = vadd.f32 0.0, %v690
  %v692 = vpop.f32.mrf.mxu0
  %v693 = vadd.f32 0.0, %v692
  %v694 = vpop.f32.mrf.mxu0
  %v695 = vpop.f32.mrf.mxu0
  %696 = vdwg.mxu0
  %697 = vmatprep.subr.bf16.mxu0 %v623
  %698 = vmatpush1.bf16.msra.mxu0 %v622
  %699 = vmatprep.subr.bf16.mxu0 %v619
  %700 = vmatpush1.bf16.msra.mxu0 %v618
  %701 = vmatprep.subr.bf16.mxu0 %v615
  %702 = vmatpush1.bf16.msra.mxu0 %v614
  %703 = vmatprep.subr.bf16.mxu0 %v611
  %704 = vmatpush1.bf16.msra.mxu0 %v610
  %705 = vmatprep.subr.bf16.mxu0 %v607
  %706 = vmatpush1.bf16.msra.mxu0 %v606
  %707 = vmatprep.subr.bf16.mxu0 %v603
  %708 = vmatpush1.bf16.msra.mxu0 %v602
  %709 = vmatprep.subr.bf16.mxu0 %v599
  %710 = vmatpush1.bf16.msra.mxu0 %v598
  %711 = vmatprep.subr.bf16.mxu0 %v595
  %712 = vmatpush1.bf16.msra.mxu0 %v594
  %713 = vmatprep.subr.bf16.mxu0 0
  %714 = vmatpush2.bf16.msra.mxu0 0
  %715 = vmatprep.subr.bf16.mxu0 0
  %716 = vmatpush2.bf16.msra.mxu0 0
  %717 = vmatprep.subr.bf16.mxu0 0
  %718 = vmatpush2.bf16.msra.mxu0 0
  %719 = vmatprep.subr.bf16.mxu0 0
  %720 = vmatpush2.bf16.msra.mxu0 0
  %721 = vmatprep.subr.bf16.mxu0 0
  %722 = vmatpush2.bf16.msra.mxu0 0
  %723 = vmatprep.subr.bf16.mxu0 0
  %724 = vmatpush2.bf16.msra.mxu0 0
  %725 = vmatprep.subr.bf16.mxu0 0
  %726 = vmatpush2.bf16.msra.mxu0 0
  %727 = vmatprep.subr.bf16.mxu0 0
  %728 = vmatpush2.bf16.msra.mxu0 0
  %729 = vmatprep.mubr.bf16.mxu0 0
  %730 = vmatmul.mubr.bf16.gmra.mxu0 0
  %v731 = vpop.f32.mrf.mxu0
  %v732 = vadd.f32 0.0, %v731
  %v733 = vpop.f32.mrf.mxu0
  %v734 = vadd.f32 0.0, %v733
  %v735 = vpop.f32.mrf.mxu0
  %v736 = vpop.f32.mrf.mxu0
  %737 = vdwg.mxu0
  %v738 = vadd.f32 %v460, %v691
  %v739 = vadd.f32 %v461, %v693
  %v740 = vadd.f32 %v462, %v732
  %v741 = vadd.f32 %v463, %v734
  %v742 = vxor.u32 %v738, 2147483648
  %v743 = vmul.f32 %v742, 1.442695
  %v744 = vpow.pop %v743
  %v745 = vadd.f32 %v744, 1.0
  %v746 = vrcp.pop %v745
  %v747 = vmul.f32 1.0, %v746
  %v748 = vxor.u32 %v739, 2147483648
  %v749 = vmul.f32 %v748, 1.442695
  %v750 = vpow.pop %v749
  %v751 = vadd.f32 %v750, 1.0
  %v752 = vrcp.pop %v751
  %v753 = vmul.f32 1.0, %v752
  %v754 = vtanh.pop %v740
  %v755 = vxor.u32 %v741, 2147483648
  %v756 = vmul.f32 %v755, 1.442695
  %v757 = vpow.pop %v756
  %v758 = vadd.f32 %v757, 1.0
  %v759 = vrcp.pop %v758
  %v760 = vmul.f32 1.0, %v759
  %v761 = vmul.f32 %v753, 0.0
  %v762 = vmul.f32 %v747, %v754
  %v763 = vadd.f32 %v761, %v762
  %v764 = vtanh.pop %v763
  %v765 = vmul.f32 %v760, %v764
  %v766 = vpack.c.bf16 %v765, %v765
  %767 = vst [vmem:[#allocation3] sm:$0xf] %v766
  %s768 = smul.u32 1, 4
  %s769 = smul.addr %s768, 8
  %s770 = scalar_lea.vmem [#allocation2], %s769
  %v771 = vld [vmem:[%s770] sm:$0xff]
  %v772 = vld [vmem:[%s770 + $0x8] sm:$0xff]
  %v773 = vld [vmem:[%s770 + $0x10] sm:$0xff]
  %v774 = vld [vmem:[%s770 + $0x18] sm:$0xff]
  %v775 = vld [vmem:[%s2] sm:$0xff]
  %v776 = vld [vmem:[%s2 + $0x8] sm:$0xff]
  %v777 = vld [vmem:[%s2 + $0x10] sm:$0xff]
  %v778 = vld [vmem:[%s2 + $0x18] sm:$0xff]
  %v779 = vld [vmem:[%s2 + $0x20] sm:$0xff]
  %v780 = vld [vmem:[%s2 + $0x28] sm:$0xff]
  %v781 = vld [vmem:[%s2 + $0x30] sm:$0xff]
  %v782 = vld [vmem:[%s2 + $0x38] sm:$0xff]
  %v783 = vld [vmem:[%s2 + $0x40] sm:$0xff]
  %v784 = vld [vmem:[%s2 + $0x48] sm:$0xff]
  %v785 = vld [vmem:[%s2 + $0x50] sm:$0xff]
  %v786 = vld [vmem:[%s2 + $0x58] sm:$0xff]
  %v787 = vld [vmem:[%s2 + $0x60] sm:$0xff]
  %v788 = vld [vmem:[%s2 + $0x68] sm:$0xff]
  %v789 = vld [vmem:[%s2 + $0x70] sm:$0xff]
  %v790 = vld [vmem:[%s2 + $0x78] sm:$0xff]
  %v791 = vld [vmem:[%s2 + $0x80] sm:$0xff]
  %v792 = vld [vmem:[%s2 + $0x88] sm:$0xff]
  %v793 = vld [vmem:[%s2 + $0x90] sm:$0xff]
  %v794 = vld [vmem:[%s2 + $0x98] sm:$0xff]
  %v795 = vld [vmem:[%s2 + $0xa0] sm:$0xff]
  %v796 = vld [vmem:[%s2 + $0xa8] sm:$0xff]
  %v797 = vld [vmem:[%s2 + $0xb0] sm:$0xff]
  %v798 = vld [vmem:[%s2 + $0xb8] sm:$0xff]
  %v799 = vld [vmem:[%s2 + $0xc0] sm:$0xff]
  %v800 = vld [vmem:[%s2 + $0xc8] sm:$0xff]
  %v801 = vld [vmem:[%s2 + $0xd0] sm:$0xff]
  %v802 = vld [vmem:[%s2 + $0xd8] sm:$0xff]
  %v803 = vld [vmem:[%s2 + $0xe0] sm:$0xff]
  %v804 = vld [vmem:[%s2 + $0xe8] sm:$0xff]
  %v805 = vld [vmem:[%s2 + $0xf0] sm:$0xff]
  %v806 = vld [vmem:[%s2 + $0xf8] sm:$0xff]
  %v839 = vunpack.c.l.b16 %v775
  %v840 = vunpack.c.h.b16 %v775
  %v841 = vunpack.c.l.b16 %v776
  %v842 = vunpack.c.h.b16 %v776
  %v843 = vunpack.c.l.b16 %v777
  %v844 = vunpack.c.h.b16 %v777
  %v845 = vunpack.c.l.b16 %v778
  %v846 = vunpack.c.h.b16 %v778
  %v847 = vunpack.c.l.b16 %v779
  %v848 = vunpack.c.h.b16 %v779
  %v849 = vunpack.c.l.b16 %v780
  %v850 = vunpack.c.h.b16 %v780
  %v851 = vunpack.c.l.b16 %v781
  %v852 = vunpack.c.h.b16 %v781
  %v853 = vunpack.c.l.b16 %v782
  %v854 = vunpack.c.h.b16 %v782
  %v855 = vunpack.c.l.b16 %v783
  %v856 = vunpack.c.h.b16 %v783
  %v857 = vunpack.c.l.b16 %v784
  %v858 = vunpack.c.h.b16 %v784
  %v859 = vunpack.c.l.b16 %v785
  %v860 = vunpack.c.h.b16 %v785
  %v861 = vunpack.c.l.b16 %v786
  %v862 = vunpack.c.h.b16 %v786
  %v863 = vunpack.c.l.b16 %v787
  %v864 = vunpack.c.h.b16 %v787
  %v865 = vunpack.c.l.b16 %v788
  %v866 = vunpack.c.h.b16 %v788
  %v867 = vunpack.c.l.b16 %v789
  %v868 = vunpack.c.h.b16 %v789
  %v869 = vunpack.c.l.b16 %v790
  %v870 = vunpack.c.h.b16 %v790
  %v871 = vunpack.c.l.b16 %v791
  %v872 = vunpack.c.h.b16 %v791
  %v873 = vunpack.c.l.b16 %v792
  %v874 = vunpack.c.h.b16 %v792
  %v875 = vunpack.c.l.b16 %v793
  %v876 = vunpack.c.h.b16 %v793
  %v877 = vunpack.c.l.b16 %v794
  %v878 = vunpack.c.h.b16 %v794
  %v879 = vunpack.c.l.b16 %v795
  %v880 = vunpack.c.h.b16 %v795
  %v881 = vunpack.c.l.b16 %v796
  %v882 = vunpack.c.h.b16 %v796
  %v883 = vunpack.c.l.b16 %v797
  %v884 = vunpack.c.h.b16 %v797
  %v885 = vunpack.c.l.b16 %v798
  %v886 = vunpack.c.h.b16 %v798
  %v887 = vunpack.c.l.b16 %v799
  %v888 = vunpack.c.h.b16 %v799
  %v889 = vunpack.c.l.b16 %v800
  %v890 = vunpack.c.h.b16 %v800
  %v891 = vunpack.c.l.b16 %v801
  %v892 = vunpack.c.h.b16 %v801
  %v893 = vunpack.c.l.b16 %v802
  %v894 = vunpack.c.h.b16 %v802
  %v895 = vunpack.c.l.b16 %v803
  %v896 = vunpack.c.h.b16 %v803
  %v897 = vunpack.c.l.b16 %v804
  %v898 = vunpack.c.h.b16 %v804
  %v899 = vunpack.c.l.b16 %v805
  %v900 = vunpack.c.h.b16 %v805
  %v901 = vunpack.c.l.b16 %v806
  %v902 = vunpack.c.h.b16 %v806
  %v903 = vpack.c.b16 %v843, %v839
  %v904 = vpack.c.b16 %v844, %v840
  %v905 = vpack.c.b16 %v845, %v841
  %v906 = vpack.c.b16 %v846, %v842
  %v907 = vpack.c.b16 %v851, %v847
  %v908 = vpack.c.b16 %v852, %v848
  %v909 = vpack.c.b16 %v853, %v849
  %v910 = vpack.c.b16 %v854, %v850
  %v911 = vpack.c.b16 %v859, %v855
  %v912 = vpack.c.b16 %v860, %v856
  %v913 = vpack.c.b16 %v861, %v857
  %v914 = vpack.c.b16 %v862, %v858
  %v915 = vpack.c.b16 %v867, %v863
  %v916 = vpack.c.b16 %v868, %v864
  %v917 = vpack.c.b16 %v869, %v865
  %v918 = vpack.c.b16 %v870, %v866
  %v919 = vpack.c.b16 %v875, %v871
  %v920 = vpack.c.b16 %v876, %v872
  %v921 = vpack.c.b16 %v877, %v873
  %v922 = vpack.c.b16 %v878, %v874
  %v923 = vpack.c.b16 %v883, %v879
  %v924 = vpack.c.b16 %v884, %v880
  %v925 = vpack.c.b16 %v885, %v881
  %v926 = vpack.c.b16 %v886, %v882
  %v927 = vpack.c.b16 %v891, %v887
  %v928 = vpack.c.b16 %v892, %v888
  %v929 = vpack.c.b16 %v893, %v889
  %v930 = vpack.c.b16 %v894, %v890
  %v931 = vpack.c.b16 %v899, %v895
  %v932 = vpack.c.b16 %v900, %v896
  %v933 = vpack.c.b16 %v901, %v897
  %v934 = vpack.c.b16 %v902, %v898
  %967 = vmatprep.subr.bf16.mxu0 %v932
  %968 = vmatpush1.bf16.msra.mxu0 %v931
  %969 = vmatprep.subr.bf16.mxu0 %v928
  %970 = vmatpush1.bf16.msra.mxu0 %v927
  %971 = vmatprep.subr.bf16.mxu0 %v924
  %972 = vmatpush1.bf16.msra.mxu0 %v923
  %973 = vmatprep.subr.bf16.mxu0 %v920
  %974 = vmatpush1.bf16.msra.mxu0 %v919
  %975 = vmatprep.subr.bf16.mxu0 %v916
  %976 = vmatpush1.bf16.msra.mxu0 %v915
  %977 = vmatprep.subr.bf16.mxu0 %v912
  %978 = vmatpush1.bf16.msra.mxu0 %v911
  %979 = vmatprep.subr.bf16.mxu0 %v908
  %980 = vmatpush1.bf16.msra.mxu0 %v907
  %981 = vmatprep.subr.bf16.mxu0 %v904
  %982 = vmatpush1.bf16.msra.mxu0 %v903
  %983 = vmatprep.subr.bf16.mxu0 0
  %984 = vmatpush2.bf16.msra.mxu0 0
  %985 = vmatprep.subr.bf16.mxu0 0
  %986 = vmatpush2.bf16.msra.mxu0 0
  %987 = vmatprep.subr.bf16.mxu0 0
  %988 = vmatpush2.bf16.msra.mxu0 0
  %989 = vmatprep.subr.bf16.mxu0 0
  %990 = vmatpush2.bf16.msra.mxu0 0
  %991 = vmatprep.subr.bf16.mxu0 0
  %992 = vmatpush2.bf16.msra.mxu0 0
  %993 = vmatprep.subr.bf16.mxu0 0
  %994 = vmatpush2.bf16.msra.mxu0 0
  %995 = vmatprep.subr.bf16.mxu0 0
  %996 = vmatpush2.bf16.msra.mxu0 0
  %997 = vmatprep.subr.bf16.mxu0 0
  %998 = vmatpush2.bf16.msra.mxu0 0
  %999 = vmatprep.mubr.bf16.mxu0 0
  %1000 = vmatmul.mubr.bf16.gmra.mxu0 %v766
  %v1001 = vpop.f32.mrf.mxu0
  %v1002 = vadd.f32 0.0, %v1001
  %v1003 = vpop.f32.mrf.mxu0
  %v1004 = vadd.f32 0.0, %v1003
  %v1005 = vpop.f32.mrf.mxu0
  %v1006 = vpop.f32.mrf.mxu0
  %1007 = vdwg.mxu0
  %1008 = vmatprep.subr.bf16.mxu0 %v934
  %1009 = vmatpush1.bf16.msra.mxu0 %v933
  %1010 = vmatprep.subr.bf16.mxu0 %v930
  %1011 = vmatpush1.bf16.msra.mxu0 %v929
  %1012 = vmatprep.subr.bf16.mxu0 %v926
  %1013 = vmatpush1.bf16.msra.mxu0 %v925
  %1014 = vmatprep.subr.bf16.mxu0 %v922
  %1015 = vmatpush1.bf16.msra.mxu0 %v921
  %1016 = vmatprep.subr.bf16.mxu0 %v918
  %1017 = vmatpush1.bf16.msra.mxu0 %v917
  %1018 = vmatprep.subr.bf16.mxu0 %v914
  %1019 = vmatpush1.bf16.msra.mxu0 %v913
  %1020 = vmatprep.subr.bf16.mxu0 %v910
  %1021 = vmatpush1.bf16.msra.mxu0 %v909
  %1022 = vmatprep.subr.bf16.mxu0 %v906
  %1023 = vmatpush1.bf16.msra.mxu0 %v905
  %1024 = vmatprep.subr.bf16.mxu0 0
  %1025 = vmatpush2.bf16.msra.mxu0 0
  %1026 = vmatprep.subr.bf16.mxu0 0
  %1027 = vmatpush2.bf16.msra.mxu0 0
  %1028 = vmatprep.subr.bf16.mxu0 0
  %1029 = vmatpush2.bf16.msra.mxu0 0
  %1030 = vmatprep.subr.bf16.mxu0 0
  %1031 = vmatpush2.bf16.msra.mxu0 0
  %1032 = vmatprep.subr.bf16.mxu0 0
  %1033 = vmatpush2.bf16.msra.mxu0 0
  %1034 = vmatprep.subr.bf16.mxu0 0
  %1035 = vmatpush2.bf16.msra.mxu0 0
  %1036 = vmatprep.subr.bf16.mxu0 0
  %1037 = vmatpush2.bf16.msra.mxu0 0
  %1038 = vmatprep.subr.bf16.mxu0 0
  %1039 = vmatpush2.bf16.msra.mxu0 0
  %1040 = vmatprep.mubr.bf16.mxu0 0
  %1041 = vmatmul.mubr.bf16.gmra.mxu0 %v766
  %v1042 = vpop.f32.mrf.mxu0
  %v1043 = vadd.f32 0.0, %v1042
  %v1044 = vpop.f32.mrf.mxu0
  %v1045 = vadd.f32 0.0, %v1044
  %v1046 = vpop.f32.mrf.mxu0
  %v1047 = vpop.f32.mrf.mxu0
  %1048 = vdwg.mxu0
  %v1049 = vadd.f32 %v771, %v1002
  %v1050 = vadd.f32 %v772, %v1004
  %v1051 = vadd.f32 %v773, %v1043
  %v1052 = vadd.f32 %v774, %v1045
  %v1053 = vxor.u32 %v1049, 2147483648
  %v1054 = vmul.f32 %v1053, 1.442695
  %v1055 = vpow.pop %v1054
  %v1056 = vadd.f32 %v1055, 1.0
  %v1057 = vrcp.pop %v1056
  %v1058 = vmul.f32 1.0, %v1057
  %v1059 = vxor.u32 %v1050, 2147483648
  %v1060 = vmul.f32 %v1059, 1.442695
  %v1061 = vpow.pop %v1060
  %v1062 = vadd.f32 %v1061, 1.0
  %v1063 = vrcp.pop %v1062
  %v1064 = vmul.f32 1.0, %v1063
  %v1065 = vtanh.pop %v1051
  %v1066 = vxor.u32 %v1052, 2147483648
  %v1067 = vmul.f32 %v1066, 1.442695
  %v1068 = vpow.pop %v1067
  %v1069 = vadd.f32 %v1068, 1.0
  %v1070 = vrcp.pop %v1069
  %v1071 = vmul.f32 1.0, %v1070
  %v1072 = vmul.f32 %v1064, %v763
  %v1073 = vmul.f32 %v1058, %v1065
  %v1074 = vadd.f32 %v1072, %v1073
  %v1075 = vtanh.pop %v1074
  %v1076 = vmul.f32 %v1071, %v1075
  %v1077 = vpack.c.bf16 %v1076, %v1076
  %s1078 = scalar_lea.vmem [#allocation3], 4
  %1079 = vst [vmem:[%s1078] sm:$0xf] %v1077
  %s1080 = smul.u32 2, 4
  %s1081 = smul.addr %s1080, 8
  %s1082 = scalar_lea.vmem [#allocation2], %s1081
  %v1083 = vld [vmem:[%s1082] sm:$0xff]
  %v1084 = vld [vmem:[%s1082 + $0x8] sm:$0xff]
  %v1085 = vld [vmem:[%s1082 + $0x10] sm:$0xff]
  %v1086 = vld [vmem:[%s1082 + $0x18] sm:$0xff]
  %v1087 = vld [vmem:[%s2] sm:$0xff]
  %v1088 = vld [vmem:[%s2 + $0x8] sm:$0xff]
  %v1089 = vld [vmem:[%s2 + $0x10] sm:$0xff]
  %v1090 = vld [vmem:[%s2 + $0x18] sm:$0xff]
  %v1091 = vld [vmem:[%s2 + $0x20] sm:$0xff]
  %v1092 = vld [vmem:[%s2 + $0x28] sm:$0xff]
  %v1093 = vld [vmem:[%s2 + $0x30] sm:$0xff]
  %v1094 = vld [vmem:[%s2 + $0x38] sm:$0xff]
  %v1095 = vld [vmem:[%s2 + $0x40] sm:$0xff]
  %v1096 = vld [vmem:[%s2 + $0x48] sm:$0xff]
  %v1097 = vld [vmem:[%s2 + $0x50] sm:$0xff]
  %v1098 = vld [vmem:[%s2 + $0x58] sm:$0xff]
  %v1099 = vld [vmem:[%s2 + $0x60] sm:$0xff]
  %v1100 = vld [vmem:[%s2 + $0x68] sm:$0xff]
  %v1101 = vld [vmem:[%s2 + $0x70] sm:$0xff]
  %v1102 = vld [vmem:[%s2 + $0x78] sm:$0xff]
  %v1103 = vld [vmem:[%s2 + $0x80] sm:$0xff]
  %v1104 = vld [vmem:[%s2 + $0x88] sm:$0xff]
  %v1105 = vld [vmem:[%s2 + $0x90] sm:$0xff]
  %v1106 = vld [vmem:[%s2 + $0x98] sm:$0xff]
  %v1107 = vld [vmem:[%s2 + $0xa0] sm:$0xff]
  %v1108 = vld [vmem:[%s2 + $0xa8] sm:$0xff]
  %v1109 = vld [vmem:[%s2 + $0xb0] sm:$0xff]
  %v1110 = vld [vmem:[%s2 + $0xb8] sm:$0xff]
  %v1111 = vld [vmem:[%s2 + $0xc0] sm:$0xff]
  %v1112 = vld [vmem:[%s2 + $0xc8] sm:$0xff]
  %v1113 = vld [vmem:[%s2 + $0xd0] sm:$0xff]
  %v1114 = vld [vmem:[%s2 + $0xd8] sm:$0xff]
  %v1115 = vld [vmem:[%s2 + $0xe0] sm:$0xff]
  %v1116 = vld [vmem:[%s2 + $0xe8] sm:$0xff]
  %v1117 = vld [vmem:[%s2 + $0xf0] sm:$0xff]
  %v1118 = vld [vmem:[%s2 + $0xf8] sm:$0xff]
  %v1151 = vunpack.c.l.b16 %v1087
  %v1152 = vunpack.c.h.b16 %v1087
  %v1153 = vunpack.c.l.b16 %v1088
  %v1154 = vunpack.c.h.b16 %v1088
  %v1155 = vunpack.c.l.b16 %v1089
  %v1156 = vunpack.c.h.b16 %v1089
  %v1157 = vunpack.c.l.b16 %v1090
  %v1158 = vunpack.c.h.b16 %v1090
  %v1159 = vunpack.c.l.b16 %v1091
  %v1160 = vunpack.c.h.b16 %v1091
  %v1161 = vunpack.c.l.b16 %v1092
  %v1162 = vunpack.c.h.b16 %v1092
  %v1163 = vunpack.c.l.b16 %v1093
  %v1164 = vunpack.c.h.b16 %v1093
  %v1165 = vunpack.c.l.b16 %v1094
  %v1166 = vunpack.c.h.b16 %v1094
  %v1167 = vunpack.c.l.b16 %v1095
  %v1168 = vunpack.c.h.b16 %v1095
  %v1169 = vunpack.c.l.b16 %v1096
  %v1170 = vunpack.c.h.b16 %v1096
  %v1171 = vunpack.c.l.b16 %v1097
  %v1172 = vunpack.c.h.b16 %v1097
  %v1173 = vunpack.c.l.b16 %v1098
  %v1174 = vunpack.c.h.b16 %v1098
  %v1175 = vunpack.c.l.b16 %v1099
  %v1176 = vunpack.c.h.b16 %v1099
  %v1177 = vunpack.c.l.b16 %v1100
  %v1178 = vunpack.c.h.b16 %v1100
  %v1179 = vunpack.c.l.b16 %v1101
  %v1180 = vunpack.c.h.b16 %v1101
  %v1181 = vunpack.c.l.b16 %v1102
  %v1182 = vunpack.c.h.b16 %v1102
  %v1183 = vunpack.c.l.b16 %v1103
  %v1184 = vunpack.c.h.b16 %v1103
  %v1185 = vunpack.c.l.b16 %v1104
  %v1186 = vunpack.c.h.b16 %v1104
  %v1187 = vunpack.c.l.b16 %v1105
  %v1188 = vunpack.c.h.b16 %v1105
  %v1189 = vunpack.c.l.b16 %v1106
  %v1190 = vunpack.c.h.b16 %v1106
  %v1191 = vunpack.c.l.b16 %v1107
  %v1192 = vunpack.c.h.b16 %v1107
  %v1193 = vunpack.c.l.b16 %v1108
  %v1194 = vunpack.c.h.b16 %v1108
  %v1195 = vunpack.c.l.b16 %v1109
  %v1196 = vunpack.c.h.b16 %v1109
  %v1197 = vunpack.c.l.b16 %v1110
  %v1198 = vunpack.c.h.b16 %v1110
  %v1199 = vunpack.c.l.b16 %v1111
  %v1200 = vunpack.c.h.b16 %v1111
  %v1201 = vunpack.c.l.b16 %v1112
  %v1202 = vunpack.c.h.b16 %v1112
  %v1203 = vunpack.c.l.b16 %v1113
  %v1204 = vunpack.c.h.b16 %v1113
  %v1205 = vunpack.c.l.b16 %v1114
  %v1206 = vunpack.c.h.b16 %v1114
  %v1207 = vunpack.c.l.b16 %v1115
  %v1208 = vunpack.c.h.b16 %v1115
  %v1209 = vunpack.c.l.b16 %v1116
  %v1210 = vunpack.c.h.b16 %v1116
  %v1211 = vunpack.c.l.b16 %v1117
  %v1212 = vunpack.c.h.b16 %v1117
  %v1213 = vunpack.c.l.b16 %v1118
  %v1214 = vunpack.c.h.b16 %v1118
  %v1215 = vpack.c.b16 %v1155, %v1151
  %v1216 = vpack.c.b16 %v1156, %v1152
  %v1217 = vpack.c.b16 %v1157, %v1153
  %v1218 = vpack.c.b16 %v1158, %v1154
  %v1219 = vpack.c.b16 %v1163, %v1159
  %v1220 = vpack.c.b16 %v1164, %v1160
  %v1221 = vpack.c.b16 %v1165, %v1161
  %v1222 = vpack.c.b16 %v1166, %v1162
  %v1223 = vpack.c.b16 %v1171, %v1167
  %v1224 = vpack.c.b16 %v1172, %v1168
  %v1225 = vpack.c.b16 %v1173, %v1169
  %v1226 = vpack.c.b16 %v1174, %v1170
  %v1227 = vpack.c.b16 %v1179, %v1175
  %v1228 = vpack.c.b16 %v1180, %v1176
  %v1229 = vpack.c.b16 %v1181, %v1177
  %v1230 = vpack.c.b16 %v1182, %v1178
  %v1231 = vpack.c.b16 %v1187, %v1183
  %v1232 = vpack.c.b16 %v1188, %v1184
  %v1233 = vpack.c.b16 %v1189, %v1185
  %v1234 = vpack.c.b16 %v1190, %v1186
  %v1235 = vpack.c.b16 %v1195, %v1191
  %v1236 = vpack.c.b16 %v1196, %v1192
  %v1237 = vpack.c.b16 %v1197, %v1193
  %v1238 = vpack.c.b16 %v1198, %v1194
  %v1239 = vpack.c.b16 %v1203, %v1199
  %v1240 = vpack.c.b16 %v1204, %v1200
  %v1241 = vpack.c.b16 %v1205, %v1201
  %v1242 = vpack.c.b16 %v1206, %v1202
  %v1243 = vpack.c.b16 %v1211, %v1207
  %v1244 = vpack.c.b16 %v1212, %v1208
  %v1245 = vpack.c.b16 %v1213, %v1209
  %v1246 = vpack.c.b16 %v1214, %v1210
  %1279 = vmatprep.subr.bf16.mxu0 %v1244
  %1280 = vmatpush1.bf16.msra.mxu0 %v1243
  %1281 = vmatprep.subr.bf16.mxu0 %v1240
  %1282 = vmatpush1.bf16.msra.mxu0 %v1239
  %1283 = vmatprep.subr.bf16.mxu0 %v1236
  %1284 = vmatpush1.bf16.msra.mxu0 %v1235
  %1285 = vmatprep.subr.bf16.mxu0 %v1232
  %1286 = vmatpush1.bf16.msra.mxu0 %v1231
  %1287 = vmatprep.subr.bf16.mxu0 %v1228
  %1288 = vmatpush1.bf16.msra.mxu0 %v1227
  %1289 = vmatprep.subr.bf16.mxu0 %v1224
  %1290 = vmatpush1.bf16.msra.mxu0 %v1223
  %1291 = vmatprep.subr.bf16.mxu0 %v1220
  %1292 = vmatpush1.bf16.msra.mxu0 %v1219
  %1293 = vmatprep.subr.bf16.mxu0 %v1216
  %1294 = vmatpush1.bf16.msra.mxu0 %v1215
  %1295 = vmatprep.subr.bf16.mxu0 0
  %1296 = vmatpush2.bf16.msra.mxu0 0
  %1297 = vmatprep.subr.bf16.mxu0 0
  %1298 = vmatpush2.bf16.msra.mxu0 0
  %1299 = vmatprep.subr.bf16.mxu0 0
  %1300 = vmatpush2.bf16.msra.mxu0 0
  %1301 = vmatprep.subr.bf16.mxu0 0
  %1302 = vmatpush2.bf16.msra.mxu0 0
  %1303 = vmatprep.subr.bf16.mxu0 0
  %1304 = vmatpush2.bf16.msra.mxu0 0
  %1305 = vmatprep.subr.bf16.mxu0 0
  %1306 = vmatpush2.bf16.msra.mxu0 0
  %1307 = vmatprep.subr.bf16.mxu0 0
  %1308 = vmatpush2.bf16.msra.mxu0 0
  %1309 = vmatprep.subr.bf16.mxu0 0
  %1310 = vmatpush2.bf16.msra.mxu0 0
  %1311 = vmatprep.mubr.bf16.mxu0 0
  %1312 = vmatmul.mubr.bf16.gmra.mxu0 %v1077
  %v1313 = vpop.f32.mrf.mxu0
  %v1314 = vadd.f32 0.0, %v1313
  %v1315 = vpop.f32.mrf.mxu0
  %v1316 = vadd.f32 0.0, %v1315
  %v1317 = vpop.f32.mrf.mxu0
  %v1318 = vpop.f32.mrf.mxu0
  %1319 = vdwg.mxu0
  %1320 = vmatprep.subr.bf16.mxu0 %v1246
  %1321 = vmatpush1.bf16.msra.mxu0 %v1245
  %1322 = vmatprep.subr.bf16.mxu0 %v1242
  %1323 = vmatpush1.bf16.msra.mxu0 %v1241
  %1324 = vmatprep.subr.bf16.mxu0 %v1238
  %1325 = vmatpush1.bf16.msra.mxu0 %v1237
  %1326 = vmatprep.subr.bf16.mxu0 %v1234
  %1327 = vmatpush1.bf16.msra.mxu0 %v1233
  %1328 = vmatprep.subr.bf16.mxu0 %v1230
  %1329 = vmatpush1.bf16.msra.mxu0 %v1229
  %1330 = vmatprep.subr.bf16.mxu0 %v1226
  %1331 = vmatpush1.bf16.msra.mxu0 %v1225
  %1332 = vmatprep.subr.bf16.mxu0 %v1222
  %1333 = vmatpush1.bf16.msra.mxu0 %v1221
  %1334 = vmatprep.subr.bf16.mxu0 %v1218
  %1335 = vmatpush1.bf16.msra.mxu0 %v1217
  %1336 = vmatprep.subr.bf16.mxu0 0
  %1337 = vmatpush2.bf16.msra.mxu0 0
  %1338 = vmatprep.subr.bf16.mxu0 0
  %1339 = vmatpush2.bf16.msra.mxu0 0
  %1340 = vmatprep.subr.bf16.mxu0 0
  %1341 = vmatpush2.bf16.msra.mxu0 0
  %1342 = vmatprep.subr.bf16.mxu0 0
  %1343 = vmatpush2.bf16.msra.mxu0 0
  %1344 = vmatprep.subr.bf16.mxu0 0
  %1345 = vmatpush2.bf16.msra.mxu0 0
  %1346 = vmatprep.subr.bf16.mxu0 0
  %1347 = vmatpush2.bf16.msra.mxu0 0
  %1348 = vmatprep.subr.bf16.mxu0 0
  %1349 = vmatpush2.bf16.msra.mxu0 0
  %1350 = vmatprep.subr.bf16.mxu0 0
  %1351 = vmatpush2.bf16.msra.mxu0 0
  %1352 = vmatprep.mubr.bf16.mxu0 0
  %1353 = vmatmul.mubr.bf16.gmra.mxu0 %v1077
  %v1354 = vpop.f32.mrf.mxu0
  %v1355 = vadd.f32 0.0, %v1354
  %v1356 = vpop.f32.mrf.mxu0
  %v1357 = vadd.f32 0.0, %v1356
  %v1358 = vpop.f32.mrf.mxu0
  %v1359 = vpop.f32.mrf.mxu0
  %1360 = vdwg.mxu0
  %v1361 = vadd.f32 %v1083, %v1314
  %v1362 = vadd.f32 %v1084, %v1316
  %v1363 = vadd.f32 %v1085, %v1355
  %v1364 = vadd.f32 %v1086, %v1357
  %v1365 = vxor.u32 %v1361, 2147483648
  %v1366 = vmul.f32 %v1365, 1.442695
  %v1367 = vpow.pop %v1366
  %v1368 = vadd.f32 %v1367, 1.0
  %v1369 = vrcp.pop %v1368
  %v1370 = vmul.f32 1.0, %v1369
  %v1371 = vxor.u32 %v1362, 2147483648
  %v1372 = vmul.f32 %v1371, 1.442695
  %v1373 = vpow.pop %v1372
  %v1374 = vadd.f32 %v1373, 1.0
  %v1375 = vrcp.pop %v1374
  %v1376 = vmul.f32 1.0, %v1375
  %v1377 = vtanh.pop %v1363
  %v1378 = vxor.u32 %v1364, 2147483648
  %v1379 = vmul.f32 %v1378, 1.442695
  %v1380 = vpow.pop %v1379
  %v1381 = vadd.f32 %v1380, 1.0
  %v1382 = vrcp.pop %v1381
  %v1383 = vmul.f32 1.0, %v1382
  %v1384 = vmul.f32 %v1376, %v1074
  %v1385 = vmul.f32 %v1370, %v1377
  %v1386 = vadd.f32 %v1384, %v1385
  %v1387 = vtanh.pop %v1386
  %v1388 = vmul.f32 %v1383, %v1387
  %v1389 = vpack.c.bf16 %v1388, %v1388
  %s1390 = scalar_lea.vmem [#allocation3], 8
  %1391 = vst [vmem:[%s1390] sm:$0xf] %v1389
  %s1392 = smul.u32 3, 4
  %s1393 = smul.addr %s1392, 8
  %s1394 = scalar_lea.vmem [#allocation2], %s1393
  %v1395 = vld [vmem:[%s1394] sm:$0xff]
  %v1396 = vld [vmem:[%s1394 + $0x8] sm:$0xff]
  %v1397 = vld [vmem:[%s1394 + $0x10] sm:$0xff]
  %v1398 = vld [vmem:[%s1394 + $0x18] sm:$0xff]
  %v1399 = vld [vmem:[%s2] sm:$0xff]
  %v1400 = vld [vmem:[%s2 + $0x8] sm:$0xff]
  %v1401 = vld [vmem:[%s2 + $0x10] sm:$0xff]
  %v1402 = vld [vmem:[%s2 + $0x18] sm:$0xff]
  %v1403 = vld [vmem:[%s2 + $0x20] sm:$0xff]
  %v1404 = vld [vmem:[%s2 + $0x28] sm:$0xff]
  %v1405 = vld [vmem:[%s2 + $0x30] sm:$0xff]
  %v1406 = vld [vmem:[%s2 + $0x38] sm:$0xff]
  %v1407 = vld [vmem:[%s2 + $0x40] sm:$0xff]
  %v1408 = vld [vmem:[%s2 + $0x48] sm:$0xff]
  %v1409 = vld [vmem:[%s2 + $0x50] sm:$0xff]
  %v1410 = vld [vmem:[%s2 + $0x58] sm:$0xff]
  %v1411 = vld [vmem:[%s2 + $0x60] sm:$0xff]
  %v1412 = vld [vmem:[%s2 + $0x68] sm:$0xff]
  %v1413 = vld [vmem:[%s2 + $0x70] sm:$0xff]
  %v1414 = vld [vmem:[%s2 + $0x78] sm:$0xff]
  %v1415 = vld [vmem:[%s2 + $0x80] sm:$0xff]
  %v1416 = vld [vmem:[%s2 + $0x88] sm:$0xff]
  %v1417 = vld [vmem:[%s2 + $0x90] sm:$0xff]
  %v1418 = vld [vmem:[%s2 + $0x98] sm:$0xff]
  %v1419 = vld [vmem:[%s2 + $0xa0] sm:$0xff]
  %v1420 = vld [vmem:[%s2 + $0xa8] sm:$0xff]
  %v1421 = vld [vmem:[%s2 + $0xb0] sm:$0xff]
  %v1422 = vld [vmem:[%s2 + $0xb8] sm:$0xff]
  %v1423 = vld [vmem:[%s2 + $0xc0] sm:$0xff]
  %v1424 = vld [vmem:[%s2 + $0xc8] sm:$0xff]
  %v1425 = vld [vmem:[%s2 + $0xd0] sm:$0xff]
  %v1426 = vld [vmem:[%s2 + $0xd8] sm:$0xff]
  %v1427 = vld [vmem:[%s2 + $0xe0] sm:$0xff]
  %v1428 = vld [vmem:[%s2 + $0xe8] sm:$0xff]
  %v1429 = vld [vmem:[%s2 + $0xf0] sm:$0xff]
  %v1430 = vld [vmem:[%s2 + $0xf8] sm:$0xff]
  %v1463 = vunpack.c.l.b16 %v1399
  %v1464 = vunpack.c.h.b16 %v1399
  %v1465 = vunpack.c.l.b16 %v1400
  %v1466 = vunpack.c.h.b16 %v1400
  %v1467 = vunpack.c.l.b16 %v1401
  %v1468 = vunpack.c.h.b16 %v1401
  %v1469 = vunpack.c.l.b16 %v1402
  %v1470 = vunpack.c.h.b16 %v1402
  %v1471 = vunpack.c.l.b16 %v1403
  %v1472 = vunpack.c.h.b16 %v1403
  %v1473 = vunpack.c.l.b16 %v1404
  %v1474 = vunpack.c.h.b16 %v1404
  %v1475 = vunpack.c.l.b16 %v1405
  %v1476 = vunpack.c.h.b16 %v1405
  %v1477 = vunpack.c.l.b16 %v1406
  %v1478 = vunpack.c.h.b16 %v1406
  %v1479 = vunpack.c.l.b16 %v1407
  %v1480 = vunpack.c.h.b16 %v1407
  %v1481 = vunpack.c.l.b16 %v1408
  %v1482 = vunpack.c.h.b16 %v1408
  %v1483 = vunpack.c.l.b16 %v1409
  %v1484 = vunpack.c.h.b16 %v1409
  %v1485 = vunpack.c.l.b16 %v1410
  %v1486 = vunpack.c.h.b16 %v1410
  %v1487 = vunpack.c.l.b16 %v1411
  %v1488 = vunpack.c.h.b16 %v1411
  %v1489 = vunpack.c.l.b16 %v1412
  %v1490 = vunpack.c.h.b16 %v1412
  %v1491 = vunpack.c.l.b16 %v1413
  %v1492 = vunpack.c.h.b16 %v1413
  %v1493 = vunpack.c.l.b16 %v1414
  %v1494 = vunpack.c.h.b16 %v1414
  %v1495 = vunpack.c.l.b16 %v1415
  %v1496 = vunpack.c.h.b16 %v1415
  %v1497 = vunpack.c.l.b16 %v1416
  %v1498 = vunpack.c.h.b16 %v1416
  %v1499 = vunpack.c.l.b16 %v1417
  %v1500 = vunpack.c.h.b16 %v1417
  %v1501 = vunpack.c.l.b16 %v1418
  %v1502 = vunpack.c.h.b16 %v1418
  %v1503 = vunpack.c.l.b16 %v1419
  %v1504 = vunpack.c.h.b16 %v1419
  %v1505 = vunpack.c.l.b16 %v1420
  %v1506 = vunpack.c.h.b16 %v1420
  %v1507 = vunpack.c.l.b16 %v1421
  %v1508 = vunpack.c.h.b16 %v1421
  %v1509 = vunpack.c.l.b16 %v1422
  %v1510 = vunpack.c.h.b16 %v1422
  %v1511 = vunpack.c.l.b16 %v1423
  %v1512 = vunpack.c.h.b16 %v1423
  %v1513 = vunpack.c.l.b16 %v1424
  %v1514 = vunpack.c.h.b16 %v1424
  %v1515 = vunpack.c.l.b16 %v1425
  %v1516 = vunpack.c.h.b16 %v1425
  %v1517 = vunpack.c.l.b16 %v1426
  %v1518 = vunpack.c.h.b16 %v1426
  %v1519 = vunpack.c.l.b16 %v1427
  %v1520 = vunpack.c.h.b16 %v1427
  %v1521 = vunpack.c.l.b16 %v1428
  %v1522 = vunpack.c.h.b16 %v1428
  %v1523 = vunpack.c.l.b16 %v1429
  %v1524 = vunpack.c.h.b16 %v1429
  %v1525 = vunpack.c.l.b16 %v1430
  %v1526 = vunpack.c.h.b16 %v1430
  %v1527 = vpack.c.b16 %v1467, %v1463
  %v1528 = vpack.c.b16 %v1468, %v1464
  %v1529 = vpack.c.b16 %v1469, %v1465
  %v1530 = vpack.c.b16 %v1470, %v1466
  %v1531 = vpack.c.b16 %v1475, %v1471
  %v1532 = vpack.c.b16 %v1476, %v1472
  %v1533 = vpack.c.b16 %v1477, %v1473
  %v1534 = vpack.c.b16 %v1478, %v1474
  %v1535 = vpack.c.b16 %v1483, %v1479
  %v1536 = vpack.c.b16 %v1484, %v1480
  %v1537 = vpack.c.b16 %v1485, %v1481
  %v1538 = vpack.c.b16 %v1486, %v1482
  %v1539 = vpack.c.b16 %v1491, %v1487
  %v1540 = vpack.c.b16 %v1492, %v1488
  %v1541 = vpack.c.b16 %v1493, %v1489
  %v1542 = vpack.c.b16 %v1494, %v1490
  %v1543 = vpack.c.b16 %v1499, %v1495
  %v1544 = vpack.c.b16 %v1500, %v1496
  %v1545 = vpack.c.b16 %v1501, %v1497
  %v1546 = vpack.c.b16 %v1502, %v1498
  %v1547 = vpack.c.b16 %v1507, %v1503
  %v1548 = vpack.c.b16 %v1508, %v1504
  %v1549 = vpack.c.b16 %v1509, %v1505
  %v1550 = vpack.c.b16 %v1510, %v1506
  %v1551 = vpack.c.b16 %v1515, %v1511
  %v1552 = vpack.c.b16 %v1516, %v1512
  %v1553 = vpack.c.b16 %v1517, %v1513
  %v1554 = vpack.c.b16 %v1518, %v1514
  %v1555 = vpack.c.b16 %v1523, %v1519
  %v1556 = vpack.c.b16 %v1524, %v1520
  %v1557 = vpack.c.b16 %v1525, %v1521
  %v1558 = vpack.c.b16 %v1526, %v1522
  %1591 = vmatprep.subr.bf16.mxu0 %v1556
  %1592 = vmatpush1.bf16.msra.mxu0 %v1555
  %1593 = vmatprep.subr.bf16.mxu0 %v1552
  %1594 = vmatpush1.bf16.msra.mxu0 %v1551
  %1595 = vmatprep.subr.bf16.mxu0 %v1548
  %1596 = vmatpush1.bf16.msra.mxu0 %v1547
  %1597 = vmatprep.subr.bf16.mxu0 %v1544
  %1598 = vmatpush1.bf16.msra.mxu0 %v1543
  %1599 = vmatprep.subr.bf16.mxu0 %v1540
  %1600 = vmatpush1.bf16.msra.mxu0 %v1539
  %1601 = vmatprep.subr.bf16.mxu0 %v1536
  %1602 = vmatpush1.bf16.msra.mxu0 %v1535
  %1603 = vmatprep.subr.bf16.mxu0 %v1532
  %1604 = vmatpush1.bf16.msra.mxu0 %v1531
  %1605 = vmatprep.subr.bf16.mxu0 %v1528
  %1606 = vmatpush1.bf16.msra.mxu0 %v1527
  %1607 = vmatprep.subr.bf16.mxu0 0
  %1608 = vmatpush2.bf16.msra.mxu0 0
  %1609 = vmatprep.subr.bf16.mxu0 0
  %1610 = vmatpush2.bf16.msra.mxu0 0
  %1611 = vmatprep.subr.bf16.mxu0 0
  %1612 = vmatpush2.bf16.msra.mxu0 0
  %1613 = vmatprep.subr.bf16.mxu0 0
  %1614 = vmatpush2.bf16.msra.mxu0 0
  %1615 = vmatprep.subr.bf16.mxu0 0
  %1616 = vmatpush2.bf16.msra.mxu0 0
  %1617 = vmatprep.subr.bf16.mxu0 0
  %1618 = vmatpush2.bf16.msra.mxu0 0
  %1619 = vmatprep.subr.bf16.mxu0 0
  %1620 = vmatpush2.bf16.msra.mxu0 0
  %1621 = vmatprep.subr.bf16.mxu0 0
  %1622 = vmatpush2.bf16.msra.mxu0 0
  %1623 = vmatprep.mubr.bf16.mxu0 0
  %1624 = vmatmul.mubr.bf16.gmra.mxu0 %v1389
  %v1625 = vpop.f32.mrf.mxu0
  %v1626 = vadd.f32 0.0, %v1625
  %v1627 = vpop.f32.mrf.mxu0
  %v1628 = vadd.f32 0.0, %v1627
  %v1629 = vpop.f32.mrf.mxu0
  %v1630 = vpop.f32.mrf.mxu0
  %1631 = vdwg.mxu0
  %1632 = vmatprep.subr.bf16.mxu0 %v1558
  %1633 = vmatpush1.bf16.msra.mxu0 %v1557
  %1634 = vmatprep.subr.bf16.mxu0 %v1554
  %1635 = vmatpush1.bf16.msra.mxu0 %v1553
  %1636 = vmatprep.subr.bf16.mxu0 %v1550
  %1637 = vmatpush1.bf16.msra.mxu0 %v1549
  %1638 = vmatprep.subr.bf16.mxu0 %v1546
  %1639 = vmatpush1.bf16.msra.mxu0 %v1545
  %1640 = vmatprep.subr.bf16.mxu0 %v1542
  %1641 = vmatpush1.bf16.msra.mxu0 %v1541
  %1642 = vmatprep.subr.bf16.mxu0 %v1538
  %1643 = vmatpush1.bf16.msra.mxu0 %v1537
  %1644 = vmatprep.subr.bf16.mxu0 %v1534
  %1645 = vmatpush1.bf16.msra.mxu0 %v1533
  %1646 = vmatprep.subr.bf16.mxu0 %v1530
  %1647 = vmatpush1.bf16.msra.mxu0 %v1529
  %1648 = vmatprep.subr.bf16.mxu0 0
  %1649 = vmatpush2.bf16.msra.mxu0 0
  %1650 = vmatprep.subr.bf16.mxu0 0
  %1651 = vmatpush2.bf16.msra.mxu0 0
  %1652 = vmatprep.subr.bf16.mxu0 0
  %1653 = vmatpush2.bf16.msra.mxu0 0
  %1654 = vmatprep.subr.bf16.mxu0 0
  %1655 = vmatpush2.bf16.msra.mxu0 0
  %1656 = vmatprep.subr.bf16.mxu0 0
  %1657 = vmatpush2.bf16.msra.mxu0 0
  %1658 = vmatprep.subr.bf16.mxu0 0
  %1659 = vmatpush2.bf16.msra.mxu0 0
  %1660 = vmatprep.subr.bf16.mxu0 0
  %1661 = vmatpush2.bf16.msra.mxu0 0
  %1662 = vmatprep.subr.bf16.mxu0 0
  %1663 = vmatpush2.bf16.msra.mxu0 0
  %1664 = vmatprep.mubr.bf16.mxu0 0
  %1665 = vmatmul.mubr.bf16.gmra.mxu0 %v1389
  %v1666 = vpop.f32.mrf.mxu0
  %v1667 = vadd.f32 0.0, %v1666
  %v1668 = vpop.f32.mrf.mxu0
  %v1669 = vadd.f32 0.0, %v1668
  %v1670 = vpop.f32.mrf.mxu0
  %v1671 = vpop.f32.mrf.mxu0
  %1672 = vdwg.mxu0
  %v1673 = vadd.f32 %v1395, %v1626
  %v1674 = vadd.f32 %v1396, %v1628
  %v1675 = vadd.f32 %v1397, %v1667
  %v1676 = vadd.f32 %v1398, %v1669
  %v1677 = vxor.u32 %v1673, 2147483648
  %v1678 = vmul.f32 %v1677, 1.442695
  %v1679 = vpow.pop %v1678
  %v1680 = vadd.f32 %v1679, 1.0
  %v1681 = vrcp.pop %v1680
  %v1682 = vmul.f32 1.0, %v1681
  %v1683 = vxor.u32 %v1674, 2147483648
  %v1684 = vmul.f32 %v1683, 1.442695
  %v1685 = vpow.pop %v1684
  %v1686 = vadd.f32 %v1685, 1.0
  %v1687 = vrcp.pop %v1686
  %v1688 = vmul.f32 1.0, %v1687
  %v1689 = vtanh.pop %v1675
  %v1690 = vxor.u32 %v1676, 2147483648
  %v1691 = vmul.f32 %v1690, 1.442695
  %v1692 = vpow.pop %v1691
  %v1693 = vadd.f32 %v1692, 1.0
  %v1694 = vrcp.pop %v1693
  %v1695 = vmul.f32 1.0, %v1694
  %v1696 = vmul.f32 %v1688, %v1386
  %v1697 = vmul.f32 %v1682, %v1689
  %v1698 = vadd.f32 %v1696, %v1697
  %v1699 = vtanh.pop %v1698
  %v1700 = vmul.f32 %v1695, %v1699
  %v1701 = vpack.c.bf16 %v1700, %v1700
  %s1702 = scalar_lea.vmem [#allocation3], 12
  %1703 = vst [vmem:[%s1702] sm:$0xf] %v1701
  %s1704 = smul.u32 4, 4
  %s1705 = smul.addr %s1704, 8
  %s1706 = scalar_lea.vmem [#allocation2], %s1705
  %v1707 = vld [vmem:[%s1706] sm:$0xff]
  %v1708 = vld [vmem:[%s1706 + $0x8] sm:$0xff]
  %v1709 = vld [vmem:[%s1706 + $0x10] sm:$0xff]
  %v1710 = vld [vmem:[%s1706 + $0x18] sm:$0xff]
  %v1711 = vld [vmem:[%s2] sm:$0xff]
  %v1712 = vld [vmem:[%s2 + $0x8] sm:$0xff]
  %v1713 = vld [vmem:[%s2 + $0x10] sm:$0xff]
  %v1714 = vld [vmem:[%s2 + $0x18] sm:$0xff]
  %v1715 = vld [vmem:[%s2 + $0x20] sm:$0xff]
  %v1716 = vld [vmem:[%s2 + $0x28] sm:$0xff]
  %v1717 = vld [vmem:[%s2 + $0x30] sm:$0xff]
  %v1718 = vld [vmem:[%s2 + $0x38] sm:$0xff]
  %v1719 = vld [vmem:[%s2 + $0x40] sm:$0xff]
  %v1720 = vld [vmem:[%s2 + $0x48] sm:$0xff]
  %v1721 = vld [vmem:[%s2 + $0x50] sm:$0xff]
  %v1722 = vld [vmem:[%s2 + $0x58] sm:$0xff]
  %v1723 = vld [vmem:[%s2 + $0x60] sm:$0xff]
  %v1724 = vld [vmem:[%s2 + $0x68] sm:$0xff]
  %v1725 = vld [vmem:[%s2 + $0x70] sm:$0xff]
  %v1726 = vld [vmem:[%s2 + $0x78] sm:$0xff]
  %v1727 = vld [vmem:[%s2 + $0x80] sm:$0xff]
  %v1728 = vld [vmem:[%s2 + $0x88] sm:$0xff]
  %v1729 = vld [vmem:[%s2 + $0x90] sm:$0xff]
  %v1730 = vld [vmem:[%s2 + $0x98] sm:$0xff]
  %v1731 = vld [vmem:[%s2 + $0xa0] sm:$0xff]
  %v1732 = vld [vmem:[%s2 + $0xa8] sm:$0xff]
  %v1733 = vld [vmem:[%s2 + $0xb0] sm:$0xff]
  %v1734 = vld [vmem:[%s2 + $0xb8] sm:$0xff]
  %v1735 = vld [vmem:[%s2 + $0xc0] sm:$0xff]
  %v1736 = vld [vmem:[%s2 + $0xc8] sm:$0xff]
  %v1737 = vld [vmem:[%s2 + $0xd0] sm:$0xff]
  %v1738 = vld [vmem:[%s2 + $0xd8] sm:$0xff]
  %v1739 = vld [vmem:[%s2 + $0xe0] sm:$0xff]
  %v1740 = vld [vmem:[%s2 + $0xe8] sm:$0xff]
  %v1741 = vld [vmem:[%s2 + $0xf0] sm:$0xff]
  %v1742 = vld [vmem:[%s2 + $0xf8] sm:$0xff]
  %v1775 = vunpack.c.l.b16 %v1711
  %v1776 = vunpack.c.h.b16 %v1711
  %v1777 = vunpack.c.l.b16 %v1712
  %v1778 = vunpack.c.h.b16 %v1712
  %v1779 = vunpack.c.l.b16 %v1713
  %v1780 = vunpack.c.h.b16 %v1713
  %v1781 = vunpack.c.l.b16 %v1714
  %v1782 = vunpack.c.h.b16 %v1714
  %v1783 = vunpack.c.l.b16 %v1715
  %v1784 = vunpack.c.h.b16 %v1715
  %v1785 = vunpack.c.l.b16 %v1716
  %v1786 = vunpack.c.h.b16 %v1716
  %v1787 = vunpack.c.l.b16 %v1717
  %v1788 = vunpack.c.h.b16 %v1717
  %v1789 = vunpack.c.l.b16 %v1718
  %v1790 = vunpack.c.h.b16 %v1718
  %v1791 = vunpack.c.l.b16 %v1719
  %v1792 = vunpack.c.h.b16 %v1719
  %v1793 = vunpack.c.l.b16 %v1720
  %v1794 = vunpack.c.h.b16 %v1720
  %v1795 = vunpack.c.l.b16 %v1721
  %v1796 = vunpack.c.h.b16 %v1721
  %v1797 = vunpack.c.l.b16 %v1722
  %v1798 = vunpack.c.h.b16 %v1722
  %v1799 = vunpack.c.l.b16 %v1723
  %v1800 = vunpack.c.h.b16 %v1723
  %v1801 = vunpack.c.l.b16 %v1724
  %v1802 = vunpack.c.h.b16 %v1724
  %v1803 = vunpack.c.l.b16 %v1725
  %v1804 = vunpack.c.h.b16 %v1725
  %v1805 = vunpack.c.l.b16 %v1726
  %v1806 = vunpack.c.h.b16 %v1726
  %v1807 = vunpack.c.l.b16 %v1727
  %v1808 = vunpack.c.h.b16 %v1727
  %v1809 = vunpack.c.l.b16 %v1728
  %v1810 = vunpack.c.h.b16 %v1728
  %v1811 = vunpack.c.l.b16 %v1729
  %v1812 = vunpack.c.h.b16 %v1729
  %v1813 = vunpack.c.l.b16 %v1730
  %v1814 = vunpack.c.h.b16 %v1730
  %v1815 = vunpack.c.l.b16 %v1731
  %v1816 = vunpack.c.h.b16 %v1731
  %v1817 = vunpack.c.l.b16 %v1732
  %v1818 = vunpack.c.h.b16 %v1732
  %v1819 = vunpack.c.l.b16 %v1733
  %v1820 = vunpack.c.h.b16 %v1733
  %v1821 = vunpack.c.l.b16 %v1734
  %v1822 = vunpack.c.h.b16 %v1734
  %v1823 = vunpack.c.l.b16 %v1735
  %v1824 = vunpack.c.h.b16 %v1735
  %v1825 = vunpack.c.l.b16 %v1736
  %v1826 = vunpack.c.h.b16 %v1736
  %v1827 = vunpack.c.l.b16 %v1737
  %v1828 = vunpack.c.h.b16 %v1737
  %v1829 = vunpack.c.l.b16 %v1738
  %v1830 = vunpack.c.h.b16 %v1738
  %v1831 = vunpack.c.l.b16 %v1739
  %v1832 = vunpack.c.h.b16 %v1739
  %v1833 = vunpack.c.l.b16 %v1740
  %v1834 = vunpack.c.h.b16 %v1740
  %v1835 = vunpack.c.l.b16 %v1741
  %v1836 = vunpack.c.h.b16 %v1741
  %v1837 = vunpack.c.l.b16 %v1742
  %v1838 = vunpack.c.h.b16 %v1742
  %v1839 = vpack.c.b16 %v1779, %v1775
  %v1840 = vpack.c.b16 %v1780, %v1776
  %v1841 = vpack.c.b16 %v1781, %v1777
  %v1842 = vpack.c.b16 %v1782, %v1778
  %v1843 = vpack.c.b16 %v1787, %v1783
  %v1844 = vpack.c.b16 %v1788, %v1784
  %v1845 = vpack.c.b16 %v1789, %v1785
  %v1846 = vpack.c.b16 %v1790, %v1786
  %v1847 = vpack.c.b16 %v1795, %v1791
  %v1848 = vpack.c.b16 %v1796, %v1792
  %v1849 = vpack.c.b16 %v1797, %v1793
  %v1850 = vpack.c.b16 %v1798, %v1794
  %v1851 = vpack.c.b16 %v1803, %v1799
  %v1852 = vpack.c.b16 %v1804, %v1800
  %v1853 = vpack.c.b16 %v1805, %v1801
  %v1854 = vpack.c.b16 %v1806, %v1802
  %v1855 = vpack.c.b16 %v1811, %v1807
  %v1856 = vpack.c.b16 %v1812, %v1808
  %v1857 = vpack.c.b16 %v1813, %v1809
  %v1858 = vpack.c.b16 %v1814, %v1810
  %v1859 = vpack.c.b16 %v1819, %v1815
  %v1860 = vpack.c.b16 %v1820, %v1816
  %v1861 = vpack.c.b16 %v1821, %v1817
  %v1862 = vpack.c.b16 %v1822, %v1818
  %v1863 = vpack.c.b16 %v1827, %v1823
  %v1864 = vpack.c.b16 %v1828, %v1824
  %v1865 = vpack.c.b16 %v1829, %v1825
  %v1866 = vpack.c.b16 %v1830, %v1826
  %v1867 = vpack.c.b16 %v1835, %v1831
  %v1868 = vpack.c.b16 %v1836, %v1832
  %v1869 = vpack.c.b16 %v1837, %v1833
  %v1870 = vpack.c.b16 %v1838, %v1834
  %1903 = vmatprep.subr.bf16.mxu0 %v1868
  %1904 = vmatpush1.bf16.msra.mxu0 %v1867
  %1905 = vmatprep.subr.bf16.mxu0 %v1864
  %1906 = vmatpush1.bf16.msra.mxu0 %v1863
  %1907 = vmatprep.subr.bf16.mxu0 %v1860
  %1908 = vmatpush1.bf16.msra.mxu0 %v1859
  %1909 = vmatprep.subr.bf16.mxu0 %v1856
  %1910 = vmatpush1.bf16.msra.mxu0 %v1855
  %1911 = vmatprep.subr.bf16.mxu0 %v1852
  %1912 = vmatpush1.bf16.msra.mxu0 %v1851
  %1913 = vmatprep.subr.bf16.mxu0 %v1848
  %1914 = vmatpush1.bf16.msra.mxu0 %v1847
  %1915 = vmatprep.subr.bf16.mxu0 %v1844
  %1916 = vmatpush1.bf16.msra.mxu0 %v1843
  %1917 = vmatprep.subr.bf16.mxu0 %v1840
  %1918 = vmatpush1.bf16.msra.mxu0 %v1839
  %1919 = vmatprep.subr.bf16.mxu0 0
  %1920 = vmatpush2.bf16.msra.mxu0 0
  %1921 = vmatprep.subr.bf16.mxu0 0
  %1922 = vmatpush2.bf16.msra.mxu0 0
  %1923 = vmatprep.subr.bf16.mxu0 0
  %1924 = vmatpush2.bf16.msra.mxu0 0
  %1925 = vmatprep.subr.bf16.mxu0 0
  %1926 = vmatpush2.bf16.msra.mxu0 0
  %1927 = vmatprep.subr.bf16.mxu0 0
  %1928 = vmatpush2.bf16.msra.mxu0 0
  %1929 = vmatprep.subr.bf16.mxu0 0
  %1930 = vmatpush2.bf16.msra.mxu0 0
  %1931 = vmatprep.subr.bf16.mxu0 0
  %1932 = vmatpush2.bf16.msra.mxu0 0
  %1933 = vmatprep.subr.bf16.mxu0 0
  %1934 = vmatpush2.bf16.msra.mxu0 0
  %1935 = vmatprep.mubr.bf16.mxu0 0
  %1936 = vmatmul.mubr.bf16.gmra.mxu0 %v1701
  %v1937 = vpop.f32.mrf.mxu0
  %v1938 = vadd.f32 0.0, %v1937
  %v1939 = vpop.f32.mrf.mxu0
  %v1940 = vadd.f32 0.0, %v1939
  %v1941 = vpop.f32.mrf.mxu0
  %v1942 = vpop.f32.mrf.mxu0
  %1943 = vdwg.mxu0
  %1944 = vmatprep.subr.bf16.mxu0 %v1870
  %1945 = vmatpush1.bf16.msra.mxu0 %v1869
  %1946 = vmatprep.subr.bf16.mxu0 %v1866
  %1947 = vmatpush1.bf16.msra.mxu0 %v1865
  %1948 = vmatprep.subr.bf16.mxu0 %v1862
  %1949 = vmatpush1.bf16.msra.mxu0 %v1861
  %1950 = vmatprep.subr.bf16.mxu0 %v1858
  %1951 = vmatpush1.bf16.msra.mxu0 %v1857
  %1952 = vmatprep.subr.bf16.mxu0 %v1854
  %1953 = vmatpush1.bf16.msra.mxu0 %v1853
  %1954 = vmatprep.subr.bf16.mxu0 %v1850
  %1955 = vmatpush1.bf16.msra.mxu0 %v1849
  %1956 = vmatprep.subr.bf16.mxu0 %v1846
  %1957 = vmatpush1.bf16.msra.mxu0 %v1845
  %1958 = vmatprep.subr.bf16.mxu0 %v1842
  %1959 = vmatpush1.bf16.msra.mxu0 %v1841
  %1960 = vmatprep.subr.bf16.mxu0 0
  %1961 = vmatpush2.bf16.msra.mxu0 0
  %1962 = vmatprep.subr.bf16.mxu0 0
  %1963 = vmatpush2.bf16.msra.mxu0 0
  %1964 = vmatprep.subr.bf16.mxu0 0
  %1965 = vmatpush2.bf16.msra.mxu0 0
  %1966 = vmatprep.subr.bf16.mxu0 0
  %1967 = vmatpush2.bf16.msra.mxu0 0
  %1968 = vmatprep.subr.bf16.mxu0 0
  %1969 = vmatpush2.bf16.msra.mxu0 0
  %1970 = vmatprep.subr.bf16.mxu0 0
  %1971 = vmatpush2.bf16.msra.mxu0 0
  %1972 = vmatprep.subr.bf16.mxu0 0
  %1973 = vmatpush2.bf16.msra.mxu0 0
  %1974 = vmatprep.subr.bf16.mxu0 0
  %1975 = vmatpush2.bf16.msra.mxu0 0
  %1976 = vmatprep.mubr.bf16.mxu0 0
  %1977 = vmatmul.mubr.bf16.gmra.mxu0 %v1701
  %v1978 = vpop.f32.mrf.mxu0
  %v1979 = vadd.f32 0.0, %v1978
  %v1980 = vpop.f32.mrf.mxu0
  %v1981 = vadd.f32 0.0, %v1980
  %v1982 = vpop.f32.mrf.mxu0
  %v1983 = vpop.f32.mrf.mxu0
  %1984 = vdwg.mxu0
  %v1985 = vadd.f32 %v1707, %v1938
  %v1986 = vadd.f32 %v1708, %v1940
  %v1987 = vadd.f32 %v1709, %v1979
  %v1988 = vadd.f32 %v1710, %v1981
  %v1989 = vxor.u32 %v1985, 2147483648
  %v1990 = vmul.f32 %v1989, 1.442695
  %v1991 = vpow.pop %v1990
  %v1992 = vadd.f32 %v1991, 1.0
  %v1993 = vrcp.pop %v1992
  %v1994 = vmul.f32 1.0, %v1993
  %v1995 = vxor.u32 %v1986, 2147483648
  %v1996 = vmul.f32 %v1995, 1.442695
  %v1997 = vpow.pop %v1996
  %v1998 = vadd.f32 %v1997, 1.0
  %v1999 = vrcp.pop %v1998
  %v2000 = vmul.f32 1.0, %v1999
  %v2001 = vtanh.pop %v1987
  %v2002 = vxor.u32 %v1988, 2147483648
  %v2003 = vmul.f32 %v2002, 1.442695
  %v2004 = vpow.pop %v2003
  %v2005 = vadd.f32 %v2004, 1.0
  %v2006 = vrcp.pop %v2005
  %v2007 = vmul.f32 1.0, %v2006
  %v2008 = vmul.f32 %v2000, %v1698
  %v2009 = vmul.f32 %v1994, %v2001
  %v2010 = vadd.f32 %v2008, %v2009
  %v2011 = vtanh.pop %v2010
  %v2012 = vmul.f32 %v2007, %v2011
  %v2013 = vpack.c.bf16 %v2012, %v2012
  %s2014 = scalar_lea.vmem [#allocation3], 16
  %2015 = vst [vmem:[%s2014] sm:$0xf] %v2013
  %s2016 = smul.u32 5, 4
  %s2017 = smul.addr %s2016, 8
  %s2018 = scalar_lea.vmem [#allocation2], %s2017
  %v2019 = vld [vmem:[%s2018] sm:$0xff]
  %v2020 = vld [vmem:[%s2018 + $0x8] sm:$0xff]
  %v2021 = vld [vmem:[%s2018 + $0x10] sm:$0xff]
  %v2022 = vld [vmem:[%s2018 + $0x18] sm:$0xff]
  %v2023 = vld [vmem:[%s2] sm:$0xff]
  %v2024 = vld [vmem:[%s2 + $0x8] sm:$0xff]
  %v2025 = vld [vmem:[%s2 + $0x10] sm:$0xff]
  %v2026 = vld [vmem:[%s2 + $0x18] sm:$0xff]
  %v2027 = vld [vmem:[%s2 + $0x20] sm:$0xff]
  %v2028 = vld [vmem:[%s2 + $0x28] sm:$0xff]
  %v2029 = vld [vmem:[%s2 + $0x30] sm:$0xff]
  %v2030 = vld [vmem:[%s2 + $0x38] sm:$0xff]
  %v2031 = vld [vmem:[%s2 + $0x40] sm:$0xff]
  %v2032 = vld [vmem:[%s2 + $0x48] sm:$0xff]
  %v2033 = vld [vmem:[%s2 + $0x50] sm:$0xff]
  %v2034 = vld [vmem:[%s2 + $0x58] sm:$0xff]
  %v2035 = vld [vmem:[%s2 + $0x60] sm:$0xff]
  %v2036 = vld [vmem:[%s2 + $0x68] sm:$0xff]
  %v2037 = vld [vmem:[%s2 + $0x70] sm:$0xff]
  %v2038 = vld [vmem:[%s2 + $0x78] sm:$0xff]
  %v2039 = vld [vmem:[%s2 + $0x80] sm:$0xff]
  %v2040 = vld [vmem:[%s2 + $0x88] sm:$0xff]
  %v2041 = vld [vmem:[%s2 + $0x90] sm:$0xff]
  %v2042 = vld [vmem:[%s2 + $0x98] sm:$0xff]
  %v2043 = vld [vmem:[%s2 + $0xa0] sm:$0xff]
  %v2044 = vld [vmem:[%s2 + $0xa8] sm:$0xff]
  %v2045 = vld [vmem:[%s2 + $0xb0] sm:$0xff]
  %v2046 = vld [vmem:[%s2 + $0xb8] sm:$0xff]
  %v2047 = vld [vmem:[%s2 + $0xc0] sm:$0xff]
  %v2048 = vld [vmem:[%s2 + $0xc8] sm:$0xff]
  %v2049 = vld [vmem:[%s2 + $0xd0] sm:$0xff]
  %v2050 = vld [vmem:[%s2 + $0xd8] sm:$0xff]
  %v2051 = vld [vmem:[%s2 + $0xe0] sm:$0xff]
  %v2052 = vld [vmem:[%s2 + $0xe8] sm:$0xff]
  %v2053 = vld [vmem:[%s2 + $0xf0] sm:$0xff]
  %v2054 = vld [vmem:[%s2 + $0xf8] sm:$0xff]
  %v2087 = vunpack.c.l.b16 %v2023
  %v2088 = vunpack.c.h.b16 %v2023
  %v2089 = vunpack.c.l.b16 %v2024
  %v2090 = vunpack.c.h.b16 %v2024
  %v2091 = vunpack.c.l.b16 %v2025
  %v2092 = vunpack.c.h.b16 %v2025
  %v2093 = vunpack.c.l.b16 %v2026
  %v2094 = vunpack.c.h.b16 %v2026
  %v2095 = vunpack.c.l.b16 %v2027
  %v2096 = vunpack.c.h.b16 %v2027
  %v2097 = vunpack.c.l.b16 %v2028
  %v2098 = vunpack.c.h.b16 %v2028
  %v2099 = vunpack.c.l.b16 %v2029
  %v2100 = vunpack.c.h.b16 %v2029
  %v2101 = vunpack.c.l.b16 %v2030
  %v2102 = vunpack.c.h.b16 %v2030
  %v2103 = vunpack.c.l.b16 %v2031
  %v2104 = vunpack.c.h.b16 %v2031
  %v2105 = vunpack.c.l.b16 %v2032
  %v2106 = vunpack.c.h.b16 %v2032
  %v2107 = vunpack.c.l.b16 %v2033
  %v2108 = vunpack.c.h.b16 %v2033
  %v2109 = vunpack.c.l.b16 %v2034
  %v2110 = vunpack.c.h.b16 %v2034
  %v2111 = vunpack.c.l.b16 %v2035
  %v2112 = vunpack.c.h.b16 %v2035
  %v2113 = vunpack.c.l.b16 %v2036
  %v2114 = vunpack.c.h.b16 %v2036
  %v2115 = vunpack.c.l.b16 %v2037
  %v2116 = vunpack.c.h.b16 %v2037
  %v2117 = vunpack.c.l.b16 %v2038
  %v2118 = vunpack.c.h.b16 %v2038
  %v2119 = vunpack.c.l.b16 %v2039
  %v2120 = vunpack.c.h.b16 %v2039
  %v2121 = vunpack.c.l.b16 %v2040
  %v2122 = vunpack.c.h.b16 %v2040
  %v2123 = vunpack.c.l.b16 %v2041
  %v2124 = vunpack.c.h.b16 %v2041
  %v2125 = vunpack.c.l.b16 %v2042
  %v2126 = vunpack.c.h.b16 %v2042
  %v2127 = vunpack.c.l.b16 %v2043
  %v2128 = vunpack.c.h.b16 %v2043
  %v2129 = vunpack.c.l.b16 %v2044
  %v2130 = vunpack.c.h.b16 %v2044
  %v2131 = vunpack.c.l.b16 %v2045
  %v2132 = vunpack.c.h.b16 %v2045
  %v2133 = vunpack.c.l.b16 %v2046
  %v2134 = vunpack.c.h.b16 %v2046
  %v2135 = vunpack.c.l.b16 %v2047
  %v2136 = vunpack.c.h.b16 %v2047
  %v2137 = vunpack.c.l.b16 %v2048
  %v2138 = vunpack.c.h.b16 %v2048
  %v2139 = vunpack.c.l.b16 %v2049
  %v2140 = vunpack.c.h.b16 %v2049
  %v2141 = vunpack.c.l.b16 %v2050
  %v2142 = vunpack.c.h.b16 %v2050
  %v2143 = vunpack.c.l.b16 %v2051
  %v2144 = vunpack.c.h.b16 %v2051
  %v2145 = vunpack.c.l.b16 %v2052
  %v2146 = vunpack.c.h.b16 %v2052
  %v2147 = vunpack.c.l.b16 %v2053
  %v2148 = vunpack.c.h.b16 %v2053
  %v2149 = vunpack.c.l.b16 %v2054
  %v2150 = vunpack.c.h.b16 %v2054
  %v2151 = vpack.c.b16 %v2091, %v2087
  %v2152 = vpack.c.b16 %v2092, %v2088
  %v2153 = vpack.c.b16 %v2093, %v2089
  %v2154 = vpack.c.b16 %v2094, %v2090
  %v2155 = vpack.c.b16 %v2099, %v2095
  %v2156 = vpack.c.b16 %v2100, %v2096
  %v2157 = vpack.c.b16 %v2101, %v2097
  %v2158 = vpack.c.b16 %v2102, %v2098
  %v2159 = vpack.c.b16 %v2107, %v2103
  %v2160 = vpack.c.b16 %v2108, %v2104
  %v2161 = vpack.c.b16 %v2109, %v2105
  %v2162 = vpack.c.b16 %v2110, %v2106
  %v2163 = vpack.c.b16 %v2115, %v2111
  %v2164 = vpack.c.b16 %v2116, %v2112
  %v2165 = vpack.c.b16 %v2117, %v2113
  %v2166 = vpack.c.b16 %v2118, %v2114
  %v2167 = vpack.c.b16 %v2123, %v2119
  %v2168 = vpack.c.b16 %v2124, %v2120
  %v2169 = vpack.c.b16 %v2125, %v2121
  %v2170 = vpack.c.b16 %v2126, %v2122
  %v2171 = vpack.c.b16 %v2131, %v2127
  %v2172 = vpack.c.b16 %v2132, %v2128
  %v2173 = vpack.c.b16 %v2133, %v2129
  %v2174 = vpack.c.b16 %v2134, %v2130
  %v2175 = vpack.c.b16 %v2139, %v2135
  %v2176 = vpack.c.b16 %v2140, %v2136
  %v2177 = vpack.c.b16 %v2141, %v2137
  %v2178 = vpack.c.b16 %v2142, %v2138
  %v2179 = vpack.c.b16 %v2147, %v2143
  %v2180 = vpack.c.b16 %v2148, %v2144
  %v2181 = vpack.c.b16 %v2149, %v2145
  %v2182 = vpack.c.b16 %v2150, %v2146
  %2215 = vmatprep.subr.bf16.mxu0 %v2180
  %2216 = vmatpush1.bf16.msra.mxu0 %v2179
  %2217 = vmatprep.subr.bf16.mxu0 %v2176
  %2218 = vmatpush1.bf16.msra.mxu0 %v2175
  %2219 = vmatprep.subr.bf16.mxu0 %v2172
  %2220 = vmatpush1.bf16.msra.mxu0 %v2171
  %2221 = vmatprep.subr.bf16.mxu0 %v2168
  %2222 = vmatpush1.bf16.msra.mxu0 %v2167
  %2223 = vmatprep.subr.bf16.mxu0 %v2164
  %2224 = vmatpush1.bf16.msra.mxu0 %v2163
  %2225 = vmatprep.subr.bf16.mxu0 %v2160
  %2226 = vmatpush1.bf16.msra.mxu0 %v2159
  %2227 = vmatprep.subr.bf16.mxu0 %v2156
  %2228 = vmatpush1.bf16.msra.mxu0 %v2155
  %2229 = vmatprep.subr.bf16.mxu0 %v2152
  %2230 = vmatpush1.bf16.msra.mxu0 %v2151
  %2231 = vmatprep.subr.bf16.mxu0 0
  %2232 = vmatpush2.bf16.msra.mxu0 0
  %2233 = vmatprep.subr.bf16.mxu0 0
  %2234 = vmatpush2.bf16.msra.mxu0 0
  %2235 = vmatprep.subr.bf16.mxu0 0
  %2236 = vmatpush2.bf16.msra.mxu0 0
  %2237 = vmatprep.subr.bf16.mxu0 0
  %2238 = vmatpush2.bf16.msra.mxu0 0
  %2239 = vmatprep.subr.bf16.mxu0 0
  %2240 = vmatpush2.bf16.msra.mxu0 0
  %2241 = vmatprep.subr.bf16.mxu0 0
  %2242 = vmatpush2.bf16.msra.mxu0 0
  %2243 = vmatprep.subr.bf16.mxu0 0
  %2244 = vmatpush2.bf16.msra.mxu0 0
  %2245 = vmatprep.subr.bf16.mxu0 0
  %2246 = vmatpush2.bf16.msra.mxu0 0
  %2247 = vmatprep.mubr.bf16.mxu0 0
  %2248 = vmatmul.mubr.bf16.gmra.mxu0 %v2013
  %v2249 = vpop.f32.mrf.mxu0
  %v2250 = vadd.f32 0.0, %v2249
  %v2251 = vpop.f32.mrf.mxu0
  %v2252 = vadd.f32 0.0, %v2251
  %v2253 = vpop.f32.mrf.mxu0
  %v2254 = vpop.f32.mrf.mxu0
  %2255 = vdwg.mxu0
  %2256 = vmatprep.subr.bf16.mxu0 %v2182
  %2257 = vmatpush1.bf16.msra.mxu0 %v2181
  %2258 = vmatprep.subr.bf16.mxu0 %v2178
  %2259 = vmatpush1.bf16.msra.mxu0 %v2177
  %2260 = vmatprep.subr.bf16.mxu0 %v2174
  %2261 = vmatpush1.bf16.msra.mxu0 %v2173
  %2262 = vmatprep.subr.bf16.mxu0 %v2170
  %2263 = vmatpush1.bf16.msra.mxu0 %v2169
  %2264 = vmatprep.subr.bf16.mxu0 %v2166
  %2265 = vmatpush1.bf16.msra.mxu0 %v2165
  %2266 = vmatprep.subr.bf16.mxu0 %v2162
  %2267 = vmatpush1.bf16.msra.mxu0 %v2161
  %2268 = vmatprep.subr.bf16.mxu0 %v2158
  %2269 = vmatpush1.bf16.msra.mxu0 %v2157
  %2270 = vmatprep.subr.bf16.mxu0 %v2154
  %2271 = vmatpush1.bf16.msra.mxu0 %v2153
  %2272 = vmatprep.subr.bf16.mxu0 0
  %2273 = vmatpush2.bf16.msra.mxu0 0
  %2274 = vmatprep.subr.bf16.mxu0 0
  %2275 = vmatpush2.bf16.msra.mxu0 0
  %2276 = vmatprep.subr.bf16.mxu0 0
  %2277 = vmatpush2.bf16.msra.mxu0 0
  %2278 = vmatprep.subr.bf16.mxu0 0
  %2279 = vmatpush2.bf16.msra.mxu0 0
  %2280 = vmatprep.subr.bf16.mxu0 0
  %2281 = vmatpush2.bf16.msra.mxu0 0
  %2282 = vmatprep.subr.bf16.mxu0 0
  %2283 = vmatpush2.bf16.msra.mxu0 0
  %2284 = vmatprep.subr.bf16.mxu0 0
  %2285 = vmatpush2.bf16.msra.mxu0 0
  %2286 = vmatprep.subr.bf16.mxu0 0
  %2287 = vmatpush2.bf16.msra.mxu0 0
  %2288 = vmatprep.mubr.bf16.mxu0 0
  %2289 = vmatmul.mubr.bf16.gmra.mxu0 %v2013
  %v2290 = vpop.f32.mrf.mxu0
  %v2291 = vadd.f32 0.0, %v2290
  %v2292 = vpop.f32.mrf.mxu0
  %v2293 = vadd.f32 0.0, %v2292
  %v2294 = vpop.f32.mrf.mxu0
  %v2295 = vpop.f32.mrf.mxu0
  %2296 = vdwg.mxu0
  %v2297 = vadd.f32 %v2019, %v2250
  %v2298 = vadd.f32 %v2020, %v2252
  %v2299 = vadd.f32 %v2021, %v2291
  %v2300 = vadd.f32 %v2022, %v2293
  %v2301 = vxor.u32 %v2297, 2147483648
  %v2302 = vmul.f32 %v2301, 1.442695
  %v2303 = vpow.pop %v2302
  %v2304 = vadd.f32 %v2303, 1.0
  %v2305 = vrcp.pop %v2304
  %v2306 = vmul.f32 1.0, %v2305
  %v2307 = vxor.u32 %v2298, 2147483648
  %v2308 = vmul.f32 %v2307, 1.442695
  %v2309 = vpow.pop %v2308
  %v2310 = vadd.f32 %v2309, 1.0
  %v2311 = vrcp.pop %v2310
  %v2312 = vmul.f32 1.0, %v2311
  %v2313 = vtanh.pop %v2299
  %v2314 = vxor.u32 %v2300, 2147483648
  %v2315 = vmul.f32 %v2314, 1.442695
  %v2316 = vpow.pop %v2315
  %v2317 = vadd.f32 %v2316, 1.0
  %v2318 = vrcp.pop %v2317
  %v2319 = vmul.f32 1.0, %v2318
  %v2320 = vmul.f32 %v2312, %v2010
  %v2321 = vmul.f32 %v2306, %v2313
  %v2322 = vadd.f32 %v2320, %v2321
  %v2323 = vtanh.pop %v2322
  %v2324 = vmul.f32 %v2319, %v2323
  %v2325 = vpack.c.bf16 %v2324, %v2324
  %s2326 = scalar_lea.vmem [#allocation3], 20
  %2327 = vst [vmem:[%s2326] sm:$0xf] %v2325
  %s2328 = smul.u32 6, 4
  %s2329 = smul.addr %s2328, 8
  %s2330 = scalar_lea.vmem [#allocation2], %s2329
  %v2331 = vld [vmem:[%s2330] sm:$0xff]
  %v2332 = vld [vmem:[%s2330 + $0x8] sm:$0xff]
  %v2333 = vld [vmem:[%s2330 + $0x10] sm:$0xff]
  %v2334 = vld [vmem:[%s2330 + $0x18] sm:$0xff]
  %v2335 = vld [vmem:[%s2] sm:$0xff]
  %v2336 = vld [vmem:[%s2 + $0x8] sm:$0xff]
  %v2337 = vld [vmem:[%s2 + $0x10] sm:$0xff]
  %v2338 = vld [vmem:[%s2 + $0x18] sm:$0xff]
  %v2339 = vld [vmem:[%s2 + $0x20] sm:$0xff]
  %v2340 = vld [vmem:[%s2 + $0x28] sm:$0xff]
  %v2341 = vld [vmem:[%s2 + $0x30] sm:$0xff]
  %v2342 = vld [vmem:[%s2 + $0x38] sm:$0xff]
  %v2343 = vld [vmem:[%s2 + $0x40] sm:$0xff]
  %v2344 = vld [vmem:[%s2 + $0x48] sm:$0xff]
  %v2345 = vld [vmem:[%s2 + $0x50] sm:$0xff]
  %v2346 = vld [vmem:[%s2 + $0x58] sm:$0xff]
  %v2347 = vld [vmem:[%s2 + $0x60] sm:$0xff]
  %v2348 = vld [vmem:[%s2 + $0x68] sm:$0xff]
  %v2349 = vld [vmem:[%s2 + $0x70] sm:$0xff]
  %v2350 = vld [vmem:[%s2 + $0x78] sm:$0xff]
  %v2351 = vld [vmem:[%s2 + $0x80] sm:$0xff]
  %v2352 = vld [vmem:[%s2 + $0x88] sm:$0xff]
  %v2353 = vld [vmem:[%s2 + $0x90] sm:$0xff]
  %v2354 = vld [vmem:[%s2 + $0x98] sm:$0xff]
  %v2355 = vld [vmem:[%s2 + $0xa0] sm:$0xff]
  %v2356 = vld [vmem:[%s2 + $0xa8] sm:$0xff]
  %v2357 = vld [vmem:[%s2 + $0xb0] sm:$0xff]
  %v2358 = vld [vmem:[%s2 + $0xb8] sm:$0xff]
  %v2359 = vld [vmem:[%s2 + $0xc0] sm:$0xff]
  %v2360 = vld [vmem:[%s2 + $0xc8] sm:$0xff]
  %v2361 = vld [vmem:[%s2 + $0xd0] sm:$0xff]
  %v2362 = vld [vmem:[%s2 + $0xd8] sm:$0xff]
  %v2363 = vld [vmem:[%s2 + $0xe0] sm:$0xff]
  %v2364 = vld [vmem:[%s2 + $0xe8] sm:$0xff]
  %v2365 = vld [vmem:[%s2 + $0xf0] sm:$0xff]
  %v2366 = vld [vmem:[%s2 + $0xf8] sm:$0xff]
  %v2399 = vunpack.c.l.b16 %v2335
  %v2400 = vunpack.c.h.b16 %v2335
  %v2401 = vunpack.c.l.b16 %v2336
  %v2402 = vunpack.c.h.b16 %v2336
  %v2403 = vunpack.c.l.b16 %v2337
  %v2404 = vunpack.c.h.b16 %v2337
  %v2405 = vunpack.c.l.b16 %v2338
  %v2406 = vunpack.c.h.b16 %v2338
  %v2407 = vunpack.c.l.b16 %v2339
  %v2408 = vunpack.c.h.b16 %v2339
  %v2409 = vunpack.c.l.b16 %v2340
  %v2410 = vunpack.c.h.b16 %v2340
  %v2411 = vunpack.c.l.b16 %v2341
  %v2412 = vunpack.c.h.b16 %v2341
  %v2413 = vunpack.c.l.b16 %v2342
  %v2414 = vunpack.c.h.b16 %v2342
  %v2415 = vunpack.c.l.b16 %v2343
  %v2416 = vunpack.c.h.b16 %v2343
  %v2417 = vunpack.c.l.b16 %v2344
  %v2418 = vunpack.c.h.b16 %v2344
  %v2419 = vunpack.c.l.b16 %v2345
  %v2420 = vunpack.c.h.b16 %v2345
  %v2421 = vunpack.c.l.b16 %v2346
  %v2422 = vunpack.c.h.b16 %v2346
  %v2423 = vunpack.c.l.b16 %v2347
  %v2424 = vunpack.c.h.b16 %v2347
  %v2425 = vunpack.c.l.b16 %v2348
  %v2426 = vunpack.c.h.b16 %v2348
  %v2427 = vunpack.c.l.b16 %v2349
  %v2428 = vunpack.c.h.b16 %v2349
  %v2429 = vunpack.c.l.b16 %v2350
  %v2430 = vunpack.c.h.b16 %v2350
  %v2431 = vunpack.c.l.b16 %v2351
  %v2432 = vunpack.c.h.b16 %v2351
  %v2433 = vunpack.c.l.b16 %v2352
  %v2434 = vunpack.c.h.b16 %v2352
  %v2435 = vunpack.c.l.b16 %v2353
  %v2436 = vunpack.c.h.b16 %v2353
  %v2437 = vunpack.c.l.b16 %v2354
  %v2438 = vunpack.c.h.b16 %v2354
  %v2439 = vunpack.c.l.b16 %v2355
  %v2440 = vunpack.c.h.b16 %v2355
  %v2441 = vunpack.c.l.b16 %v2356
  %v2442 = vunpack.c.h.b16 %v2356
  %v2443 = vunpack.c.l.b16 %v2357
  %v2444 = vunpack.c.h.b16 %v2357
  %v2445 = vunpack.c.l.b16 %v2358
  %v2446 = vunpack.c.h.b16 %v2358
  %v2447 = vunpack.c.l.b16 %v2359
  %v2448 = vunpack.c.h.b16 %v2359
  %v2449 = vunpack.c.l.b16 %v2360
  %v2450 = vunpack.c.h.b16 %v2360
  %v2451 = vunpack.c.l.b16 %v2361
  %v2452 = vunpack.c.h.b16 %v2361
  %v2453 = vunpack.c.l.b16 %v2362
  %v2454 = vunpack.c.h.b16 %v2362
  %v2455 = vunpack.c.l.b16 %v2363
  %v2456 = vunpack.c.h.b16 %v2363
  %v2457 = vunpack.c.l.b16 %v2364
  %v2458 = vunpack.c.h.b16 %v2364
  %v2459 = vunpack.c.l.b16 %v2365
  %v2460 = vunpack.c.h.b16 %v2365
  %v2461 = vunpack.c.l.b16 %v2366
  %v2462 = vunpack.c.h.b16 %v2366
  %v2463 = vpack.c.b16 %v2403, %v2399
  %v2464 = vpack.c.b16 %v2404, %v2400
  %v2465 = vpack.c.b16 %v2405, %v2401
  %v2466 = vpack.c.b16 %v2406, %v2402
  %v2467 = vpack.c.b16 %v2411, %v2407
  %v2468 = vpack.c.b16 %v2412, %v2408
  %v2469 = vpack.c.b16 %v2413, %v2409
  %v2470 = vpack.c.b16 %v2414, %v2410
  %v2471 = vpack.c.b16 %v2419, %v2415
  %v2472 = vpack.c.b16 %v2420, %v2416
  %v2473 = vpack.c.b16 %v2421, %v2417
  %v2474 = vpack.c.b16 %v2422, %v2418
  %v2475 = vpack.c.b16 %v2427, %v2423
  %v2476 = vpack.c.b16 %v2428, %v2424
  %v2477 = vpack.c.b16 %v2429, %v2425
  %v2478 = vpack.c.b16 %v2430, %v2426
  %v2479 = vpack.c.b16 %v2435, %v2431
  %v2480 = vpack.c.b16 %v2436, %v2432
  %v2481 = vpack.c.b16 %v2437, %v2433
  %v2482 = vpack.c.b16 %v2438, %v2434
  %v2483 = vpack.c.b16 %v2443, %v2439
  %v2484 = vpack.c.b16 %v2444, %v2440
  %v2485 = vpack.c.b16 %v2445, %v2441
  %v2486 = vpack.c.b16 %v2446, %v2442
  %v2487 = vpack.c.b16 %v2451, %v2447
  %v2488 = vpack.c.b16 %v2452, %v2448
  %v2489 = vpack.c.b16 %v2453, %v2449
  %v2490 = vpack.c.b16 %v2454, %v2450
  %v2491 = vpack.c.b16 %v2459, %v2455
  %v2492 = vpack.c.b16 %v2460, %v2456
  %v2493 = vpack.c.b16 %v2461, %v2457
  %v2494 = vpack.c.b16 %v2462, %v2458
  %2527 = vmatprep.subr.bf16.mxu0 %v2492
  %2528 = vmatpush1.bf16.msra.mxu0 %v2491
  %2529 = vmatprep.subr.bf16.mxu0 %v2488
  %2530 = vmatpush1.bf16.msra.mxu0 %v2487
  %2531 = vmatprep.subr.bf16.mxu0 %v2484
  %2532 = vmatpush1.bf16.msra.mxu0 %v2483
  %2533 = vmatprep.subr.bf16.mxu0 %v2480
  %2534 = vmatpush1.bf16.msra.mxu0 %v2479
  %2535 = vmatprep.subr.bf16.mxu0 %v2476
  %2536 = vmatpush1.bf16.msra.mxu0 %v2475
  %2537 = vmatprep.subr.bf16.mxu0 %v2472
  %2538 = vmatpush1.bf16.msra.mxu0 %v2471
  %2539 = vmatprep.subr.bf16.mxu0 %v2468
  %2540 = vmatpush1.bf16.msra.mxu0 %v2467
  %2541 = vmatprep.subr.bf16.mxu0 %v2464
  %2542 = vmatpush1.bf16.msra.mxu0 %v2463
  %2543 = vmatprep.subr.bf16.mxu0 0
  %2544 = vmatpush2.bf16.msra.mxu0 0
  %2545 = vmatprep.subr.bf16.mxu0 0
  %2546 = vmatpush2.bf16.msra.mxu0 0
  %2547 = vmatprep.subr.bf16.mxu0 0
  %2548 = vmatpush2.bf16.msra.mxu0 0
  %2549 = vmatprep.subr.bf16.mxu0 0
  %2550 = vmatpush2.bf16.msra.mxu0 0
  %2551 = vmatprep.subr.bf16.mxu0 0
  %2552 = vmatpush2.bf16.msra.mxu0 0
  %2553 = vmatprep.subr.bf16.mxu0 0
  %2554 = vmatpush2.bf16.msra.mxu0 0
  %2555 = vmatprep.subr.bf16.mxu0 0
  %2556 = vmatpush2.bf16.msra.mxu0 0
  %2557 = vmatprep.subr.bf16.mxu0 0
  %2558 = vmatpush2.bf16.msra.mxu0 0
  %2559 = vmatprep.mubr.bf16.mxu0 0
  %2560 = vmatmul.mubr.bf16.gmra.mxu0 %v2325
  %v2561 = vpop.f32.mrf.mxu0
  %v2562 = vadd.f32 0.0, %v2561
  %v2563 = vpop.f32.mrf.mxu0
  %v2564 = vadd.f32 0.0, %v2563
  %v2565 = vpop.f32.mrf.mxu0
  %v2566 = vpop.f32.mrf.mxu0
  %2567 = vdwg.mxu0
  %2568 = vmatprep.subr.bf16.mxu0 %v2494
  %2569 = vmatpush1.bf16.msra.mxu0 %v2493
  %2570 = vmatprep.subr.bf16.mxu0 %v2490
  %2571 = vmatpush1.bf16.msra.mxu0 %v2489
  %2572 = vmatprep.subr.bf16.mxu0 %v2486
  %2573 = vmatpush1.bf16.msra.mxu0 %v2485
  %2574 = vmatprep.subr.bf16.mxu0 %v2482
  %2575 = vmatpush1.bf16.msra.mxu0 %v2481
  %2576 = vmatprep.subr.bf16.mxu0 %v2478
  %2577 = vmatpush1.bf16.msra.mxu0 %v2477
  %2578 = vmatprep.subr.bf16.mxu0 %v2474
  %2579 = vmatpush1.bf16.msra.mxu0 %v2473
  %2580 = vmatprep.subr.bf16.mxu0 %v2470
  %2581 = vmatpush1.bf16.msra.mxu0 %v2469
  %2582 = vmatprep.subr.bf16.mxu0 %v2466
  %2583 = vmatpush1.bf16.msra.mxu0 %v2465
  %2584 = vmatprep.subr.bf16.mxu0 0
  %2585 = vmatpush2.bf16.msra.mxu0 0
  %2586 = vmatprep.subr.bf16.mxu0 0
  %2587 = vmatpush2.bf16.msra.mxu0 0
  %2588 = vmatprep.subr.bf16.mxu0 0
  %2589 = vmatpush2.bf16.msra.mxu0 0
  %2590 = vmatprep.subr.bf16.mxu0 0
  %2591 = vmatpush2.bf16.msra.mxu0 0
  %2592 = vmatprep.subr.bf16.mxu0 0
  %2593 = vmatpush2.bf16.msra.mxu0 0
  %2594 = vmatprep.subr.bf16.mxu0 0
  %2595 = vmatpush2.bf16.msra.mxu0 0
  %2596 = vmatprep.subr.bf16.mxu0 0
  %2597 = vmatpush2.bf16.msra.mxu0 0
  %2598 = vmatprep.subr.bf16.mxu0 0
  %2599 = vmatpush2.bf16.msra.mxu0 0
  %2600 = vmatprep.mubr.bf16.mxu0 0
  %2601 = vmatmul.mubr.bf16.gmra.mxu0 %v2325
  %v2602 = vpop.f32.mrf.mxu0
  %v2603 = vadd.f32 0.0, %v2602
  %v2604 = vpop.f32.mrf.mxu0
  %v2605 = vadd.f32 0.0, %v2604
  %v2606 = vpop.f32.mrf.mxu0
  %v2607 = vpop.f32.mrf.mxu0
  %2608 = vdwg.mxu0
  %v2609 = vadd.f32 %v2331, %v2562
  %v2610 = vadd.f32 %v2332, %v2564
  %v2611 = vadd.f32 %v2333, %v2603
  %v2612 = vadd.f32 %v2334, %v2605
  %v2613 = vxor.u32 %v2609, 2147483648
  %v2614 = vmul.f32 %v2613, 1.442695
  %v2615 = vpow.pop %v2614
  %v2616 = vadd.f32 %v2615, 1.0
  %v2617 = vrcp.pop %v2616
  %v2618 = vmul.f32 1.0, %v2617
  %v2619 = vxor.u32 %v2610, 2147483648
  %v2620 = vmul.f32 %v2619, 1.442695
  %v2621 = vpow.pop %v2620
  %v2622 = vadd.f32 %v2621, 1.0
  %v2623 = vrcp.pop %v2622
  %v2624 = vmul.f32 1.0, %v2623
  %v2625 = vtanh.pop %v2611
  %v2626 = vxor.u32 %v2612, 2147483648
  %v2627 = vmul.f32 %v2626, 1.442695
  %v2628 = vpow.pop %v2627
  %v2629 = vadd.f32 %v2628, 1.0
  %v2630 = vrcp.pop %v2629
  %v2631 = vmul.f32 1.0, %v2630
  %v2632 = vmul.f32 %v2624, %v2322
  %v2633 = vmul.f32 %v2618, %v2625
  %v2634 = vadd.f32 %v2632, %v2633
  %v2635 = vtanh.pop %v2634
  %v2636 = vmul.f32 %v2631, %v2635
  %v2637 = vpack.c.bf16 %v2636, %v2636
  %s2638 = scalar_lea.vmem [#allocation3], 24
  %2639 = vst [vmem:[%s2638] sm:$0xf] %v2637
  %s2640 = smul.u32 7, 4
  %s2641 = smul.addr %s2640, 8
  %s2642 = scalar_lea.vmem [#allocation2], %s2641
  %v2643 = vld [vmem:[%s2642] sm:$0xff]
  %v2644 = vld [vmem:[%s2642 + $0x8] sm:$0xff]
  %v2645 = vld [vmem:[%s2642 + $0x10] sm:$0xff]
  %v2646 = vld [vmem:[%s2642 + $0x18] sm:$0xff]
  %v2647 = vld [vmem:[%s2] sm:$0xff]
  %v2648 = vld [vmem:[%s2 + $0x8] sm:$0xff]
  %v2649 = vld [vmem:[%s2 + $0x10] sm:$0xff]
  %v2650 = vld [vmem:[%s2 + $0x18] sm:$0xff]
  %v2651 = vld [vmem:[%s2 + $0x20] sm:$0xff]
  %v2652 = vld [vmem:[%s2 + $0x28] sm:$0xff]
  %v2653 = vld [vmem:[%s2 + $0x30] sm:$0xff]
  %v2654 = vld [vmem:[%s2 + $0x38] sm:$0xff]
  %v2655 = vld [vmem:[%s2 + $0x40] sm:$0xff]
  %v2656 = vld [vmem:[%s2 + $0x48] sm:$0xff]
  %v2657 = vld [vmem:[%s2 + $0x50] sm:$0xff]
  %v2658 = vld [vmem:[%s2 + $0x58] sm:$0xff]
  %v2659 = vld [vmem:[%s2 + $0x60] sm:$0xff]
  %v2660 = vld [vmem:[%s2 + $0x68] sm:$0xff]
  %v2661 = vld [vmem:[%s2 + $0x70] sm:$0xff]
  %v2662 = vld [vmem:[%s2 + $0x78] sm:$0xff]
  %v2663 = vld [vmem:[%s2 + $0x80] sm:$0xff]
  %v2664 = vld [vmem:[%s2 + $0x88] sm:$0xff]
  %v2665 = vld [vmem:[%s2 + $0x90] sm:$0xff]
  %v2666 = vld [vmem:[%s2 + $0x98] sm:$0xff]
  %v2667 = vld [vmem:[%s2 + $0xa0] sm:$0xff]
  %v2668 = vld [vmem:[%s2 + $0xa8] sm:$0xff]
  %v2669 = vld [vmem:[%s2 + $0xb0] sm:$0xff]
  %v2670 = vld [vmem:[%s2 + $0xb8] sm:$0xff]
  %v2671 = vld [vmem:[%s2 + $0xc0] sm:$0xff]
  %v2672 = vld [vmem:[%s2 + $0xc8] sm:$0xff]
  %v2673 = vld [vmem:[%s2 + $0xd0] sm:$0xff]
  %v2674 = vld [vmem:[%s2 + $0xd8] sm:$0xff]
  %v2675 = vld [vmem:[%s2 + $0xe0] sm:$0xff]
  %v2676 = vld [vmem:[%s2 + $0xe8] sm:$0xff]
  %v2677 = vld [vmem:[%s2 + $0xf0] sm:$0xff]
  %v2678 = vld [vmem:[%s2 + $0xf8] sm:$0xff]
  %v2711 = vunpack.c.l.b16 %v2647
  %v2712 = vunpack.c.h.b16 %v2647
  %v2713 = vunpack.c.l.b16 %v2648
  %v2714 = vunpack.c.h.b16 %v2648
  %v2715 = vunpack.c.l.b16 %v2649
  %v2716 = vunpack.c.h.b16 %v2649
  %v2717 = vunpack.c.l.b16 %v2650
  %v2718 = vunpack.c.h.b16 %v2650
  %v2719 = vunpack.c.l.b16 %v2651
  %v2720 = vunpack.c.h.b16 %v2651
  %v2721 = vunpack.c.l.b16 %v2652
  %v2722 = vunpack.c.h.b16 %v2652
  %v2723 = vunpack.c.l.b16 %v2653
  %v2724 = vunpack.c.h.b16 %v2653
  %v2725 = vunpack.c.l.b16 %v2654
  %v2726 = vunpack.c.h.b16 %v2654
  %v2727 = vunpack.c.l.b16 %v2655
  %v2728 = vunpack.c.h.b16 %v2655
  %v2729 = vunpack.c.l.b16 %v2656
  %v2730 = vunpack.c.h.b16 %v2656
  %v2731 = vunpack.c.l.b16 %v2657
  %v2732 = vunpack.c.h.b16 %v2657
  %v2733 = vunpack.c.l.b16 %v2658
  %v2734 = vunpack.c.h.b16 %v2658
  %v2735 = vunpack.c.l.b16 %v2659
  %v2736 = vunpack.c.h.b16 %v2659
  %v2737 = vunpack.c.l.b16 %v2660
  %v2738 = vunpack.c.h.b16 %v2660
  %v2739 = vunpack.c.l.b16 %v2661
  %v2740 = vunpack.c.h.b16 %v2661
  %v2741 = vunpack.c.l.b16 %v2662
  %v2742 = vunpack.c.h.b16 %v2662
  %v2743 = vunpack.c.l.b16 %v2663
  %v2744 = vunpack.c.h.b16 %v2663
  %v2745 = vunpack.c.l.b16 %v2664
  %v2746 = vunpack.c.h.b16 %v2664
  %v2747 = vunpack.c.l.b16 %v2665
  %v2748 = vunpack.c.h.b16 %v2665
  %v2749 = vunpack.c.l.b16 %v2666
  %v2750 = vunpack.c.h.b16 %v2666
  %v2751 = vunpack.c.l.b16 %v2667
  %v2752 = vunpack.c.h.b16 %v2667
  %v2753 = vunpack.c.l.b16 %v2668
  %v2754 = vunpack.c.h.b16 %v2668
  %v2755 = vunpack.c.l.b16 %v2669
  %v2756 = vunpack.c.h.b16 %v2669
  %v2757 = vunpack.c.l.b16 %v2670
  %v2758 = vunpack.c.h.b16 %v2670
  %v2759 = vunpack.c.l.b16 %v2671
  %v2760 = vunpack.c.h.b16 %v2671
  %v2761 = vunpack.c.l.b16 %v2672
  %v2762 = vunpack.c.h.b16 %v2672
  %v2763 = vunpack.c.l.b16 %v2673
  %v2764 = vunpack.c.h.b16 %v2673
  %v2765 = vunpack.c.l.b16 %v2674
  %v2766 = vunpack.c.h.b16 %v2674
  %v2767 = vunpack.c.l.b16 %v2675
  %v2768 = vunpack.c.h.b16 %v2675
  %v2769 = vunpack.c.l.b16 %v2676
  %v2770 = vunpack.c.h.b16 %v2676
  %v2771 = vunpack.c.l.b16 %v2677
  %v2772 = vunpack.c.h.b16 %v2677
  %v2773 = vunpack.c.l.b16 %v2678
  %v2774 = vunpack.c.h.b16 %v2678
  %v2775 = vpack.c.b16 %v2715, %v2711
  %v2776 = vpack.c.b16 %v2716, %v2712
  %v2777 = vpack.c.b16 %v2717, %v2713
  %v2778 = vpack.c.b16 %v2718, %v2714
  %v2779 = vpack.c.b16 %v2723, %v2719
  %v2780 = vpack.c.b16 %v2724, %v2720
  %v2781 = vpack.c.b16 %v2725, %v2721
  %v2782 = vpack.c.b16 %v2726, %v2722
  %v2783 = vpack.c.b16 %v2731, %v2727
  %v2784 = vpack.c.b16 %v2732, %v2728
  %v2785 = vpack.c.b16 %v2733, %v2729
  %v2786 = vpack.c.b16 %v2734, %v2730
  %v2787 = vpack.c.b16 %v2739, %v2735
  %v2788 = vpack.c.b16 %v2740, %v2736
  %v2789 = vpack.c.b16 %v2741, %v2737
  %v2790 = vpack.c.b16 %v2742, %v2738
  %v2791 = vpack.c.b16 %v2747, %v2743
  %v2792 = vpack.c.b16 %v2748, %v2744
  %v2793 = vpack.c.b16 %v2749, %v2745
  %v2794 = vpack.c.b16 %v2750, %v2746
  %v2795 = vpack.c.b16 %v2755, %v2751
  %v2796 = vpack.c.b16 %v2756, %v2752
  %v2797 = vpack.c.b16 %v2757, %v2753
  %v2798 = vpack.c.b16 %v2758, %v2754
  %v2799 = vpack.c.b16 %v2763, %v2759
  %v2800 = vpack.c.b16 %v2764, %v2760
  %v2801 = vpack.c.b16 %v2765, %v2761
  %v2802 = vpack.c.b16 %v2766, %v2762
  %v2803 = vpack.c.b16 %v2771, %v2767
  %v2804 = vpack.c.b16 %v2772, %v2768
  %v2805 = vpack.c.b16 %v2773, %v2769
  %v2806 = vpack.c.b16 %v2774, %v2770
  %2839 = vmatprep.subr.bf16.mxu0 %v2804
  %2840 = vmatpush1.bf16.msra.mxu0 %v2803
  %2841 = vmatprep.subr.bf16.mxu0 %v2800
  %2842 = vmatpush1.bf16.msra.mxu0 %v2799
  %2843 = vmatprep.subr.bf16.mxu0 %v2796
  %2844 = vmatpush1.bf16.msra.mxu0 %v2795
  %2845 = vmatprep.subr.bf16.mxu0 %v2792
  %2846 = vmatpush1.bf16.msra.mxu0 %v2791
  %2847 = vmatprep.subr.bf16.mxu0 %v2788
  %2848 = vmatpush1.bf16.msra.mxu0 %v2787
  %2849 = vmatprep.subr.bf16.mxu0 %v2784
  %2850 = vmatpush1.bf16.msra.mxu0 %v2783
  %2851 = vmatprep.subr.bf16.mxu0 %v2780
  %2852 = vmatpush1.bf16.msra.mxu0 %v2779
  %2853 = vmatprep.subr.bf16.mxu0 %v2776
  %2854 = vmatpush1.bf16.msra.mxu0 %v2775
  %2855 = vmatprep.subr.bf16.mxu0 0
  %2856 = vmatpush2.bf16.msra.mxu0 0
  %2857 = vmatprep.subr.bf16.mxu0 0
  %2858 = vmatpush2.bf16.msra.mxu0 0
  %2859 = vmatprep.subr.bf16.mxu0 0
  %2860 = vmatpush2.bf16.msra.mxu0 0
  %2861 = vmatprep.subr.bf16.mxu0 0
  %2862 = vmatpush2.bf16.msra.mxu0 0
  %2863 = vmatprep.subr.bf16.mxu0 0
  %2864 = vmatpush2.bf16.msra.mxu0 0
  %2865 = vmatprep.subr.bf16.mxu0 0
  %2866 = vmatpush2.bf16.msra.mxu0 0
  %2867 = vmatprep.subr.bf16.mxu0 0
  %2868 = vmatpush2.bf16.msra.mxu0 0
  %2869 = vmatprep.subr.bf16.mxu0 0
  %2870 = vmatpush2.bf16.msra.mxu0 0
  %2871 = vmatprep.mubr.bf16.mxu0 0
  %2872 = vmatmul.mubr.bf16.gmra.mxu0 %v2637
  %v2873 = vpop.f32.mrf.mxu0
  %v2874 = vadd.f32 0.0, %v2873
  %v2875 = vpop.f32.mrf.mxu0
  %v2876 = vadd.f32 0.0, %v2875
  %v2877 = vpop.f32.mrf.mxu0
  %v2878 = vpop.f32.mrf.mxu0
  %2879 = vdwg.mxu0
  %2880 = vmatprep.subr.bf16.mxu0 %v2806
  %2881 = vmatpush1.bf16.msra.mxu0 %v2805
  %2882 = vmatprep.subr.bf16.mxu0 %v2802
  %2883 = vmatpush1.bf16.msra.mxu0 %v2801
  %2884 = vmatprep.subr.bf16.mxu0 %v2798
  %2885 = vmatpush1.bf16.msra.mxu0 %v2797
  %2886 = vmatprep.subr.bf16.mxu0 %v2794
  %2887 = vmatpush1.bf16.msra.mxu0 %v2793
  %2888 = vmatprep.subr.bf16.mxu0 %v2790
  %2889 = vmatpush1.bf16.msra.mxu0 %v2789
  %2890 = vmatprep.subr.bf16.mxu0 %v2786
  %2891 = vmatpush1.bf16.msra.mxu0 %v2785
  %2892 = vmatprep.subr.bf16.mxu0 %v2782
  %2893 = vmatpush1.bf16.msra.mxu0 %v2781
  %2894 = vmatprep.subr.bf16.mxu0 %v2778
  %2895 = vmatpush1.bf16.msra.mxu0 %v2777
  %2896 = vmatprep.subr.bf16.mxu0 0
  %2897 = vmatpush2.bf16.msra.mxu0 0
  %2898 = vmatprep.subr.bf16.mxu0 0
  %2899 = vmatpush2.bf16.msra.mxu0 0
  %2900 = vmatprep.subr.bf16.mxu0 0
  %2901 = vmatpush2.bf16.msra.mxu0 0
  %2902 = vmatprep.subr.bf16.mxu0 0
  %2903 = vmatpush2.bf16.msra.mxu0 0
  %2904 = vmatprep.subr.bf16.mxu0 0
  %2905 = vmatpush2.bf16.msra.mxu0 0
  %2906 = vmatprep.subr.bf16.mxu0 0
  %2907 = vmatpush2.bf16.msra.mxu0 0
  %2908 = vmatprep.subr.bf16.mxu0 0
  %2909 = vmatpush2.bf16.msra.mxu0 0
  %2910 = vmatprep.subr.bf16.mxu0 0
  %2911 = vmatpush2.bf16.msra.mxu0 0
  %2912 = vmatprep.mubr.bf16.mxu0 0
  %2913 = vmatmul.mubr.bf16.gmra.mxu0 %v2637
  %v2914 = vpop.f32.mrf.mxu0
  %v2915 = vadd.f32 0.0, %v2914
  %v2916 = vpop.f32.mrf.mxu0
  %v2917 = vadd.f32 0.0, %v2916
  %v2918 = vpop.f32.mrf.mxu0
  %v2919 = vpop.f32.mrf.mxu0
  %2920 = vdwg.mxu0
  %v2921 = vadd.f32 %v2643, %v2874
  %v2922 = vadd.f32 %v2644, %v2876
  %v2923 = vadd.f32 %v2645, %v2915
  %v2924 = vadd.f32 %v2646, %v2917
  %v2925 = vxor.u32 %v2921, 2147483648
  %v2926 = vmul.f32 %v2925, 1.442695
  %v2927 = vpow.pop %v2926
  %v2928 = vadd.f32 %v2927, 1.0
  %v2929 = vrcp.pop %v2928
  %v2930 = vmul.f32 1.0, %v2929
  %v2931 = vxor.u32 %v2922, 2147483648
  %v2932 = vmul.f32 %v2931, 1.442695
  %v2933 = vpow.pop %v2932
  %v2934 = vadd.f32 %v2933, 1.0
  %v2935 = vrcp.pop %v2934
  %v2936 = vmul.f32 1.0, %v2935
  %v2937 = vtanh.pop %v2923
  %v2938 = vxor.u32 %v2924, 2147483648
  %v2939 = vmul.f32 %v2938, 1.442695
  %v2940 = vpow.pop %v2939
  %v2941 = vadd.f32 %v2940, 1.0
  %v2942 = vrcp.pop %v2941
  %v2943 = vmul.f32 1.0, %v2942
  %v2944 = vmul.f32 %v2936, %v2634
  %v2945 = vmul.f32 %v2930, %v2937
  %v2946 = vadd.f32 %v2944, %v2945
  %v2947 = vtanh.pop %v2946
  %v2948 = vmul.f32 %v2943, %v2947
  %v2949 = vpack.c.bf16 %v2948, %v2948
  %s2950 = scalar_lea.vmem [#allocation3], 28
  %2951 = vst [vmem:[%s2950] sm:$0xf] %v2949
  %v2952 = vld [vmem:[#allocation3] sm:$0xf]
  %v2953 = vld [vmem:[#allocation3 + $0x4] sm:$0xf]
  %v2954 = vld [vmem:[#allocation3 + $0x8] sm:$0xf]
  %v2955 = vld [vmem:[#allocation3 + $0xc] sm:$0xf]
  %v2956 = vld [vmem:[#allocation3 + $0x10] sm:$0xf]
  %v2957 = vld [vmem:[#allocation3 + $0x14] sm:$0xf]
  %v2958 = vld [vmem:[#allocation3 + $0x18] sm:$0xf]
  %v2959 = vld [vmem:[#allocation3 + $0x1c] sm:$0xf]
  %v2960 = vld [vmem:[%s4] sm:$0xff]
  %v2961 = vld [vmem:[%s4 + $0x8] sm:$0xff]
  %v2962 = vld [vmem:[%s4 + $0x10] sm:$0xff]
  %v2963 = vld [vmem:[%s4 + $0x18] sm:$0xff]
  %v2964 = vld [vmem:[%s4 + $0x20] sm:$0xff]
  %v2965 = vld [vmem:[%s4 + $0x28] sm:$0xff]
  %v2966 = vld [vmem:[%s4 + $0x30] sm:$0xff]
  %v2967 = vld [vmem:[%s4 + $0x38] sm:$0xff]
  %v2968 = vld [vmem:[%s4 + $0x40] sm:$0xff]
  %v2969 = vld [vmem:[%s4 + $0x48] sm:$0xff]
  %v2970 = vld [vmem:[%s4 + $0x50] sm:$0xff]
  %v2971 = vld [vmem:[%s4 + $0x58] sm:$0xff]
  %v2972 = vld [vmem:[%s4 + $0x60] sm:$0xff]
  %v2973 = vld [vmem:[%s4 + $0x68] sm:$0xff]
  %v2974 = vld [vmem:[%s4 + $0x70] sm:$0xff]
  %v2975 = vld [vmem:[%s4 + $0x78] sm:$0xff]
  %v2976 = vld [vmem:[%s4 + $0x80] sm:$0xff]
  %v2977 = vld [vmem:[%s4 + $0x88] sm:$0xff]
  %v2978 = vld [vmem:[%s4 + $0x90] sm:$0xff]
  %v2979 = vld [vmem:[%s4 + $0x98] sm:$0xff]
  %v2980 = vld [vmem:[%s4 + $0xa0] sm:$0xff]
  %v2981 = vld [vmem:[%s4 + $0xa8] sm:$0xff]
  %v2982 = vld [vmem:[%s4 + $0xb0] sm:$0xff]
  %v2983 = vld [vmem:[%s4 + $0xb8] sm:$0xff]
  %v2984 = vld [vmem:[%s4 + $0xc0] sm:$0xff]
  %v2985 = vld [vmem:[%s4 + $0xc8] sm:$0xff]
  %v2986 = vld [vmem:[%s4 + $0xd0] sm:$0xff]
  %v2987 = vld [vmem:[%s4 + $0xd8] sm:$0xff]
  %v2988 = vld [vmem:[%s4 + $0xe0] sm:$0xff]
  %v2989 = vld [vmem:[%s4 + $0xe8] sm:$0xff]
  %v2990 = vld [vmem:[%s4 + $0xf0] sm:$0xff]
  %v2991 = vld [vmem:[%s4 + $0xf8] sm:$0xff]
  %v2992 = vld [vmem:[%s6] sm:$0xf]
  %v2994 = vlaneseq
  %v2995 = vshrl.u32 %v2994, 7
  %v2996 = vsub.s32 0, %v2995
  %v2997 = vrot.slane %v2992, %v2996
  %v2998 = vlaneseq
  %v2999 = vshrl.u32 %v2998, 7
  %v3000 = vsub.s32 1, %v2999
  %v3001 = vrot.slane %v2992, %v3000
  %v3002 = vlaneseq
  %v3003 = vshrl.u32 %v3002, 7
  %v3004 = vsub.s32 2, %v3003
  %v3005 = vrot.slane %v2992, %v3004
  %v3006 = vlaneseq
  %v3007 = vshrl.u32 %v3006, 7
  %v3008 = vsub.s32 3, %v3007
  %v3009 = vrot.slane %v2992, %v3008
  %v3022 = vunpack.c.l.b16 %v2952
  %v3023 = vunpack.c.l.b16 %v2953
  %v3024 = vunpack.c.l.b16 %v2954
  %v3025 = vunpack.c.l.b16 %v2955
  %v3026 = vunpack.c.l.b16 %v2956
  %v3027 = vunpack.c.l.b16 %v2957
  %v3028 = vunpack.c.l.b16 %v2958
  %v3029 = vunpack.c.l.b16 %v2959
  %v3030 = vpack.c.b16 %v3023, %v3022
  %v3031 = vpack.c.b16 %v3025, %v3024
  %v3032 = vpack.c.b16 %v3027, %v3026
  %v3033 = vpack.c.b16 %v3029, %v3028
  %v3070 = vunpack.c.l.b16 %v2960
  %v3071 = vunpack.c.h.b16 %v2960
  %v3072 = vunpack.c.l.b16 %v2961
  %v3073 = vunpack.c.h.b16 %v2961
  %v3074 = vunpack.c.l.b16 %v2962
  %v3075 = vunpack.c.h.b16 %v2962
  %v3076 = vunpack.c.l.b16 %v2963
  %v3077 = vunpack.c.h.b16 %v2963
  %v3078 = vunpack.c.l.b16 %v2964
  %v3079 = vunpack.c.h.b16 %v2964
  %v3080 = vunpack.c.l.b16 %v2965
  %v3081 = vunpack.c.h.b16 %v2965
  %v3082 = vunpack.c.l.b16 %v2966
  %v3083 = vunpack.c.h.b16 %v2966
  %v3084 = vunpack.c.l.b16 %v2967
  %v3085 = vunpack.c.h.b16 %v2967
  %v3086 = vunpack.c.l.b16 %v2968
  %v3087 = vunpack.c.h.b16 %v2968
  %v3088 = vunpack.c.l.b16 %v2969
  %v3089 = vunpack.c.h.b16 %v2969
  %v3090 = vunpack.c.l.b16 %v2970
  %v3091 = vunpack.c.h.b16 %v2970
  %v3092 = vunpack.c.l.b16 %v2971
  %v3093 = vunpack.c.h.b16 %v2971
  %v3094 = vunpack.c.l.b16 %v2972
  %v3095 = vunpack.c.h.b16 %v2972
  %v3096 = vunpack.c.l.b16 %v2973
  %v3097 = vunpack.c.h.b16 %v2973
  %v3098 = vunpack.c.l.b16 %v2974
  %v3099 = vunpack.c.h.b16 %v2974
  %v3100 = vunpack.c.l.b16 %v2975
  %v3101 = vunpack.c.h.b16 %v2975
  %v3102 = vunpack.c.l.b16 %v2976
  %v3103 = vunpack.c.h.b16 %v2976
  %v3104 = vunpack.c.l.b16 %v2977
  %v3105 = vunpack.c.h.b16 %v2977
  %v3106 = vunpack.c.l.b16 %v2978
  %v3107 = vunpack.c.h.b16 %v2978
  %v3108 = vunpack.c.l.b16 %v2979
  %v3109 = vunpack.c.h.b16 %v2979
  %v3110 = vunpack.c.l.b16 %v2980
  %v3111 = vunpack.c.h.b16 %v2980
  %v3112 = vunpack.c.l.b16 %v2981
  %v3113 = vunpack.c.h.b16 %v2981
  %v3114 = vunpack.c.l.b16 %v2982
  %v3115 = vunpack.c.h.b16 %v2982
  %v3116 = vunpack.c.l.b16 %v2983
  %v3117 = vunpack.c.h.b16 %v2983
  %v3118 = vunpack.c.l.b16 %v2984
  %v3119 = vunpack.c.h.b16 %v2984
  %v3120 = vunpack.c.l.b16 %v2985
  %v3121 = vunpack.c.h.b16 %v2985
  %v3122 = vunpack.c.l.b16 %v2986
  %v3123 = vunpack.c.h.b16 %v2986
  %v3124 = vunpack.c.l.b16 %v2987
  %v3125 = vunpack.c.h.b16 %v2987
  %v3126 = vunpack.c.l.b16 %v2988
  %v3127 = vunpack.c.h.b16 %v2988
  %v3128 = vunpack.c.l.b16 %v2989
  %v3129 = vunpack.c.h.b16 %v2989
  %v3130 = vunpack.c.l.b16 %v2990
  %v3131 = vunpack.c.h.b16 %v2990
  %v3132 = vunpack.c.l.b16 %v2991
  %v3133 = vunpack.c.h.b16 %v2991
  %v3134 = vpack.c.b16 %v3074, %v3070
  %v3135 = vpack.c.b16 %v3075, %v3071
  %v3136 = vpack.c.b16 %v3076, %v3072
  %v3137 = vpack.c.b16 %v3077, %v3073
  %v3138 = vpack.c.b16 %v3082, %v3078
  %v3139 = vpack.c.b16 %v3083, %v3079
  %v3140 = vpack.c.b16 %v3084, %v3080
  %v3141 = vpack.c.b16 %v3085, %v3081
  %v3142 = vpack.c.b16 %v3090, %v3086
  %v3143 = vpack.c.b16 %v3091, %v3087
  %v3144 = vpack.c.b16 %v3092, %v3088
  %v3145 = vpack.c.b16 %v3093, %v3089
  %v3146 = vpack.c.b16 %v3098, %v3094
  %v3147 = vpack.c.b16 %v3099, %v3095
  %v3148 = vpack.c.b16 %v3100, %v3096
  %v3149 = vpack.c.b16 %v3101, %v3097
  %v3150 = vpack.c.b16 %v3106, %v3102
  %v3151 = vpack.c.b16 %v3107, %v3103
  %v3152 = vpack.c.b16 %v3108, %v3104
  %v3153 = vpack.c.b16 %v3109, %v3105
  %v3154 = vpack.c.b16 %v3114, %v3110
  %v3155 = vpack.c.b16 %v3115, %v3111
  %v3156 = vpack.c.b16 %v3116, %v3112
  %v3157 = vpack.c.b16 %v3117, %v3113
  %v3158 = vpack.c.b16 %v3122, %v3118
  %v3159 = vpack.c.b16 %v3123, %v3119
  %v3160 = vpack.c.b16 %v3124, %v3120
  %v3161 = vpack.c.b16 %v3125, %v3121
  %v3162 = vpack.c.b16 %v3130, %v3126
  %v3163 = vpack.c.b16 %v3131, %v3127
  %v3164 = vpack.c.b16 %v3132, %v3128
  %v3165 = vpack.c.b16 %v3133, %v3129
  %3198 = vmatprep.subr.bf16.mxu0 %v3163
  %3199 = vmatpush1.bf16.msra.mxu0 %v3162
  %3200 = vmatprep.subr.bf16.mxu0 %v3159
  %3201 = vmatpush1.bf16.msra.mxu0 %v3158
  %3202 = vmatprep.subr.bf16.mxu0 %v3155
  %3203 = vmatpush1.bf16.msra.mxu0 %v3154
  %3204 = vmatprep.subr.bf16.mxu0 %v3151
  %3205 = vmatpush1.bf16.msra.mxu0 %v3150
  %3206 = vmatprep.subr.bf16.mxu0 %v3147
  %3207 = vmatpush1.bf16.msra.mxu0 %v3146
  %3208 = vmatprep.subr.bf16.mxu0 %v3143
  %3209 = vmatpush1.bf16.msra.mxu0 %v3142
  %3210 = vmatprep.subr.bf16.mxu0 %v3139
  %3211 = vmatpush1.bf16.msra.mxu0 %v3138
  %3212 = vmatprep.subr.bf16.mxu0 %v3135
  %3213 = vmatpush1.bf16.msra.mxu0 %v3134
  %3214 = vmatprep.subr.bf16.mxu0 0
  %3215 = vmatpush2.bf16.msra.mxu0 0
  %3216 = vmatprep.subr.bf16.mxu0 0
  %3217 = vmatpush2.bf16.msra.mxu0 0
  %3218 = vmatprep.subr.bf16.mxu0 0
  %3219 = vmatpush2.bf16.msra.mxu0 0
  %3220 = vmatprep.subr.bf16.mxu0 0
  %3221 = vmatpush2.bf16.msra.mxu0 0
  %3222 = vmatprep.subr.bf16.mxu0 0
  %3223 = vmatpush2.bf16.msra.mxu0 0
  %3224 = vmatprep.subr.bf16.mxu0 0
  %3225 = vmatpush2.bf16.msra.mxu0 0
  %3226 = vmatprep.subr.bf16.mxu0 0
  %3227 = vmatpush2.bf16.msra.mxu0 0
  %3228 = vmatprep.subr.bf16.mxu0 0
  %3229 = vmatpush2.bf16.msra.mxu0 0
  %3230 = vmatprep.mubr.bf16.mxu0 0
  %3231 = vmatmul.mubr.bf16.gmra.mxu0 %v3030
  %v3232 = vpop.f32.mrf.mxu0
  %v3233 = vadd.f32 %v2997, %v3232
  %v3234 = vpop.f32.mrf.mxu0
  %v3235 = vadd.f32 %v3001, %v3234
  %v3236 = vpop.f32.mrf.mxu0
  %v3237 = vadd.f32 %v2997, %v3236
  %v3238 = vpop.f32.mrf.mxu0
  %v3239 = vadd.f32 %v3001, %v3238
  %3240 = vmatprep.mubr.bf16.mxu0 0
  %3241 = vmatmul.mubr.bf16.gmra.mxu0 %v3031
  %v3242 = vpop.f32.mrf.mxu0
  %v3243 = vadd.f32 %v2997, %v3242
  %v3244 = vpop.f32.mrf.mxu0
  %v3245 = vadd.f32 %v3001, %v3244
  %v3246 = vpop.f32.mrf.mxu0
  %v3247 = vadd.f32 %v2997, %v3246
  %v3248 = vpop.f32.mrf.mxu0
  %v3249 = vadd.f32 %v3001, %v3248
  %3250 = vmatprep.mubr.bf16.mxu0 0
  %3251 = vmatmul.mubr.bf16.gmra.mxu0 %v3032
  %v3252 = vpop.f32.mrf.mxu0
  %v3253 = vadd.f32 %v2997, %v3252
  %v3254 = vpop.f32.mrf.mxu0
  %v3255 = vadd.f32 %v3001, %v3254
  %v3256 = vpop.f32.mrf.mxu0
  %v3257 = vadd.f32 %v2997, %v3256
  %v3258 = vpop.f32.mrf.mxu0
  %v3259 = vadd.f32 %v3001, %v3258
  %3260 = vmatprep.mubr.bf16.mxu0 0
  %3261 = vmatmul.mubr.bf16.gmra.mxu0 %v3033
  %v3262 = vpop.f32.mrf.mxu0
  %v3263 = vadd.f32 %v2997, %v3262
  %v3264 = vpop.f32.mrf.mxu0
  %v3265 = vadd.f32 %v3001, %v3264
  %v3266 = vpop.f32.mrf.mxu0
  %v3267 = vadd.f32 %v2997, %v3266
  %v3268 = vpop.f32.mrf.mxu0
  %v3269 = vadd.f32 %v3001, %v3268
  %3270 = vdwg.mxu0
  %3271 = vmatprep.subr.bf16.mxu0 %v3165
  %3272 = vmatpush1.bf16.msra.mxu0 %v3164
  %3273 = vmatprep.subr.bf16.mxu0 %v3161
  %3274 = vmatpush1.bf16.msra.mxu0 %v3160
  %3275 = vmatprep.subr.bf16.mxu0 %v3157
  %3276 = vmatpush1.bf16.msra.mxu0 %v3156
  %3277 = vmatprep.subr.bf16.mxu0 %v3153
  %3278 = vmatpush1.bf16.msra.mxu0 %v3152
  %3279 = vmatprep.subr.bf16.mxu0 %v3149
  %3280 = vmatpush1.bf16.msra.mxu0 %v3148
  %3281 = vmatprep.subr.bf16.mxu0 %v3145
  %3282 = vmatpush1.bf16.msra.mxu0 %v3144
  %3283 = vmatprep.subr.bf16.mxu0 %v3141
  %3284 = vmatpush1.bf16.msra.mxu0 %v3140
  %3285 = vmatprep.subr.bf16.mxu0 %v3137
  %3286 = vmatpush1.bf16.msra.mxu0 %v3136
  %3287 = vmatprep.subr.bf16.mxu0 0
  %3288 = vmatpush2.bf16.msra.mxu0 0
  %3289 = vmatprep.subr.bf16.mxu0 0
  %3290 = vmatpush2.bf16.msra.mxu0 0
  %3291 = vmatprep.subr.bf16.mxu0 0
  %3292 = vmatpush2.bf16.msra.mxu0 0
  %3293 = vmatprep.subr.bf16.mxu0 0
  %3294 = vmatpush2.bf16.msra.mxu0 0
  %3295 = vmatprep.subr.bf16.mxu0 0
  %3296 = vmatpush2.bf16.msra.mxu0 0
  %3297 = vmatprep.subr.bf16.mxu0 0
  %3298 = vmatpush2.bf16.msra.mxu0 0
  %3299 = vmatprep.subr.bf16.mxu0 0
  %3300 = vmatpush2.bf16.msra.mxu0 0
  %3301 = vmatprep.subr.bf16.mxu0 0
  %3302 = vmatpush2.bf16.msra.mxu0 0
  %3303 = vmatprep.mubr.bf16.mxu0 0
  %3304 = vmatmul.mubr.bf16.gmra.mxu0 %v3030
  %v3305 = vpop.f32.mrf.mxu0
  %v3306 = vadd.f32 %v3005, %v3305
  %v3307 = vpop.f32.mrf.mxu0
  %v3308 = vadd.f32 %v3009, %v3307
  %v3309 = vpop.f32.mrf.mxu0
  %v3310 = vadd.f32 %v3005, %v3309
  %v3311 = vpop.f32.mrf.mxu0
  %v3312 = vadd.f32 %v3009, %v3311
  %3313 = vmatprep.mubr.bf16.mxu0 0
  %3314 = vmatmul.mubr.bf16.gmra.mxu0 %v3031
  %v3315 = vpop.f32.mrf.mxu0
  %v3316 = vadd.f32 %v3005, %v3315
  %v3317 = vpop.f32.mrf.mxu0
  %v3318 = vadd.f32 %v3009, %v3317
  %v3319 = vpop.f32.mrf.mxu0
  %v3320 = vadd.f32 %v3005, %v3319
  %v3321 = vpop.f32.mrf.mxu0
  %v3322 = vadd.f32 %v3009, %v3321
  %3323 = vmatprep.mubr.bf16.mxu0 0
  %3324 = vmatmul.mubr.bf16.gmra.mxu0 %v3032
  %v3325 = vpop.f32.mrf.mxu0
  %v3326 = vadd.f32 %v3005, %v3325
  %v3327 = vpop.f32.mrf.mxu0
  %v3328 = vadd.f32 %v3009, %v3327
  %v3329 = vpop.f32.mrf.mxu0
  %v3330 = vadd.f32 %v3005, %v3329
  %v3331 = vpop.f32.mrf.mxu0
  %v3332 = vadd.f32 %v3009, %v3331
  %3333 = vmatprep.mubr.bf16.mxu0 0
  %3334 = vmatmul.mubr.bf16.gmra.mxu0 %v3033
  %v3335 = vpop.f32.mrf.mxu0
  %v3336 = vadd.f32 %v3005, %v3335
  %v3337 = vpop.f32.mrf.mxu0
  %v3338 = vadd.f32 %v3009, %v3337
  %v3339 = vpop.f32.mrf.mxu0
  %v3340 = vadd.f32 %v3005, %v3339
  %v3341 = vpop.f32.mrf.mxu0
  %v3342 = vadd.f32 %v3009, %v3341
  %3343 = vdwg.mxu0
  %3344 = vst [vmem:[#allocation2] sm:$0xff] %v3233
  %3345 = vst [vmem:[#allocation2 + $0x8] sm:$0xff] %v3235
  %3346 = vst [vmem:[#allocation2 + $0x10] sm:$0xff] %v3306
  %3347 = vst [vmem:[#allocation2 + $0x18] sm:$0xff] %v3308
  %3348 = vst [vmem:[#allocation2 + $0x20] sm:$0xff] %v3237
  %3349 = vst [vmem:[#allocation2 + $0x28] sm:$0xff] %v3239
  %3350 = vst [vmem:[#allocation2 + $0x30] sm:$0xff] %v3310
  %3351 = vst [vmem:[#allocation2 + $0x38] sm:$0xff] %v3312
  %3352 = vst [vmem:[#allocation2 + $0x40] sm:$0xff] %v3243
  %3353 = vst [vmem:[#allocation2 + $0x48] sm:$0xff] %v3245
  %3354 = vst [vmem:[#allocation2 + $0x50] sm:$0xff] %v3316
  %3355 = vst [vmem:[#allocation2 + $0x58] sm:$0xff] %v3318
  %3356 = vst [vmem:[#allocation2 + $0x60] sm:$0xff] %v3247
  %3357 = vst [vmem:[#allocation2 + $0x68] sm:$0xff] %v3249
  %3358 = vst [vmem:[#allocation2 + $0x70] sm:$0xff] %v3320
  %3359 = vst [vmem:[#allocation2 + $0x78] sm:$0xff] %v3322
  %3360 = vst [vmem:[#allocation2 + $0x80] sm:$0xff] %v3253
  %3361 = vst [vmem:[#allocation2 + $0x88] sm:$0xff] %v3255
  %3362 = vst [vmem:[#allocation2 + $0x90] sm:$0xff] %v3326
  %3363 = vst [vmem:[#allocation2 + $0x98] sm:$0xff] %v3328
  %3364 = vst [vmem:[#allocation2 + $0xa0] sm:$0xff] %v3257
  %3365 = vst [vmem:[#allocation2 + $0xa8] sm:$0xff] %v3259
  %3366 = vst [vmem:[#allocation2 + $0xb0] sm:$0xff] %v3330
  %3367 = vst [vmem:[#allocation2 + $0xb8] sm:$0xff] %v3332
  %3368 = vst [vmem:[#allocation2 + $0xc0] sm:$0xff] %v3263
  %3369 = vst [vmem:[#allocation2 + $0xc8] sm:$0xff] %v3265
  %3370 = vst [vmem:[#allocation2 + $0xd0] sm:$0xff] %v3336
  %3371 = vst [vmem:[#allocation2 + $0xd8] sm:$0xff] %v3338
  %3372 = vst [vmem:[#allocation2 + $0xe0] sm:$0xff] %v3267
  %3373 = vst [vmem:[#allocation2 + $0xe8] sm:$0xff] %v3269
  %3374 = vst [vmem:[#allocation2 + $0xf0] sm:$0xff] %v3340
  %3375 = vst [vmem:[#allocation2 + $0xf8] sm:$0xff] %v3342
  %v3376 = vld [vmem:[%s459] sm:$0xff]
  %v3377 = vld [vmem:[%s459 + $0x8] sm:$0xff]
  %v3378 = vld [vmem:[%s459 + $0x10] sm:$0xff]
  %v3379 = vld [vmem:[%s459 + $0x18] sm:$0xff]
  %v3380 = vld [vmem:[%s5] sm:$0xff]
  %v3381 = vld [vmem:[%s5 + $0x8] sm:$0xff]
  %v3382 = vld [vmem:[%s5 + $0x10] sm:$0xff]
  %v3383 = vld [vmem:[%s5 + $0x18] sm:$0xff]
  %v3384 = vld [vmem:[%s5 + $0x20] sm:$0xff]
  %v3385 = vld [vmem:[%s5 + $0x28] sm:$0xff]
  %v3386 = vld [vmem:[%s5 + $0x30] sm:$0xff]
  %v3387 = vld [vmem:[%s5 + $0x38] sm:$0xff]
  %v3388 = vld [vmem:[%s5 + $0x40] sm:$0xff]
  %v3389 = vld [vmem:[%s5 + $0x48] sm:$0xff]
  %v3390 = vld [vmem:[%s5 + $0x50] sm:$0xff]
  %v3391 = vld [vmem:[%s5 + $0x58] sm:$0xff]
  %v3392 = vld [vmem:[%s5 + $0x60] sm:$0xff]
  %v3393 = vld [vmem:[%s5 + $0x68] sm:$0xff]
  %v3394 = vld [vmem:[%s5 + $0x70] sm:$0xff]
  %v3395 = vld [vmem:[%s5 + $0x78] sm:$0xff]
  %v3396 = vld [vmem:[%s5 + $0x80] sm:$0xff]
  %v3397 = vld [vmem:[%s5 + $0x88] sm:$0xff]
  %v3398 = vld [vmem:[%s5 + $0x90] sm:$0xff]
  %v3399 = vld [vmem:[%s5 + $0x98] sm:$0xff]
  %v3400 = vld [vmem:[%s5 + $0xa0] sm:$0xff]
  %v3401 = vld [vmem:[%s5 + $0xa8] sm:$0xff]
  %v3402 = vld [vmem:[%s5 + $0xb0] sm:$0xff]
  %v3403 = vld [vmem:[%s5 + $0xb8] sm:$0xff]
  %v3404 = vld [vmem:[%s5 + $0xc0] sm:$0xff]
  %v3405 = vld [vmem:[%s5 + $0xc8] sm:$0xff]
  %v3406 = vld [vmem:[%s5 + $0xd0] sm:$0xff]
  %v3407 = vld [vmem:[%s5 + $0xd8] sm:$0xff]
  %v3408 = vld [vmem:[%s5 + $0xe0] sm:$0xff]
  %v3409 = vld [vmem:[%s5 + $0xe8] sm:$0xff]
  %v3410 = vld [vmem:[%s5 + $0xf0] sm:$0xff]
  %v3411 = vld [vmem:[%s5 + $0xf8] sm:$0xff]
  %v3444 = vunpack.c.l.b16 %v3380
  %v3445 = vunpack.c.h.b16 %v3380
  %v3446 = vunpack.c.l.b16 %v3381
  %v3447 = vunpack.c.h.b16 %v3381
  %v3448 = vunpack.c.l.b16 %v3382
  %v3449 = vunpack.c.h.b16 %v3382
  %v3450 = vunpack.c.l.b16 %v3383
  %v3451 = vunpack.c.h.b16 %v3383
  %v3452 = vunpack.c.l.b16 %v3384
  %v3453 = vunpack.c.h.b16 %v3384
  %v3454 = vunpack.c.l.b16 %v3385
  %v3455 = vunpack.c.h.b16 %v3385
  %v3456 = vunpack.c.l.b16 %v3386
  %v3457 = vunpack.c.h.b16 %v3386
  %v3458 = vunpack.c.l.b16 %v3387
  %v3459 = vunpack.c.h.b16 %v3387
  %v3460 = vunpack.c.l.b16 %v3388
  %v3461 = vunpack.c.h.b16 %v3388
  %v3462 = vunpack.c.l.b16 %v3389
  %v3463 = vunpack.c.h.b16 %v3389
  %v3464 = vunpack.c.l.b16 %v3390
  %v3465 = vunpack.c.h.b16 %v3390
  %v3466 = vunpack.c.l.b16 %v3391
  %v3467 = vunpack.c.h.b16 %v3391
  %v3468 = vunpack.c.l.b16 %v3392
  %v3469 = vunpack.c.h.b16 %v3392
  %v3470 = vunpack.c.l.b16 %v3393
  %v3471 = vunpack.c.h.b16 %v3393
  %v3472 = vunpack.c.l.b16 %v3394
  %v3473 = vunpack.c.h.b16 %v3394
  %v3474 = vunpack.c.l.b16 %v3395
  %v3475 = vunpack.c.h.b16 %v3395
  %v3476 = vunpack.c.l.b16 %v3396
  %v3477 = vunpack.c.h.b16 %v3396
  %v3478 = vunpack.c.l.b16 %v3397
  %v3479 = vunpack.c.h.b16 %v3397
  %v3480 = vunpack.c.l.b16 %v3398
  %v3481 = vunpack.c.h.b16 %v3398
  %v3482 = vunpack.c.l.b16 %v3399
  %v3483 = vunpack.c.h.b16 %v3399
  %v3484 = vunpack.c.l.b16 %v3400
  %v3485 = vunpack.c.h.b16 %v3400
  %v3486 = vunpack.c.l.b16 %v3401
  %v3487 = vunpack.c.h.b16 %v3401
  %v3488 = vunpack.c.l.b16 %v3402
  %v3489 = vunpack.c.h.b16 %v3402
  %v3490 = vunpack.c.l.b16 %v3403
  %v3491 = vunpack.c.h.b16 %v3403
  %v3492 = vunpack.c.l.b16 %v3404
  %v3493 = vunpack.c.h.b16 %v3404
  %v3494 = vunpack.c.l.b16 %v3405
  %v3495 = vunpack.c.h.b16 %v3405
  %v3496 = vunpack.c.l.b16 %v3406
  %v3497 = vunpack.c.h.b16 %v3406
  %v3498 = vunpack.c.l.b16 %v3407
  %v3499 = vunpack.c.h.b16 %v3407
  %v3500 = vunpack.c.l.b16 %v3408
  %v3501 = vunpack.c.h.b16 %v3408
  %v3502 = vunpack.c.l.b16 %v3409
  %v3503 = vunpack.c.h.b16 %v3409
  %v3504 = vunpack.c.l.b16 %v3410
  %v3505 = vunpack.c.h.b16 %v3410
  %v3506 = vunpack.c.l.b16 %v3411
  %v3507 = vunpack.c.h.b16 %v3411
  %v3508 = vpack.c.b16 %v3448, %v3444
  %v3509 = vpack.c.b16 %v3449, %v3445
  %v3510 = vpack.c.b16 %v3450, %v3446
  %v3511 = vpack.c.b16 %v3451, %v3447
  %v3512 = vpack.c.b16 %v3456, %v3452
  %v3513 = vpack.c.b16 %v3457, %v3453
  %v3514 = vpack.c.b16 %v3458, %v3454
  %v3515 = vpack.c.b16 %v3459, %v3455
  %v3516 = vpack.c.b16 %v3464, %v3460
  %v3517 = vpack.c.b16 %v3465, %v3461
  %v3518 = vpack.c.b16 %v3466, %v3462
  %v3519 = vpack.c.b16 %v3467, %v3463
  %v3520 = vpack.c.b16 %v3472, %v3468
  %v3521 = vpack.c.b16 %v3473, %v3469
  %v3522 = vpack.c.b16 %v3474, %v3470
  %v3523 = vpack.c.b16 %v3475, %v3471
  %v3524 = vpack.c.b16 %v3480, %v3476
  %v3525 = vpack.c.b16 %v3481, %v3477
  %v3526 = vpack.c.b16 %v3482, %v3478
  %v3527 = vpack.c.b16 %v3483, %v3479
  %v3528 = vpack.c.b16 %v3488, %v3484
  %v3529 = vpack.c.b16 %v3489, %v3485
  %v3530 = vpack.c.b16 %v3490, %v3486
  %v3531 = vpack.c.b16 %v3491, %v3487
  %v3532 = vpack.c.b16 %v3496, %v3492
  %v3533 = vpack.c.b16 %v3497, %v3493
  %v3534 = vpack.c.b16 %v3498, %v3494
  %v3535 = vpack.c.b16 %v3499, %v3495
  %v3536 = vpack.c.b16 %v3504, %v3500
  %v3537 = vpack.c.b16 %v3505, %v3501
  %v3538 = vpack.c.b16 %v3506, %v3502
  %v3539 = vpack.c.b16 %v3507, %v3503
  %3572 = vmatprep.subr.bf16.mxu0 %v3537
  %3573 = vmatpush1.bf16.msra.mxu0 %v3536
  %3574 = vmatprep.subr.bf16.mxu0 %v3533
  %3575 = vmatpush1.bf16.msra.mxu0 %v3532
  %3576 = vmatprep.subr.bf16.mxu0 %v3529
  %3577 = vmatpush1.bf16.msra.mxu0 %v3528
  %3578 = vmatprep.subr.bf16.mxu0 %v3525
  %3579 = vmatpush1.bf16.msra.mxu0 %v3524
  %3580 = vmatprep.subr.bf16.mxu0 %v3521
  %3581 = vmatpush1.bf16.msra.mxu0 %v3520
  %3582 = vmatprep.subr.bf16.mxu0 %v3517
  %3583 = vmatpush1.bf16.msra.mxu0 %v3516
  %3584 = vmatprep.subr.bf16.mxu0 %v3513
  %3585 = vmatpush1.bf16.msra.mxu0 %v3512
  %3586 = vmatprep.subr.bf16.mxu0 %v3509
  %3587 = vmatpush1.bf16.msra.mxu0 %v3508
  %3588 = vmatprep.subr.bf16.mxu0 0
  %3589 = vmatpush2.bf16.msra.mxu0 0
  %3590 = vmatprep.subr.bf16.mxu0 0
  %3591 = vmatpush2.bf16.msra.mxu0 0
  %3592 = vmatprep.subr.bf16.mxu0 0
  %3593 = vmatpush2.bf16.msra.mxu0 0
  %3594 = vmatprep.subr.bf16.mxu0 0
  %3595 = vmatpush2.bf16.msra.mxu0 0
  %3596 = vmatprep.subr.bf16.mxu0 0
  %3597 = vmatpush2.bf16.msra.mxu0 0
  %3598 = vmatprep.subr.bf16.mxu0 0
  %3599 = vmatpush2.bf16.msra.mxu0 0
  %3600 = vmatprep.subr.bf16.mxu0 0
  %3601 = vmatpush2.bf16.msra.mxu0 0
  %3602 = vmatprep.subr.bf16.mxu0 0
  %3603 = vmatpush2.bf16.msra.mxu0 0
  %3604 = vmatprep.mubr.bf16.mxu0 0
  %3605 = vmatmul.mubr.bf16.gmra.mxu0 0
  %v3606 = vpop.f32.mrf.mxu0
  %v3607 = vadd.f32 0.0, %v3606
  %v3608 = vpop.f32.mrf.mxu0
  %v3609 = vadd.f32 0.0, %v3608
  %v3610 = vpop.f32.mrf.mxu0
  %v3611 = vpop.f32.mrf.mxu0
  %3612 = vdwg.mxu0
  %3613 = vmatprep.subr.bf16.mxu0 %v3539
  %3614 = vmatpush1.bf16.msra.mxu0 %v3538
  %3615 = vmatprep.subr.bf16.mxu0 %v3535
  %3616 = vmatpush1.bf16.msra.mxu0 %v3534
  %3617 = vmatprep.subr.bf16.mxu0 %v3531
  %3618 = vmatpush1.bf16.msra.mxu0 %v3530
  %3619 = vmatprep.subr.bf16.mxu0 %v3527
  %3620 = vmatpush1.bf16.msra.mxu0 %v3526
  %3621 = vmatprep.subr.bf16.mxu0 %v3523
  %3622 = vmatpush1.bf16.msra.mxu0 %v3522
  %3623 = vmatprep.subr.bf16.mxu0 %v3519
  %3624 = vmatpush1.bf16.msra.mxu0 %v3518
  %3625 = vmatprep.subr.bf16.mxu0 %v3515
  %3626 = vmatpush1.bf16.msra.mxu0 %v3514
  %3627 = vmatprep.subr.bf16.mxu0 %v3511
  %3628 = vmatpush1.bf16.msra.mxu0 %v3510
  %3629 = vmatprep.subr.bf16.mxu0 0
  %3630 = vmatpush2.bf16.msra.mxu0 0
  %3631 = vmatprep.subr.bf16.mxu0 0
  %3632 = vmatpush2.bf16.msra.mxu0 0
  %3633 = vmatprep.subr.bf16.mxu0 0
  %3634 = vmatpush2.bf16.msra.mxu0 0
  %3635 = vmatprep.subr.bf16.mxu0 0
  %3636 = vmatpush2.bf16.msra.mxu0 0
  %3637 = vmatprep.subr.bf16.mxu0 0
  %3638 = vmatpush2.bf16.msra.mxu0 0
  %3639 = vmatprep.subr.bf16.mxu0 0
  %3640 = vmatpush2.bf16.msra.mxu0 0
  %3641 = vmatprep.subr.bf16.mxu0 0
  %3642 = vmatpush2.bf16.msra.mxu0 0
  %3643 = vmatprep.subr.bf16.mxu0 0
  %3644 = vmatpush2.bf16.msra.mxu0 0
  %3645 = vmatprep.mubr.bf16.mxu0 0
  %3646 = vmatmul.mubr.bf16.gmra.mxu0 0
  %v3647 = vpop.f32.mrf.mxu0
  %v3648 = vadd.f32 0.0, %v3647
  %v3649 = vpop.f32.mrf.mxu0
  %v3650 = vadd.f32 0.0, %v3649
  %v3651 = vpop.f32.mrf.mxu0
  %v3652 = vpop.f32.mrf.mxu0
  %3653 = vdwg.mxu0
  %v3654 = vadd.f32 %v3376, %v3607
  %v3655 = vadd.f32 %v3377, %v3609
  %v3656 = vadd.f32 %v3378, %v3648
  %v3657 = vadd.f32 %v3379, %v3650
  %v3658 = vxor.u32 %v3654, 2147483648
  %v3659 = vmul.f32 %v3658, 1.442695
  %v3660 = vpow.pop %v3659
  %v3661 = vadd.f32 %v3660, 1.0
  %v3662 = vrcp.pop %v3661
  %v3663 = vmul.f32 1.0, %v3662
  %v3664 = vxor.u32 %v3655, 2147483648
  %v3665 = vmul.f32 %v3664, 1.442695
  %v3666 = vpow.pop %v3665
  %v3667 = vadd.f32 %v3666, 1.0
  %v3668 = vrcp.pop %v3667
  %v3669 = vmul.f32 1.0, %v3668
  %v3670 = vtanh.pop %v3656
  %v3671 = vxor.u32 %v3657, 2147483648
  %v3672 = vmul.f32 %v3671, 1.442695
  %v3673 = vpow.pop %v3672
  %v3674 = vadd.f32 %v3673, 1.0
  %v3675 = vrcp.pop %v3674
  %v3676 = vmul.f32 1.0, %v3675
  %v3677 = vmul.f32 %v3669, 0.0
  %v3678 = vmul.f32 %v3663, %v3670
  %v3679 = vadd.f32 %v3677, %v3678
  %v3680 = vtanh.pop %v3679
  %v3681 = vmul.f32 %v3676, %v3680
  %v3682 = vld [vmem:[%s770] sm:$0xff]
  %v3683 = vld [vmem:[%s770 + $0x8] sm:$0xff]
  %v3684 = vld [vmem:[%s770 + $0x10] sm:$0xff]
  %v3685 = vld [vmem:[%s770 + $0x18] sm:$0xff]
  %v3686 = vpack.c.bf16 %v3681, %v3681
  %3687 = vmatprep.subr.bf16.mxu0 %v3537
  %3688 = vmatpush1.bf16.msra.mxu0 %v3536
  %3689 = vmatprep.subr.bf16.mxu0 %v3533
  %3690 = vmatpush1.bf16.msra.mxu0 %v3532
  %3691 = vmatprep.subr.bf16.mxu0 %v3529
  %3692 = vmatpush1.bf16.msra.mxu0 %v3528
  %3693 = vmatprep.subr.bf16.mxu0 %v3525
  %3694 = vmatpush1.bf16.msra.mxu0 %v3524
  %3695 = vmatprep.subr.bf16.mxu0 %v3521
  %3696 = vmatpush1.bf16.msra.mxu0 %v3520
  %3697 = vmatprep.subr.bf16.mxu0 %v3517
  %3698 = vmatpush1.bf16.msra.mxu0 %v3516
  %3699 = vmatprep.subr.bf16.mxu0 %v3513
  %3700 = vmatpush1.bf16.msra.mxu0 %v3512
  %3701 = vmatprep.subr.bf16.mxu0 %v3509
  %3702 = vmatpush1.bf16.msra.mxu0 %v3508
  %3703 = vmatprep.subr.bf16.mxu0 0
  %3704 = vmatpush2.bf16.msra.mxu0 0
  %3705 = vmatprep.subr.bf16.mxu0 0
  %3706 = vmatpush2.bf16.msra.mxu0 0
  %3707 = vmatprep.subr.bf16.mxu0 0
  %3708 = vmatpush2.bf16.msra.mxu0 0
  %3709 = vmatprep.subr.bf16.mxu0 0
  %3710 = vmatpush2.bf16.msra.mxu0 0
  %3711 = vmatprep.subr.bf16.mxu0 0
  %3712 = vmatpush2.bf16.msra.mxu0 0
  %3713 = vmatprep.subr.bf16.mxu0 0
  %3714 = vmatpush2.bf16.msra.mxu0 0
  %3715 = vmatprep.subr.bf16.mxu0 0
  %3716 = vmatpush2.bf16.msra.mxu0 0
  %3717 = vmatprep.subr.bf16.mxu0 0
  %3718 = vmatpush2.bf16.msra.mxu0 0
  %3719 = vmatprep.mubr.bf16.mxu0 0
  %3720 = vmatmul.mubr.bf16.gmra.mxu0 %v3686
  %v3721 = vpop.f32.mrf.mxu0
  %v3722 = vadd.f32 0.0, %v3721
  %v3723 = vpop.f32.mrf.mxu0
  %v3724 = vadd.f32 0.0, %v3723
  %v3725 = vpop.f32.mrf.mxu0
  %v3726 = vpop.f32.mrf.mxu0
  %3727 = vdwg.mxu0
  %3728 = vmatprep.subr.bf16.mxu0 %v3539
  %3729 = vmatpush1.bf16.msra.mxu0 %v3538
  %3730 = vmatprep.subr.bf16.mxu0 %v3535
  %3731 = vmatpush1.bf16.msra.mxu0 %v3534
  %3732 = vmatprep.subr.bf16.mxu0 %v3531
  %3733 = vmatpush1.bf16.msra.mxu0 %v3530
  %3734 = vmatprep.subr.bf16.mxu0 %v3527
  %3735 = vmatpush1.bf16.msra.mxu0 %v3526
  %3736 = vmatprep.subr.bf16.mxu0 %v3523
  %3737 = vmatpush1.bf16.msra.mxu0 %v3522
  %3738 = vmatprep.subr.bf16.mxu0 %v3519
  %3739 = vmatpush1.bf16.msra.mxu0 %v3518
  %3740 = vmatprep.subr.bf16.mxu0 %v3515
  %3741 = vmatpush1.bf16.msra.mxu0 %v3514
  %3742 = vmatprep.subr.bf16.mxu0 %v3511
  %3743 = vmatpush1.bf16.msra.mxu0 %v3510
  %3744 = vmatprep.subr.bf16.mxu0 0
  %3745 = vmatpush2.bf16.msra.mxu0 0
  %3746 = vmatprep.subr.bf16.mxu0 0
  %3747 = vmatpush2.bf16.msra.mxu0 0
  %3748 = vmatprep.subr.bf16.mxu0 0
  %3749 = vmatpush2.bf16.msra.mxu0 0
  %3750 = vmatprep.subr.bf16.mxu0 0
  %3751 = vmatpush2.bf16.msra.mxu0 0
  %3752 = vmatprep.subr.bf16.mxu0 0
  %3753 = vmatpush2.bf16.msra.mxu0 0
  %3754 = vmatprep.subr.bf16.mxu0 0
  %3755 = vmatpush2.bf16.msra.mxu0 0
  %3756 = vmatprep.subr.bf16.mxu0 0
  %3757 = vmatpush2.bf16.msra.mxu0 0
  %3758 = vmatprep.subr.bf16.mxu0 0
  %3759 = vmatpush2.bf16.msra.mxu0 0
  %3760 = vmatprep.mubr.bf16.mxu0 0
  %3761 = vmatmul.mubr.bf16.gmra.mxu0 %v3686
  %v3762 = vpop.f32.mrf.mxu0
  %v3763 = vadd.f32 0.0, %v3762
  %v3764 = vpop.f32.mrf.mxu0
  %v3765 = vadd.f32 0.0, %v3764
  %v3766 = vpop.f32.mrf.mxu0
  %v3767 = vpop.f32.mrf.mxu0
  %3768 = vdwg.mxu0
  %v3769 = vadd.f32 %v3682, %v3722
  %v3770 = vadd.f32 %v3683, %v3724
  %v3771 = vadd.f32 %v3684, %v3763
  %v3772 = vadd.f32 %v3685, %v3765
  %v3773 = vxor.u32 %v3769, 2147483648
  %v3774 = vmul.f32 %v3773, 1.442695
  %v3775 = vpow.pop %v3774
  %v3776 = vadd.f32 %v3775, 1.0
  %v3777 = vrcp.pop %v3776
  %v3778 = vmul.f32 1.0, %v3777
  %v3779 = vxor.u32 %v3770, 2147483648
  %v3780 = vmul.f32 %v3779, 1.442695
  %v3781 = vpow.pop %v3780
  %v3782 = vadd.f32 %v3781, 1.0
  %v3783 = vrcp.pop %v3782
  %v3784 = vmul.f32 1.0, %v3783
  %v3785 = vtanh.pop %v3771
  %v3786 = vxor.u32 %v3772, 2147483648
  %v3787 = vmul.f32 %v3786, 1.442695
  %v3788 = vpow.pop %v3787
  %v3789 = vadd.f32 %v3788, 1.0
  %v3790 = vrcp.pop %v3789
  %v3791 = vmul.f32 1.0, %v3790
  %v3792 = vmul.f32 %v3784, %v3679
  %v3793 = vmul.f32 %v3778, %v3785
  %v3794 = vadd.f32 %v3792, %v3793
  %v3795 = vtanh.pop %v3794
  %v3796 = vmul.f32 %v3791, %v3795
  %v3797 = vld [vmem:[%s1082] sm:$0xff]
  %v3798 = vld [vmem:[%s1082 + $0x8] sm:$0xff]
  %v3799 = vld [vmem:[%s1082 + $0x10] sm:$0xff]
  %v3800 = vld [vmem:[%s1082 + $0x18] sm:$0xff]
  %v3801 = vpack.c.bf16 %v3796, %v3796
  %3802 = vmatprep.subr.bf16.mxu0 %v3537
  %3803 = vmatpush1.bf16.msra.mxu0 %v3536
  %3804 = vmatprep.subr.bf16.mxu0 %v3533
  %3805 = vmatpush1.bf16.msra.mxu0 %v3532
  %3806 = vmatprep.subr.bf16.mxu0 %v3529
  %3807 = vmatpush1.bf16.msra.mxu0 %v3528
  %3808 = vmatprep.subr.bf16.mxu0 %v3525
  %3809 = vmatpush1.bf16.msra.mxu0 %v3524
  %3810 = vmatprep.subr.bf16.mxu0 %v3521
  %3811 = vmatpush1.bf16.msra.mxu0 %v3520
  %3812 = vmatprep.subr.bf16.mxu0 %v3517
  %3813 = vmatpush1.bf16.msra.mxu0 %v3516
  %3814 = vmatprep.subr.bf16.mxu0 %v3513
  %3815 = vmatpush1.bf16.msra.mxu0 %v3512
  %3816 = vmatprep.subr.bf16.mxu0 %v3509
  %3817 = vmatpush1.bf16.msra.mxu0 %v3508
  %3818 = vmatprep.subr.bf16.mxu0 0
  %3819 = vmatpush2.bf16.msra.mxu0 0
  %3820 = vmatprep.subr.bf16.mxu0 0
  %3821 = vmatpush2.bf16.msra.mxu0 0
  %3822 = vmatprep.subr.bf16.mxu0 0
  %3823 = vmatpush2.bf16.msra.mxu0 0
  %3824 = vmatprep.subr.bf16.mxu0 0
  %3825 = vmatpush2.bf16.msra.mxu0 0
  %3826 = vmatprep.subr.bf16.mxu0 0
  %3827 = vmatpush2.bf16.msra.mxu0 0
  %3828 = vmatprep.subr.bf16.mxu0 0
  %3829 = vmatpush2.bf16.msra.mxu0 0
  %3830 = vmatprep.subr.bf16.mxu0 0
  %3831 = vmatpush2.bf16.msra.mxu0 0
  %3832 = vmatprep.subr.bf16.mxu0 0
  %3833 = vmatpush2.bf16.msra.mxu0 0
  %3834 = vmatprep.mubr.bf16.mxu0 0
  %3835 = vmatmul.mubr.bf16.gmra.mxu0 %v3801
  %v3836 = vpop.f32.mrf.mxu0
  %v3837 = vadd.f32 0.0, %v3836
  %v3838 = vpop.f32.mrf.mxu0
  %v3839 = vadd.f32 0.0, %v3838
  %v3840 = vpop.f32.mrf.mxu0
  %v3841 = vpop.f32.mrf.mxu0
  %3842 = vdwg.mxu0
  %3843 = vmatprep.subr.bf16.mxu0 %v3539
  %3844 = vmatpush1.bf16.msra.mxu0 %v3538
  %3845 = vmatprep.subr.bf16.mxu0 %v3535
  %3846 = vmatpush1.bf16.msra.mxu0 %v3534
  %3847 = vmatprep.subr.bf16.mxu0 %v3531
  %3848 = vmatpush1.bf16.msra.mxu0 %v3530
  %3849 = vmatprep.subr.bf16.mxu0 %v3527
  %3850 = vmatpush1.bf16.msra.mxu0 %v3526
  %3851 = vmatprep.subr.bf16.mxu0 %v3523
  %3852 = vmatpush1.bf16.msra.mxu0 %v3522
  %3853 = vmatprep.subr.bf16.mxu0 %v3519
  %3854 = vmatpush1.bf16.msra.mxu0 %v3518
  %3855 = vmatprep.subr.bf16.mxu0 %v3515
  %3856 = vmatpush1.bf16.msra.mxu0 %v3514
  %3857 = vmatprep.subr.bf16.mxu0 %v3511
  %3858 = vmatpush1.bf16.msra.mxu0 %v3510
  %3859 = vmatprep.subr.bf16.mxu0 0
  %3860 = vmatpush2.bf16.msra.mxu0 0
  %3861 = vmatprep.subr.bf16.mxu0 0
  %3862 = vmatpush2.bf16.msra.mxu0 0
  %3863 = vmatprep.subr.bf16.mxu0 0
  %3864 = vmatpush2.bf16.msra.mxu0 0
  %3865 = vmatprep.subr.bf16.mxu0 0
  %3866 = vmatpush2.bf16.msra.mxu0 0
  %3867 = vmatprep.subr.bf16.mxu0 0
  %3868 = vmatpush2.bf16.msra.mxu0 0
  %3869 = vmatprep.subr.bf16.mxu0 0
  %3870 = vmatpush2.bf16.msra.mxu0 0
  %3871 = vmatprep.subr.bf16.mxu0 0
  %3872 = vmatpush2.bf16.msra.mxu0 0
  %3873 = vmatprep.subr.bf16.mxu0 0
  %3874 = vmatpush2.bf16.msra.mxu0 0
  %3875 = vmatprep.mubr.bf16.mxu0 0
  %3876 = vmatmul.mubr.bf16.gmra.mxu0 %v3801
  %v3877 = vpop.f32.mrf.mxu0
  %v3878 = vadd.f32 0.0, %v3877
  %v3879 = vpop.f32.mrf.mxu0
  %v3880 = vadd.f32 0.0, %v3879
  %v3881 = vpop.f32.mrf.mxu0
  %v3882 = vpop.f32.mrf.mxu0
  %3883 = vdwg.mxu0
  %v3884 = vadd.f32 %v3797, %v3837
  %v3885 = vadd.f32 %v3798, %v3839
  %v3886 = vadd.f32 %v3799, %v3878
  %v3887 = vadd.f32 %v3800, %v3880
  %v3888 = vxor.u32 %v3884, 2147483648
  %v3889 = vmul.f32 %v3888, 1.442695
  %v3890 = vpow.pop %v3889
  %v3891 = vadd.f32 %v3890, 1.0
  %v3892 = vrcp.pop %v3891
  %v3893 = vmul.f32 1.0, %v3892
  %v3894 = vxor.u32 %v3885, 2147483648
  %v3895 = vmul.f32 %v3894, 1.442695
  %v3896 = vpow.pop %v3895
  %v3897 = vadd.f32 %v3896, 1.0
  %v3898 = vrcp.pop %v3897
  %v3899 = vmul.f32 1.0, %v3898
  %v3900 = vtanh.pop %v3886
  %v3901 = vxor.u32 %v3887, 2147483648
  %v3902 = vmul.f32 %v3901, 1.442695
  %v3903 = vpow.pop %v3902
  %v3904 = vadd.f32 %v3903, 1.0
  %v3905 = vrcp.pop %v3904
  %v3906 = vmul.f32 1.0, %v3905
  %v3907 = vmul.f32 %v3899, %v3794
  %v3908 = vmul.f32 %v3893, %v3900
  %v3909 = vadd.f32 %v3907, %v3908
  %v3910 = vtanh.pop %v3909
  %v3911 = vmul.f32 %v3906, %v3910
  %v3912 = vld [vmem:[%s1394] sm:$0xff]
  %v3913 = vld [vmem:[%s1394 + $0x8] sm:$0xff]
  %v3914 = vld [vmem:[%s1394 + $0x10] sm:$0xff]
  %v3915 = vld [vmem:[%s1394 + $0x18] sm:$0xff]
  %v3916 = vpack.c.bf16 %v3911, %v3911
  %3917 = vmatprep.subr.bf16.mxu0 %v3537
  %3918 = vmatpush1.bf16.msra.mxu0 %v3536
  %3919 = vmatprep.subr.bf16.mxu0 %v3533
  %3920 = vmatpush1.bf16.msra.mxu0 %v3532
  %3921 = vmatprep.subr.bf16.mxu0 %v3529
  %3922 = vmatpush1.bf16.msra.mxu0 %v3528
  %3923 = vmatprep.subr.bf16.mxu0 %v3525
  %3924 = vmatpush1.bf16.msra.mxu0 %v3524
  %3925 = vmatprep.subr.bf16.mxu0 %v3521
  %3926 = vmatpush1.bf16.msra.mxu0 %v3520
  %3927 = vmatprep.subr.bf16.mxu0 %v3517
  %3928 = vmatpush1.bf16.msra.mxu0 %v3516
  %3929 = vmatprep.subr.bf16.mxu0 %v3513
  %3930 = vmatpush1.bf16.msra.mxu0 %v3512
  %3931 = vmatprep.subr.bf16.mxu0 %v3509
  %3932 = vmatpush1.bf16.msra.mxu0 %v3508
  %3933 = vmatprep.subr.bf16.mxu0 0
  %3934 = vmatpush2.bf16.msra.mxu0 0
  %3935 = vmatprep.subr.bf16.mxu0 0
  %3936 = vmatpush2.bf16.msra.mxu0 0
  %3937 = vmatprep.subr.bf16.mxu0 0
  %3938 = vmatpush2.bf16.msra.mxu0 0
  %3939 = vmatprep.subr.bf16.mxu0 0
  %3940 = vmatpush2.bf16.msra.mxu0 0
  %3941 = vmatprep.subr.bf16.mxu0 0
  %3942 = vmatpush2.bf16.msra.mxu0 0
  %3943 = vmatprep.subr.bf16.mxu0 0
  %3944 = vmatpush2.bf16.msra.mxu0 0
  %3945 = vmatprep.subr.bf16.mxu0 0
  %3946 = vmatpush2.bf16.msra.mxu0 0
  %3947 = vmatprep.subr.bf16.mxu0 0
  %3948 = vmatpush2.bf16.msra.mxu0 0
  %3949 = vmatprep.mubr.bf16.mxu0 0
  %3950 = vmatmul.mubr.bf16.gmra.mxu0 %v3916
  %v3951 = vpop.f32.mrf.mxu0
  %v3952 = vadd.f32 0.0, %v3951
  %v3953 = vpop.f32.mrf.mxu0
  %v3954 = vadd.f32 0.0, %v3953
  %v3955 = vpop.f32.mrf.mxu0
  %v3956 = vpop.f32.mrf.mxu0
  %3957 = vdwg.mxu0
  %3958 = vmatprep.subr.bf16.mxu0 %v3539
  %3959 = vmatpush1.bf16.msra.mxu0 %v3538
  %3960 = vmatprep.subr.bf16.mxu0 %v3535
  %3961 = vmatpush1.bf16.msra.mxu0 %v3534
  %3962 = vmatprep.subr.bf16.mxu0 %v3531
  %3963 = vmatpush1.bf16.msra.mxu0 %v3530
  %3964 = vmatprep.subr.bf16.mxu0 %v3527
  %3965 = vmatpush1.bf16.msra.mxu0 %v3526
  %3966 = vmatprep.subr.bf16.mxu0 %v3523
  %3967 = vmatpush1.bf16.msra.mxu0 %v3522
  %3968 = vmatprep.subr.bf16.mxu0 %v3519
  %3969 = vmatpush1.bf16.msra.mxu0 %v3518
  %3970 = vmatprep.subr.bf16.mxu0 %v3515
  %3971 = vmatpush1.bf16.msra.mxu0 %v3514
  %3972 = vmatprep.subr.bf16.mxu0 %v3511
  %3973 = vmatpush1.bf16.msra.mxu0 %v3510
  %3974 = vmatprep.subr.bf16.mxu0 0
  %3975 = vmatpush2.bf16.msra.mxu0 0
  %3976 = vmatprep.subr.bf16.mxu0 0
  %3977 = vmatpush2.bf16.msra.mxu0 0
  %3978 = vmatprep.subr.bf16.mxu0 0
  %3979 = vmatpush2.bf16.msra.mxu0 0
  %3980 = vmatprep.subr.bf16.mxu0 0
  %3981 = vmatpush2.bf16.msra.mxu0 0
  %3982 = vmatprep.subr.bf16.mxu0 0
  %3983 = vmatpush2.bf16.msra.mxu0 0
  %3984 = vmatprep.subr.bf16.mxu0 0
  %3985 = vmatpush2.bf16.msra.mxu0 0
  %3986 = vmatprep.subr.bf16.mxu0 0
  %3987 = vmatpush2.bf16.msra.mxu0 0
  %3988 = vmatprep.subr.bf16.mxu0 0
  %3989 = vmatpush2.bf16.msra.mxu0 0
  %3990 = vmatprep.mubr.bf16.mxu0 0
  %3991 = vmatmul.mubr.bf16.gmra.mxu0 %v3916
  %v3992 = vpop.f32.mrf.mxu0
  %v3993 = vadd.f32 0.0, %v3992
  %v3994 = vpop.f32.mrf.mxu0
  %v3995 = vadd.f32 0.0, %v3994
  %v3996 = vpop.f32.mrf.mxu0
  %v3997 = vpop.f32.mrf.mxu0
  %3998 = vdwg.mxu0
  %v3999 = vadd.f32 %v3912, %v3952
  %v4000 = vadd.f32 %v3913, %v3954
  %v4001 = vadd.f32 %v3914, %v3993
  %v4002 = vadd.f32 %v3915, %v3995
  %v4003 = vxor.u32 %v3999, 2147483648
  %v4004 = vmul.f32 %v4003, 1.442695
  %v4005 = vpow.pop %v4004
  %v4006 = vadd.f32 %v4005, 1.0
  %v4007 = vrcp.pop %v4006
  %v4008 = vmul.f32 1.0, %v4007
  %v4009 = vxor.u32 %v4000, 2147483648
  %v4010 = vmul.f32 %v4009, 1.442695
  %v4011 = vpow.pop %v4010
  %v4012 = vadd.f32 %v4011, 1.0
  %v4013 = vrcp.pop %v4012
  %v4014 = vmul.f32 1.0, %v4013
  %v4015 = vtanh.pop %v4001
  %v4016 = vxor.u32 %v4002, 2147483648
  %v4017 = vmul.f32 %v4016, 1.442695
  %v4018 = vpow.pop %v4017
  %v4019 = vadd.f32 %v4018, 1.0
  %v4020 = vrcp.pop %v4019
  %v4021 = vmul.f32 1.0, %v4020
  %v4022 = vmul.f32 %v4014, %v3909
  %v4023 = vmul.f32 %v4008, %v4015
  %v4024 = vadd.f32 %v4022, %v4023
  %v4025 = vtanh.pop %v4024
  %v4026 = vmul.f32 %v4021, %v4025
  %v4027 = vld [vmem:[%s1706] sm:$0xff]
  %v4028 = vld [vmem:[%s1706 + $0x8] sm:$0xff]
  %v4029 = vld [vmem:[%s1706 + $0x10] sm:$0xff]
  %v4030 = vld [vmem:[%s1706 + $0x18] sm:$0xff]
  %v4031 = vpack.c.bf16 %v4026, %v4026
  %4032 = vmatprep.subr.bf16.mxu0 %v3537
  %4033 = vmatpush1.bf16.msra.mxu0 %v3536
  %4034 = vmatprep.subr.bf16.mxu0 %v3533
  %4035 = vmatpush1.bf16.msra.mxu0 %v3532
  %4036 = vmatprep.subr.bf16.mxu0 %v3529
  %4037 = vmatpush1.bf16.msra.mxu0 %v3528
  %4038 = vmatprep.subr.bf16.mxu0 %v3525
  %4039 = vmatpush1.bf16.msra.mxu0 %v3524
  %4040 = vmatprep.subr.bf16.mxu0 %v3521
  %4041 = vmatpush1.bf16.msra.mxu0 %v3520
  %4042 = vmatprep.subr.bf16.mxu0 %v3517
  %4043 = vmatpush1.bf16.msra.mxu0 %v3516
  %4044 = vmatprep.subr.bf16.mxu0 %v3513
  %4045 = vmatpush1.bf16.msra.mxu0 %v3512
  %4046 = vmatprep.subr.bf16.mxu0 %v3509
  %4047 = vmatpush1.bf16.msra.mxu0 %v3508
  %4048 = vmatprep.subr.bf16.mxu0 0
  %4049 = vmatpush2.bf16.msra.mxu0 0
  %4050 = vmatprep.subr.bf16.mxu0 0
  %4051 = vmatpush2.bf16.msra.mxu0 0
  %4052 = vmatprep.subr.bf16.mxu0 0
  %4053 = vmatpush2.bf16.msra.mxu0 0
  %4054 = vmatprep.subr.bf16.mxu0 0
  %4055 = vmatpush2.bf16.msra.mxu0 0
  %4056 = vmatprep.subr.bf16.mxu0 0
  %4057 = vmatpush2.bf16.msra.mxu0 0
  %4058 = vmatprep.subr.bf16.mxu0 0
  %4059 = vmatpush2.bf16.msra.mxu0 0
  %4060 = vmatprep.subr.bf16.mxu0 0
  %4061 = vmatpush2.bf16.msra.mxu0 0
  %4062 = vmatprep.subr.bf16.mxu0 0
  %4063 = vmatpush2.bf16.msra.mxu0 0
  %4064 = vmatprep.mubr.bf16.mxu0 0
  %4065 = vmatmul.mubr.bf16.gmra.mxu0 %v4031
  %v4066 = vpop.f32.mrf.mxu0
  %v4067 = vadd.f32 0.0, %v4066
  %v4068 = vpop.f32.mrf.mxu0
  %v4069 = vadd.f32 0.0, %v4068
  %v4070 = vpop.f32.mrf.mxu0
  %v4071 = vpop.f32.mrf.mxu0
  %4072 = vdwg.mxu0
  %4073 = vmatprep.subr.bf16.mxu0 %v3539
  %4074 = vmatpush1.bf16.msra.mxu0 %v3538
  %4075 = vmatprep.subr.bf16.mxu0 %v3535
  %4076 = vmatpush1.bf16.msra.mxu0 %v3534
  %4077 = vmatprep.subr.bf16.mxu0 %v3531
  %4078 = vmatpush1.bf16.msra.mxu0 %v3530
  %4079 = vmatprep.subr.bf16.mxu0 %v3527
  %4080 = vmatpush1.bf16.msra.mxu0 %v3526
  %4081 = vmatprep.subr.bf16.mxu0 %v3523
  %4082 = vmatpush1.bf16.msra.mxu0 %v3522
  %4083 = vmatprep.subr.bf16.mxu0 %v3519
  %4084 = vmatpush1.bf16.msra.mxu0 %v3518
  %4085 = vmatprep.subr.bf16.mxu0 %v3515
  %4086 = vmatpush1.bf16.msra.mxu0 %v3514
  %4087 = vmatprep.subr.bf16.mxu0 %v3511
  %4088 = vmatpush1.bf16.msra.mxu0 %v3510
  %4089 = vmatprep.subr.bf16.mxu0 0
  %4090 = vmatpush2.bf16.msra.mxu0 0
  %4091 = vmatprep.subr.bf16.mxu0 0
  %4092 = vmatpush2.bf16.msra.mxu0 0
  %4093 = vmatprep.subr.bf16.mxu0 0
  %4094 = vmatpush2.bf16.msra.mxu0 0
  %4095 = vmatprep.subr.bf16.mxu0 0
  %4096 = vmatpush2.bf16.msra.mxu0 0
  %4097 = vmatprep.subr.bf16.mxu0 0
  %4098 = vmatpush2.bf16.msra.mxu0 0
  %4099 = vmatprep.subr.bf16.mxu0 0
  %4100 = vmatpush2.bf16.msra.mxu0 0
  %4101 = vmatprep.subr.bf16.mxu0 0
  %4102 = vmatpush2.bf16.msra.mxu0 0
  %4103 = vmatprep.subr.bf16.mxu0 0
  %4104 = vmatpush2.bf16.msra.mxu0 0
  %4105 = vmatprep.mubr.bf16.mxu0 0
  %4106 = vmatmul.mubr.bf16.gmra.mxu0 %v4031
  %v4107 = vpop.f32.mrf.mxu0
  %v4108 = vadd.f32 0.0, %v4107
  %v4109 = vpop.f32.mrf.mxu0
  %v4110 = vadd.f32 0.0, %v4109
  %v4111 = vpop.f32.mrf.mxu0
  %v4112 = vpop.f32.mrf.mxu0
  %4113 = vdwg.mxu0
  %v4114 = vadd.f32 %v4027, %v4067
  %v4115 = vadd.f32 %v4028, %v4069
  %v4116 = vadd.f32 %v4029, %v4108
  %v4117 = vadd.f32 %v4030, %v4110
  %v4118 = vxor.u32 %v4114, 2147483648
  %v4119 = vmul.f32 %v4118, 1.442695
  %v4120 = vpow.pop %v4119
  %v4121 = vadd.f32 %v4120, 1.0
  %v4122 = vrcp.pop %v4121
  %v4123 = vmul.f32 1.0, %v4122
  %v4124 = vxor.u32 %v4115, 2147483648
  %v4125 = vmul.f32 %v4124, 1.442695
  %v4126 = vpow.pop %v4125
  %v4127 = vadd.f32 %v4126, 1.0
  %v4128 = vrcp.pop %v4127
  %v4129 = vmul.f32 1.0, %v4128
  %v4130 = vtanh.pop %v4116
  %v4131 = vxor.u32 %v4117, 2147483648
  %v4132 = vmul.f32 %v4131, 1.442695
  %v4133 = vpow.pop %v4132
  %v4134 = vadd.f32 %v4133, 1.0
  %v4135 = vrcp.pop %v4134
  %v4136 = vmul.f32 1.0, %v4135
  %v4137 = vmul.f32 %v4129, %v4024
  %v4138 = vmul.f32 %v4123, %v4130
  %v4139 = vadd.f32 %v4137, %v4138
  %v4140 = vtanh.pop %v4139
  %v4141 = vmul.f32 %v4136, %v4140
  %v4142 = vld [vmem:[%s2018] sm:$0xff]
  %v4143 = vld [vmem:[%s2018 + $0x8] sm:$0xff]
  %v4144 = vld [vmem:[%s2018 + $0x10] sm:$0xff]
  %v4145 = vld [vmem:[%s2018 + $0x18] sm:$0xff]
  %v4146 = vpack.c.bf16 %v4141, %v4141
  %4147 = vmatprep.subr.bf16.mxu0 %v3537
  %4148 = vmatpush1.bf16.msra.mxu0 %v3536
  %4149 = vmatprep.subr.bf16.mxu0 %v3533
  %4150 = vmatpush1.bf16.msra.mxu0 %v3532
  %4151 = vmatprep.subr.bf16.mxu0 %v3529
  %4152 = vmatpush1.bf16.msra.mxu0 %v3528
  %4153 = vmatprep.subr.bf16.mxu0 %v3525
  %4154 = vmatpush1.bf16.msra.mxu0 %v3524
  %4155 = vmatprep.subr.bf16.mxu0 %v3521
  %4156 = vmatpush1.bf16.msra.mxu0 %v3520
  %4157 = vmatprep.subr.bf16.mxu0 %v3517
  %4158 = vmatpush1.bf16.msra.mxu0 %v3516
  %4159 = vmatprep.subr.bf16.mxu0 %v3513
  %4160 = vmatpush1.bf16.msra.mxu0 %v3512
  %4161 = vmatprep.subr.bf16.mxu0 %v3509
  %4162 = vmatpush1.bf16.msra.mxu0 %v3508
  %4163 = vmatprep.subr.bf16.mxu0 0
  %4164 = vmatpush2.bf16.msra.mxu0 0
  %4165 = vmatprep.subr.bf16.mxu0 0
  %4166 = vmatpush2.bf16.msra.mxu0 0
  %4167 = vmatprep.subr.bf16.mxu0 0
  %4168 = vmatpush2.bf16.msra.mxu0 0
  %4169 = vmatprep.subr.bf16.mxu0 0
  %4170 = vmatpush2.bf16.msra.mxu0 0
  %4171 = vmatprep.subr.bf16.mxu0 0
  %4172 = vmatpush2.bf16.msra.mxu0 0
  %4173 = vmatprep.subr.bf16.mxu0 0
  %4174 = vmatpush2.bf16.msra.mxu0 0
  %4175 = vmatprep.subr.bf16.mxu0 0
  %4176 = vmatpush2.bf16.msra.mxu0 0
  %4177 = vmatprep.subr.bf16.mxu0 0
  %4178 = vmatpush2.bf16.msra.mxu0 0
  %4179 = vmatprep.mubr.bf16.mxu0 0
  %4180 = vmatmul.mubr.bf16.gmra.mxu0 %v4146
  %v4181 = vpop.f32.mrf.mxu0
  %v4182 = vadd.f32 0.0, %v4181
  %v4183 = vpop.f32.mrf.mxu0
  %v4184 = vadd.f32 0.0, %v4183
  %v4185 = vpop.f32.mrf.mxu0
  %v4186 = vpop.f32.mrf.mxu0
  %4187 = vdwg.mxu0
  %4188 = vmatprep.subr.bf16.mxu0 %v3539
  %4189 = vmatpush1.bf16.msra.mxu0 %v3538
  %4190 = vmatprep.subr.bf16.mxu0 %v3535
  %4191 = vmatpush1.bf16.msra.mxu0 %v3534
  %4192 = vmatprep.subr.bf16.mxu0 %v3531
  %4193 = vmatpush1.bf16.msra.mxu0 %v3530
  %4194 = vmatprep.subr.bf16.mxu0 %v3527
  %4195 = vmatpush1.bf16.msra.mxu0 %v3526
  %4196 = vmatprep.subr.bf16.mxu0 %v3523
  %4197 = vmatpush1.bf16.msra.mxu0 %v3522
  %4198 = vmatprep.subr.bf16.mxu0 %v3519
  %4199 = vmatpush1.bf16.msra.mxu0 %v3518
  %4200 = vmatprep.subr.bf16.mxu0 %v3515
  %4201 = vmatpush1.bf16.msra.mxu0 %v3514
  %4202 = vmatprep.subr.bf16.mxu0 %v3511
  %4203 = vmatpush1.bf16.msra.mxu0 %v3510
  %4204 = vmatprep.subr.bf16.mxu0 0
  %4205 = vmatpush2.bf16.msra.mxu0 0
  %4206 = vmatprep.subr.bf16.mxu0 0
  %4207 = vmatpush2.bf16.msra.mxu0 0
  %4208 = vmatprep.subr.bf16.mxu0 0
  %4209 = vmatpush2.bf16.msra.mxu0 0
  %4210 = vmatprep.subr.bf16.mxu0 0
  %4211 = vmatpush2.bf16.msra.mxu0 0
  %4212 = vmatprep.subr.bf16.mxu0 0
  %4213 = vmatpush2.bf16.msra.mxu0 0
  %4214 = vmatprep.subr.bf16.mxu0 0
  %4215 = vmatpush2.bf16.msra.mxu0 0
  %4216 = vmatprep.subr.bf16.mxu0 0
  %4217 = vmatpush2.bf16.msra.mxu0 0
  %4218 = vmatprep.subr.bf16.mxu0 0
  %4219 = vmatpush2.bf16.msra.mxu0 0
  %4220 = vmatprep.mubr.bf16.mxu0 0
  %4221 = vmatmul.mubr.bf16.gmra.mxu0 %v4146
  %v4222 = vpop.f32.mrf.mxu0
  %v4223 = vadd.f32 0.0, %v4222
  %v4224 = vpop.f32.mrf.mxu0
  %v4225 = vadd.f32 0.0, %v4224
  %v4226 = vpop.f32.mrf.mxu0
  %v4227 = vpop.f32.mrf.mxu0
  %4228 = vdwg.mxu0
  %v4229 = vadd.f32 %v4142, %v4182
  %v4230 = vadd.f32 %v4143, %v4184
  %v4231 = vadd.f32 %v4144, %v4223
  %v4232 = vadd.f32 %v4145, %v4225
  %v4233 = vxor.u32 %v4229, 2147483648
  %v4234 = vmul.f32 %v4233, 1.442695
  %v4235 = vpow.pop %v4234
  %v4236 = vadd.f32 %v4235, 1.0
  %v4237 = vrcp.pop %v4236
  %v4238 = vmul.f32 1.0, %v4237
  %v4239 = vxor.u32 %v4230, 2147483648
  %v4240 = vmul.f32 %v4239, 1.442695
  %v4241 = vpow.pop %v4240
  %v4242 = vadd.f32 %v4241, 1.0
  %v4243 = vrcp.pop %v4242
  %v4244 = vmul.f32 1.0, %v4243
  %v4245 = vtanh.pop %v4231
  %v4246 = vxor.u32 %v4232, 2147483648
  %v4247 = vmul.f32 %v4246, 1.442695
  %v4248 = vpow.pop %v4247
  %v4249 = vadd.f32 %v4248, 1.0
  %v4250 = vrcp.pop %v4249
  %v4251 = vmul.f32 1.0, %v4250
  %v4252 = vmul.f32 %v4244, %v4139
  %v4253 = vmul.f32 %v4238, %v4245
  %v4254 = vadd.f32 %v4252, %v4253
  %v4255 = vtanh.pop %v4254
  %v4256 = vmul.f32 %v4251, %v4255
  %v4257 = vld [vmem:[%s2330] sm:$0xff]
  %v4258 = vld [vmem:[%s2330 + $0x8] sm:$0xff]
  %v4259 = vld [vmem:[%s2330 + $0x10] sm:$0xff]
  %v4260 = vld [vmem:[%s2330 + $0x18] sm:$0xff]
  %v4261 = vpack.c.bf16 %v4256, %v4256
  %4262 = vmatprep.subr.bf16.mxu0 %v3537
  %4263 = vmatpush1.bf16.msra.mxu0 %v3536
  %4264 = vmatprep.subr.bf16.mxu0 %v3533
  %4265 = vmatpush1.bf16.msra.mxu0 %v3532
  %4266 = vmatprep.subr.bf16.mxu0 %v3529
  %4267 = vmatpush1.bf16.msra.mxu0 %v3528
  %4268 = vmatprep.subr.bf16.mxu0 %v3525
  %4269 = vmatpush1.bf16.msra.mxu0 %v3524
  %4270 = vmatprep.subr.bf16.mxu0 %v3521
  %4271 = vmatpush1.bf16.msra.mxu0 %v3520
  %4272 = vmatprep.subr.bf16.mxu0 %v3517
  %4273 = vmatpush1.bf16.msra.mxu0 %v3516
  %4274 = vmatprep.subr.bf16.mxu0 %v3513
  %4275 = vmatpush1.bf16.msra.mxu0 %v3512
  %4276 = vmatprep.subr.bf16.mxu0 %v3509
  %4277 = vmatpush1.bf16.msra.mxu0 %v3508
  %4278 = vmatprep.subr.bf16.mxu0 0
  %4279 = vmatpush2.bf16.msra.mxu0 0
  %4280 = vmatprep.subr.bf16.mxu0 0
  %4281 = vmatpush2.bf16.msra.mxu0 0
  %4282 = vmatprep.subr.bf16.mxu0 0
  %4283 = vmatpush2.bf16.msra.mxu0 0
  %4284 = vmatprep.subr.bf16.mxu0 0
  %4285 = vmatpush2.bf16.msra.mxu0 0
  %4286 = vmatprep.subr.bf16.mxu0 0
  %4287 = vmatpush2.bf16.msra.mxu0 0
  %4288 = vmatprep.subr.bf16.mxu0 0
  %4289 = vmatpush2.bf16.msra.mxu0 0
  %4290 = vmatprep.subr.bf16.mxu0 0
  %4291 = vmatpush2.bf16.msra.mxu0 0
  %4292 = vmatprep.subr.bf16.mxu0 0
  %4293 = vmatpush2.bf16.msra.mxu0 0
  %4294 = vmatprep.mubr.bf16.mxu0 0
  %4295 = vmatmul.mubr.bf16.gmra.mxu0 %v4261
  %v4296 = vpop.f32.mrf.mxu0
  %v4297 = vadd.f32 0.0, %v4296
  %v4298 = vpop.f32.mrf.mxu0
  %v4299 = vadd.f32 0.0, %v4298
  %v4300 = vpop.f32.mrf.mxu0
  %v4301 = vpop.f32.mrf.mxu0
  %4302 = vdwg.mxu0
  %4303 = vmatprep.subr.bf16.mxu0 %v3539
  %4304 = vmatpush1.bf16.msra.mxu0 %v3538
  %4305 = vmatprep.subr.bf16.mxu0 %v3535
  %4306 = vmatpush1.bf16.msra.mxu0 %v3534
  %4307 = vmatprep.subr.bf16.mxu0 %v3531
  %4308 = vmatpush1.bf16.msra.mxu0 %v3530
  %4309 = vmatprep.subr.bf16.mxu0 %v3527
  %4310 = vmatpush1.bf16.msra.mxu0 %v3526
  %4311 = vmatprep.subr.bf16.mxu0 %v3523
  %4312 = vmatpush1.bf16.msra.mxu0 %v3522
  %4313 = vmatprep.subr.bf16.mxu0 %v3519
  %4314 = vmatpush1.bf16.msra.mxu0 %v3518
  %4315 = vmatprep.subr.bf16.mxu0 %v3515
  %4316 = vmatpush1.bf16.msra.mxu0 %v3514
  %4317 = vmatprep.subr.bf16.mxu0 %v3511
  %4318 = vmatpush1.bf16.msra.mxu0 %v3510
  %4319 = vmatprep.subr.bf16.mxu0 0
  %4320 = vmatpush2.bf16.msra.mxu0 0
  %4321 = vmatprep.subr.bf16.mxu0 0
  %4322 = vmatpush2.bf16.msra.mxu0 0
  %4323 = vmatprep.subr.bf16.mxu0 0
  %4324 = vmatpush2.bf16.msra.mxu0 0
  %4325 = vmatprep.subr.bf16.mxu0 0
  %4326 = vmatpush2.bf16.msra.mxu0 0
  %4327 = vmatprep.subr.bf16.mxu0 0
  %4328 = vmatpush2.bf16.msra.mxu0 0
  %4329 = vmatprep.subr.bf16.mxu0 0
  %4330 = vmatpush2.bf16.msra.mxu0 0
  %4331 = vmatprep.subr.bf16.mxu0 0
  %4332 = vmatpush2.bf16.msra.mxu0 0
  %4333 = vmatprep.subr.bf16.mxu0 0
  %4334 = vmatpush2.bf16.msra.mxu0 0
  %4335 = vmatprep.mubr.bf16.mxu0 0
  %4336 = vmatmul.mubr.bf16.gmra.mxu0 %v4261
  %v4337 = vpop.f32.mrf.mxu0
  %v4338 = vadd.f32 0.0, %v4337
  %v4339 = vpop.f32.mrf.mxu0
  %v4340 = vadd.f32 0.0, %v4339
  %v4341 = vpop.f32.mrf.mxu0
  %v4342 = vpop.f32.mrf.mxu0
  %4343 = vdwg.mxu0
  %v4344 = vadd.f32 %v4257, %v4297
  %v4345 = vadd.f32 %v4258, %v4299
  %v4346 = vadd.f32 %v4259, %v4338
  %v4347 = vadd.f32 %v4260, %v4340
  %v4348 = vxor.u32 %v4344, 2147483648
  %v4349 = vmul.f32 %v4348, 1.442695
  %v4350 = vpow.pop %v4349
  %v4351 = vadd.f32 %v4350, 1.0
  %v4352 = vrcp.pop %v4351
  %v4353 = vmul.f32 1.0, %v4352
  %v4354 = vxor.u32 %v4345, 2147483648
  %v4355 = vmul.f32 %v4354, 1.442695
  %v4356 = vpow.pop %v4355
  %v4357 = vadd.f32 %v4356, 1.0
  %v4358 = vrcp.pop %v4357
  %v4359 = vmul.f32 1.0, %v4358
  %v4360 = vtanh.pop %v4346
  %v4361 = vxor.u32 %v4347, 2147483648
  %v4362 = vmul.f32 %v4361, 1.442695
  %v4363 = vpow.pop %v4362
  %v4364 = vadd.f32 %v4363, 1.0
  %v4365 = vrcp.pop %v4364
  %v4366 = vmul.f32 1.0, %v4365
  %v4367 = vmul.f32 %v4359, %v4254
  %v4368 = vmul.f32 %v4353, %v4360
  %v4369 = vadd.f32 %v4367, %v4368
  %v4370 = vtanh.pop %v4369
  %v4371 = vmul.f32 %v4366, %v4370
  %v4372 = vld [vmem:[%s2642] sm:$0xff]
  %v4373 = vld [vmem:[%s2642 + $0x8] sm:$0xff]
  %v4374 = vld [vmem:[%s2642 + $0x10] sm:$0xff]
  %v4375 = vld [vmem:[%s2642 + $0x18] sm:$0xff]
  %v4376 = vpack.c.bf16 %v4371, %v4371
  %4377 = vmatprep.subr.bf16.mxu0 %v3537
  %4378 = vmatpush1.bf16.msra.mxu0 %v3536
  %4379 = vmatprep.subr.bf16.mxu0 %v3533
  %4380 = vmatpush1.bf16.msra.mxu0 %v3532
  %4381 = vmatprep.subr.bf16.mxu0 %v3529
  %4382 = vmatpush1.bf16.msra.mxu0 %v3528
  %4383 = vmatprep.subr.bf16.mxu0 %v3525
  %4384 = vmatpush1.bf16.msra.mxu0 %v3524
  %4385 = vmatprep.subr.bf16.mxu0 %v3521
  %4386 = vmatpush1.bf16.msra.mxu0 %v3520
  %4387 = vmatprep.subr.bf16.mxu0 %v3517
  %4388 = vmatpush1.bf16.msra.mxu0 %v3516
  %4389 = vmatprep.subr.bf16.mxu0 %v3513
  %4390 = vmatpush1.bf16.msra.mxu0 %v3512
  %4391 = vmatprep.subr.bf16.mxu0 %v3509
  %4392 = vmatpush1.bf16.msra.mxu0 %v3508
  %4393 = vmatprep.subr.bf16.mxu0 0
  %4394 = vmatpush2.bf16.msra.mxu0 0
  %4395 = vmatprep.subr.bf16.mxu0 0
  %4396 = vmatpush2.bf16.msra.mxu0 0
  %4397 = vmatprep.subr.bf16.mxu0 0
  %4398 = vmatpush2.bf16.msra.mxu0 0
  %4399 = vmatprep.subr.bf16.mxu0 0
  %4400 = vmatpush2.bf16.msra.mxu0 0
  %4401 = vmatprep.subr.bf16.mxu0 0
  %4402 = vmatpush2.bf16.msra.mxu0 0
  %4403 = vmatprep.subr.bf16.mxu0 0
  %4404 = vmatpush2.bf16.msra.mxu0 0
  %4405 = vmatprep.subr.bf16.mxu0 0
  %4406 = vmatpush2.bf16.msra.mxu0 0
  %4407 = vmatprep.subr.bf16.mxu0 0
  %4408 = vmatpush2.bf16.msra.mxu0 0
  %4409 = vmatprep.mubr.bf16.mxu0 0
  %4410 = vmatmul.mubr.bf16.gmra.mxu0 %v4376
  %v4411 = vpop.f32.mrf.mxu0
  %v4412 = vadd.f32 0.0, %v4411
  %v4413 = vpop.f32.mrf.mxu0
  %v4414 = vadd.f32 0.0, %v4413
  %v4415 = vpop.f32.mrf.mxu0
  %v4416 = vpop.f32.mrf.mxu0
  %4417 = vdwg.mxu0
  %4418 = vmatprep.subr.bf16.mxu0 %v3539
  %4419 = vmatpush1.bf16.msra.mxu0 %v3538
  %4420 = vmatprep.subr.bf16.mxu0 %v3535
  %4421 = vmatpush1.bf16.msra.mxu0 %v3534
  %4422 = vmatprep.subr.bf16.mxu0 %v3531
  %4423 = vmatpush1.bf16.msra.mxu0 %v3530
  %4424 = vmatprep.subr.bf16.mxu0 %v3527
  %4425 = vmatpush1.bf16.msra.mxu0 %v3526
  %4426 = vmatprep.subr.bf16.mxu0 %v3523
  %4427 = vmatpush1.bf16.msra.mxu0 %v3522
  %4428 = vmatprep.subr.bf16.mxu0 %v3519
  %4429 = vmatpush1.bf16.msra.mxu0 %v3518
  %4430 = vmatprep.subr.bf16.mxu0 %v3515
  %4431 = vmatpush1.bf16.msra.mxu0 %v3514
  %4432 = vmatprep.subr.bf16.mxu0 %v3511
  %4433 = vmatpush1.bf16.msra.mxu0 %v3510
  %4434 = vmatprep.subr.bf16.mxu0 0
  %4435 = vmatpush2.bf16.msra.mxu0 0
  %4436 = vmatprep.subr.bf16.mxu0 0
  %4437 = vmatpush2.bf16.msra.mxu0 0
  %4438 = vmatprep.subr.bf16.mxu0 0
  %4439 = vmatpush2.bf16.msra.mxu0 0
  %4440 = vmatprep.subr.bf16.mxu0 0
  %4441 = vmatpush2.bf16.msra.mxu0 0
  %4442 = vmatprep.subr.bf16.mxu0 0
  %4443 = vmatpush2.bf16.msra.mxu0 0
  %4444 = vmatprep.subr.bf16.mxu0 0
  %4445 = vmatpush2.bf16.msra.mxu0 0
  %4446 = vmatprep.subr.bf16.mxu0 0
  %4447 = vmatpush2.bf16.msra.mxu0 0
  %4448 = vmatprep.subr.bf16.mxu0 0
  %4449 = vmatpush2.bf16.msra.mxu0 0
  %4450 = vmatprep.mubr.bf16.mxu0 0
  %4451 = vmatmul.mubr.bf16.gmra.mxu0 %v4376
  %v4452 = vpop.f32.mrf.mxu0
  %v4453 = vadd.f32 0.0, %v4452
  %v4454 = vpop.f32.mrf.mxu0
  %v4455 = vadd.f32 0.0, %v4454
  %v4456 = vpop.f32.mrf.mxu0
  %v4457 = vpop.f32.mrf.mxu0
  %4458 = vdwg.mxu0
  %v4459 = vadd.f32 %v4372, %v4412
  %v4460 = vadd.f32 %v4373, %v4414
  %v4461 = vadd.f32 %v4374, %v4453
  %v4462 = vadd.f32 %v4375, %v4455
  %v4463 = vxor.u32 %v4459, 2147483648
  %v4464 = vmul.f32 %v4463, 1.442695
  %v4465 = vpow.pop %v4464
  %v4466 = vadd.f32 %v4465, 1.0
  %v4467 = vrcp.pop %v4466
  %v4468 = vmul.f32 1.0, %v4467
  %v4469 = vxor.u32 %v4460, 2147483648
  %v4470 = vmul.f32 %v4469, 1.442695
  %v4471 = vpow.pop %v4470
  %v4472 = vadd.f32 %v4471, 1.0
  %v4473 = vrcp.pop %v4472
  %v4474 = vmul.f32 1.0, %v4473
  %v4475 = vtanh.pop %v4461
  %v4476 = vxor.u32 %v4462, 2147483648
  %v4477 = vmul.f32 %v4476, 1.442695
  %v4478 = vpow.pop %v4477
  %v4479 = vadd.f32 %v4478, 1.0
  %v4480 = vrcp.pop %v4479
  %v4481 = vmul.f32 1.0, %v4480
  %v4482 = vmul.f32 %v4474, %v4369
  %v4483 = vmul.f32 %v4468, %v4475
  %v4484 = vadd.f32 %v4482, %v4483
  %v4485 = vtanh.pop %v4484
  %v4486 = vmul.f32 %v4481, %v4485
  %v4487 = vpack.c.bf16 %v4486, %v4486
  %v4488 = vld [vmem:[%s7] sm:$0xf]
  %v4489 = vld [vmem:[%s7 + $0x4] sm:$0xf]
  %v4490 = vld [vmem:[%s7 + $0x8] sm:$0xf]
  %v4491 = vld [vmem:[%s7 + $0xc] sm:$0xf]
  %v4492 = vld [vmem:[%s7 + $0x10] sm:$0xf]
  %v4493 = vld [vmem:[%s7 + $0x14] sm:$0xf]
  %v4494 = vld [vmem:[%s7 + $0x18] sm:$0xf]
  %v4495 = vld [vmem:[%s7 + $0x1c] sm:$0xf]
  %v4496 = vld [vmem:[%s7 + $0x20] sm:$0xf]
  %v4497 = vld [vmem:[%s7 + $0x24] sm:$0xf]
  %v4498 = vld [vmem:[%s7 + $0x28] sm:$0xf]
  %v4499 = vld [vmem:[%s7 + $0x2c] sm:$0xf]
  %v4500 = vld [vmem:[%s7 + $0x30] sm:$0xf]
  %v4501 = vld [vmem:[%s7 + $0x34] sm:$0xf]
  %v4502 = vld [vmem:[%s7 + $0x38] sm:$0xf]
  %v4503 = vld [vmem:[%s7 + $0x3c] sm:$0xf]
  %v4504 = vld [vmem:[%s8] sm:$0x1]
  %v4506 = vlaneseq
  %v4507 = vshrl.u32 %v4506, 7
  %v4508 = vsub.s32 0, %v4507
  %v4509 = vrot.slane %v4504, %v4508
  %v4527 = vunpack.c.l.b16 %v4488
  %v4528 = vunpack.c.l.b16 %v4489
  %v4529 = vunpack.c.l.b16 %v4490
  %v4530 = vunpack.c.l.b16 %v4491
  %v4531 = vunpack.c.l.b16 %v4492
  %v4532 = vunpack.c.l.b16 %v4493
  %v4533 = vunpack.c.l.b16 %v4494
  %v4534 = vunpack.c.l.b16 %v4495
  %v4535 = vunpack.c.l.b16 %v4496
  %v4536 = vunpack.c.l.b16 %v4497
  %v4537 = vunpack.c.l.b16 %v4498
  %v4538 = vunpack.c.l.b16 %v4499
  %v4539 = vunpack.c.l.b16 %v4500
  %v4540 = vunpack.c.l.b16 %v4501
  %v4541 = vunpack.c.l.b16 %v4502
  %v4542 = vunpack.c.l.b16 %v4503
  %v4543 = vpack.c.b16 %v4528, %v4527
  %v4544 = vpack.c.b16 %v4530, %v4529
  %v4545 = vpack.c.b16 %v4532, %v4531
  %v4546 = vpack.c.b16 %v4534, %v4533
  %v4547 = vpack.c.b16 %v4536, %v4535
  %v4548 = vpack.c.b16 %v4538, %v4537
  %v4549 = vpack.c.b16 %v4540, %v4539
  %v4550 = vpack.c.b16 %v4542, %v4541
  %4559 = vmatprep.subr.bf16.mxu0 0
  %4560 = vmatpush1.bf16.msra.mxu0 %v4550
  %4561 = vmatprep.subr.bf16.mxu0 0
  %4562 = vmatpush1.bf16.msra.mxu0 %v4549
  %4563 = vmatprep.subr.bf16.mxu0 0
  %4564 = vmatpush1.bf16.msra.mxu0 %v4548
  %4565 = vmatprep.subr.bf16.mxu0 0
  %4566 = vmatpush1.bf16.msra.mxu0 %v4547
  %4567 = vmatprep.subr.bf16.mxu0 0
  %4568 = vmatpush1.bf16.msra.mxu0 %v4546
  %4569 = vmatprep.subr.bf16.mxu0 0
  %4570 = vmatpush1.bf16.msra.mxu0 %v4545
  %4571 = vmatprep.subr.bf16.mxu0 0
  %4572 = vmatpush1.bf16.msra.mxu0 %v4544
  %4573 = vmatprep.subr.bf16.mxu0 0
  %4574 = vmatpush1.bf16.msra.mxu0 %v4543
  %4575 = vmatprep.subr.bf16.mxu0 0
  %4576 = vmatpush2.bf16.msra.mxu0 0
  %4577 = vmatprep.subr.bf16.mxu0 0
  %4578 = vmatpush2.bf16.msra.mxu0 0
  %4579 = vmatprep.subr.bf16.mxu0 0
  %4580 = vmatpush2.bf16.msra.mxu0 0
  %4581 = vmatprep.subr.bf16.mxu0 0
  %4582 = vmatpush2.bf16.msra.mxu0 0
  %4583 = vmatprep.subr.bf16.mxu0 0
  %4584 = vmatpush2.bf16.msra.mxu0 0
  %4585 = vmatprep.subr.bf16.mxu0 0
  %4586 = vmatpush2.bf16.msra.mxu0 0
  %4587 = vmatprep.subr.bf16.mxu0 0
  %4588 = vmatpush2.bf16.msra.mxu0 0
  %4589 = vmatprep.subr.bf16.mxu0 0
  %4590 = vmatpush2.bf16.msra.mxu0 0
  %4591 = vmatprep.mubr.bf16.mxu0 0
  %4592 = vmatmul.mubr.bf16.gmra.mxu0 %v4487
  %v4593 = vpop.f32.mrf.mxu0
  %v4594 = vadd.f32 %v4509, %v4593
  %v4595 = vpop.f32.mrf.mxu0
  %v4596 = vpop.f32.mrf.mxu0
  %v4597 = vpop.f32.mrf.mxu0
  %4598 = vdwg.mxu0
  %v4599 = vxor.u32 %v4594, 2147483648
  %v4600 = vmul.f32 %v4599, 1.442695
  %v4601 = vpow.pop %v4600
  %v4602 = vadd.f32 %v4601, 1.0
  %v4603 = vrcp.pop %v4602
  %v4604 = vmul.f32 1.0, %v4603
  %4605 = vst [vmem:[%s9] sm:$0xff] %v4604
  // Predicated region
  $region38: #{mynet_forward.1} parent=0 // pred_check
    _
  $region39: #{mynet_forward.1} parent=0 // pred_check_branch
    %4607 = sbr.rel (0) target = $region41
  $region40: #{mynet_forward.1} parent=0 // pred_region
    _
  $region41: #{mynet_forward.1} parent=0 // pred_fallthru
    _
  // Predicated region
  $region42: #{mynet_forward.1} parent=0 // pred_check
    _
  $region43: #{mynet_forward.1} parent=0 // pred_check_branch
    %4609 = sbr.rel (0) target = $region45
  $region44: #{mynet_forward.1} parent=0 // pred_region
    _
  $region45: #{mynet_forward.1} parent=0 // pred_fallthru
    _

</llo_original>
